<compile_context>
chip_gen: v7x
topology: tpu7x:2x2x1
jax: 0.10.0
libtpu: 0.0.40
codegen_flags: <defaults>
</compile_context>

<pallas_src>
import math

import jax
import jax.numpy as jnp
from jax.experimental import pallas as pl
from jax.experimental.pallas import tpu as pltpu


# ----------------------------- Pallas kernel ------------------------------- #

def _eltm_layer_kernel(xp_ref, h0_ref,
                       w_h_ref, b_ih_ref, w_u_ref, b_u_ref, w_ab_ref,
                       out_ref, h_scr):
    """One ELTM layer.  Grid = (batch_tiles, time_blocks); axis 1 is the
    sequential time recurrence; the hidden state persists in h_scr (VMEM)."""
    f32 = jnp.float32
    H = h_scr.shape[-1]
    TT = out_ref.shape[0]

    @pl.when(pl.program_id(1) == 0)          # first time-block of this batch tile
    def _():
        h_scr[...] = h0_ref[...].astype(f32)

    w_h = w_h_ref[...]                        # (H, 3H)  = [whi | whh | woh]
    w_u = w_u_ref[...]                        # (3H, H)  = [wux ; wuh ; wuc]
    w_ab = w_ab_ref[...]                      # (H, 2H)  = [wa  | wb ]
    b_ih = b_ih_ref[...].astype(f32)          # (1, 2H)
    b_u = b_u_ref[...].astype(f32)            # (1, H)
    cdt = w_h.dtype                           # matmul operand dtype (f32 / bf16)

    def step(s, carry):
        xp = xp_ref[s].astype(f32)            # (TB, 3H) = [gi_x | gh_x | only_x]
        h = h_scr[...]                        # (TB, H)  f32

        # fused recurrent projection: h @ [whi | whh | woh]
        hp = jnp.dot(h.astype(cdt), w_h, preferred_element_type=f32)
        gates = xp[:, :2 * H] + hp[:, :2 * H] + b_ih
        i_gate = jax.nn.sigmoid(gates[:, :H])
        h_gate = jnp.tanh(gates[:, H:])
        ch_n = i_gate * h_gate
        xt = jnp.tanh(xp[:, 2 * H:])          # tanh(only_x(x))
        ht = jnp.tanh(hp[:, 2 * H:])          # tanh(only_h(h))

        # fused output gate: [xt | ht | ch_n] @ [wux ; wuh ; wuc] + buc
        u_in = jnp.concatenate([xt, ht, ch_n], axis=-1).astype(cdt)
        o_gate = jax.nn.sigmoid(
            jnp.dot(u_in, w_u, preferred_element_type=f32) + b_u)

        # fused alpha/beta: o_gate @ [wa | wb]
        ab = jnp.dot(o_gate.astype(cdt), w_ab, preferred_element_type=f32)
        alpha = ab[:, :H]
        beta = ab[:, H:]
        gamma = 1.0 - alpha - beta

        h_next = alpha * xt + beta * ht + gamma * ch_n
        h_scr[...] = h_next
        out_ref[s] = h_next.astype(out_ref.dtype)
        return carry

    jax.lax.fori_loop(0, TT, step, 0, unroll=True)


# ------------------------------ layer wrapper ------------------------------- #

_SINGLE_BUFFER_WEIGHTS = None   # cached capability probe for pl.Buffered(1)


def _largest_divisor_leq(n, cap):
    for d in range(min(cap, n), 0, -1):
        if n % d == 0:
            return d
    return 1


def eltm_layer(x_seq, h0, p, *, compute_dtype=jnp.float32, time_block_cap=8):
    """Run one ELTM cell over a (T, B, Din) sequence.  Returns (out, h_final)."""
    global _SINGLE_BUFFER_WEIGHTS
    T, B, Din = x_seq.shape
    H = h0.shape[-1]
    cdt = jnp.dtype(compute_dtype)
    out_dtype = x_seq.dtype

    # 1) Hoisted input-only projection: one large GEMM over the whole sequence.
    x_proj = jnp.dot(x_seq.reshape(T * B, Din).astype(cdt), p["w_x"].astype(cdt),
                     preferred_element_type=jnp.float32).reshape(T, B, 3 * H)

    # 2) Sublane-dense batch padding (padded rows are independent, sliced off).
    B_pad = -(-B // 8) * 8
    h0_f = h0.astype(jnp.float32)
    if B_pad != B:
        x_proj = jnp.pad(x_proj, ((0, 0), (0, B_pad - B), (0, 0)))
        h0_f = jnp.pad(h0_f, ((0, B_pad - B), (0, 0)))

    # 3) Tile choices: block the time axis; split batch across cores if large.
    TT = _largest_divisor_leq(T, time_block_cap)
    TB = B_pad // 2 if (B_pad >= 16 and B_pad % 16 == 0) else B_pad

    weights = (p["w_h"].astype(cdt), p["b_ih"].astype(jnp.float32),
               p["w_u"].astype(cdt), p["b_u"].astype(jnp.float32),
               p["w_ab"].astype(cdt))

    def build(single_buffer_weights):
        def wspec(arr):
            nd = arr.ndim
            idx = lambda b, t, _nd=nd: (0,) * _nd       # constant block index
            if single_buffer_weights:
                return pl.BlockSpec(arr.shape, idx, pipeline_mode=pl.Buffered(1))
            return pl.BlockSpec(arr.shape, idx)

        in_specs = ([pl.BlockSpec((TT, TB, 3 * H), lambda b, t: (t, b, 0)),
                     pl.BlockSpec((TB, H), lambda b, t: (b, 0))]
                    + [wspec(w) for w in weights])
        out_specs = pl.BlockSpec((TT, TB, H), lambda b, t: (t, b, 0))
        out_shape = jax.ShapeDtypeStruct((T, B_pad, H), out_dtype)

        # Explicit VMEM budget: (single|double)-buffered weights + activations.
        wbytes = sum(w.size * w.dtype.itemsize for w in weights)
        wbytes *= 1 if single_buffer_weights else 2
        act = 2 * (TT * TB * 3 * H + TT * TB * H + TB * H) * 4
        scratch = TB * H * 4
        vmem_limit = int(min(100 * 2 ** 20,
                             max(32 * 2 ** 20, 2 * (wbytes + act + scratch))))

        return pl.pallas_call(
            _eltm_layer_kernel,
            grid_spec=pltpu.PrefetchScalarGridSpec(
                num_scalar_prefetch=0,
                grid=(B_pad // TB, T // TT),
                in_specs=in_specs,
                out_specs=out_specs,
                scratch_shapes=[pltpu.VMEM((TB, H), jnp.float32)]),
            out_shape=out_shape,
            compiler_params=pltpu.CompilerParams(
                dimension_semantics=("parallel", "arbitrary"),
                vmem_limit_bytes=vmem_limit),
        )

    args = (x_proj, h0_f) + weights
    if _SINGLE_BUFFER_WEIGHTS is None:
        try:
            out = build(True)(*args)
            _SINGLE_BUFFER_WEIGHTS = True
        except Exception:
            # pl.Buffered(1) not supported by this JAX: fall back to default.
            _SINGLE_BUFFER_WEIGHTS = False
            out = build(False)(*args)
    else:
        out = build(_SINGLE_BUFFER_WEIGHTS)(*args)

    out = out[:, :B, :]
    return out, out[T - 1]                    # final hidden = last output step


# --------------------------- parameter creation ----------------------------- #

def _uniform(key, shape, fan_in):
    bound = 1.0 / math.sqrt(fan_in)
    return jax.random.uniform(key, shape, jnp.float32, -bound, bound)


def make_cell_params(key, input_size, hidden_size):
    Din, H = input_size, hidden_size
    k = jax.random.split(key, 11)
    # nn.Linear stores weight (out, in); we build directly as (in, out).
    w_input_in = _uniform(k[0], (Din, 2 * H), Din)     # input_in (no bias)
    w_hidden_in = _uniform(k[1], (H, 2 * H), H)        # hidden_in
    b_hidden_in = _uniform(k[2], (1, 2 * H), H)
    w_only_x = _uniform(k[3], (Din, H), Din)           # only_x
    w_only_h = _uniform(k[4], (H, H), H)               # only_h
    w_input_out = _uniform(k[5], (H, H), H)            # input_out
    w_hidden_out = _uniform(k[6], (H, H), H)           # hidden_out
    w_cand = _uniform(k[7], (H, H), H)                 # candidate_hidden_out
    b_cand = _uniform(k[8], (1, H), H)                 # independent key
    w_alpha = _uniform(k[9], (H, H), H)                # alpha_p
    w_beta = _uniform(k[10], (H, H), H)                # beta_p
    return {
        "w_x": jnp.concatenate([w_input_in, w_only_x], axis=1),               # (Din, 3H)
        "w_h": jnp.concatenate([w_hidden_in, w_only_h], axis=1),              # (H, 3H)
        "b_ih": b_hidden_in,                                                  # (1, 2H)
        "w_u": jnp.concatenate([w_input_out, w_hidden_out, w_cand], axis=0),  # (3H, H)
        "b_u": b_cand,                                                        # (1, H)
        "w_ab": jnp.concatenate([w_alpha, w_beta], axis=1),                   # (H, 2H)
    }


def make_eltm_params(key, input_size, hidden_size, num_layers):
    keys = jax.random.split(key, num_layers)
    params = [make_cell_params(keys[0], input_size, hidden_size)]
    for l in range(1, num_layers):
        params.append(make_cell_params(keys[l], hidden_size, hidden_size))
    return params


# ------------------------------ ELTM forward -------------------------------- #

def eltm_forward(x, params, hidden_size, state=None, compute_dtype=jnp.float32):
    """x: (T, B, input_size).  Returns (out (T,B,H), hidden (L,B,H))."""
    T, B = x.shape[:2]
    L = len(params)
    if state is None:
        hiddens = [jnp.zeros((B, hidden_size), x.dtype) for _ in range(L)]
    else:
        hiddens = [state[l] for l in range(L)]
    inp = x
    finals = []
    for l in range(L):
        inp, h_fin = eltm_layer(inp, hiddens[l], params[l],
                                compute_dtype=compute_dtype)
        finals.append(h_fin)
    return inp, jnp.stack(finals)


# --------------------------- pure-JAX reference ----------------------------- #

def _cell_ref(x, h, p):
    H = p["b_u"].shape[-1]
    xp = x @ p["w_x"]
    hp = h @ p["w_h"]
    gi = xp[:, :H] + hp[:, :H] + p["b_ih"][:, :H]
    gh = xp[:, H:2 * H] + hp[:, H:2 * H] + p["b_ih"][:, H:]
    ch_n = jax.nn.sigmoid(gi) * jnp.tanh(gh)
    xt = jnp.tanh(xp[:, 2 * H:])
    ht = jnp.tanh(hp[:, 2 * H:])
    o = jax.nn.sigmoid(jnp.concatenate([xt, ht, ch_n], -1) @ p["w_u"] + p["b_u"])
    ab = o @ p["w_ab"]
    alpha, beta = ab[:, :H], ab[:, H:]
    return alpha * xt + beta * ht + (1.0 - alpha - beta) * ch_n


def eltm_forward_ref(x, params, hidden_size):
    T, B = x.shape[:2]
    L = len(params)
    hiddens = [jnp.zeros((B, hidden_size), x.dtype) for _ in range(L)]
    outs = []
    for t in range(T):
        inp = x[t]
        for l in range(L):
            hiddens[l] = _cell_ref(inp, hiddens[l], params[l])
            inp = hiddens[l]
        outs.append(hiddens[-1])
    return jnp.stack(outs), jnp.stack(hiddens)


# ----------------------------------- main ----------------------------------- #

if __name__ == "__main__":
    seq_len, batch, input_size, hidden_size, num_layers = 8, 2, 4, 32, 2

    key = jax.random.PRNGKey(0)
    kx, kp = jax.random.split(key)
    x = jax.random.normal(kx, (seq_len, batch, input_size), jnp.float32)
    params = make_eltm_params(kp, input_size, hidden_size, num_layers)

    # f32 matmul path: tight check against the pure-JAX reference.
    out, hidden = eltm_forward(x, params, hidden_size)
    out = jax.block_until_ready(out)
    hidden = jax.block_until_ready(hidden)

    out_ref, hidden_ref = eltm_forward_ref(x, params, hidden_size)
    assert out.shape == (seq_len, batch, hidden_size)
    assert hidden.shape == (num_layers, batch, hidden_size)
    assert jnp.allclose(out, out_ref, atol=5e-5, rtol=5e-5), \
        float(jnp.max(jnp.abs(out - out_ref)))
    assert jnp.allclose(hidden, hidden_ref, atol=5e-5, rtol=5e-5)

    # bf16 matmul-operand path (f32 accumulation / gate math): loose check.
    out_bf, hidden_bf = eltm_forward(x, params, hidden_size,
                                     compute_dtype=jnp.bfloat16)
    out_bf = jax.block_until_ready(out_bf)
    assert out_bf.shape == (seq_len, batch, hidden_size)
    assert jnp.allclose(out_bf, out_ref, atol=2e-1), \
        float(jnp.max(jnp.abs(out_bf - out_ref)))

    print("KERNEL_OK")
</pallas_src>

<mosaic_0001>
module attributes {stable_mosaic.version = 11 : i64} {
  func.func @_eltm_layer_kernel(%arg0: i32, %arg1: i32, %arg2: memref<8x8x96xf32, #tpu.memory_space<vmem>>, %arg3: memref<8x32xf32, #tpu.memory_space<vmem>>, %arg4: memref<32x96xf32, #tpu.memory_space<vmem>>, %arg5: memref<1x64xf32, #tpu.memory_space<vmem>>, %arg6: memref<96x32xf32, #tpu.memory_space<vmem>>, %arg7: memref<1x32xf32, #tpu.memory_space<vmem>>, %arg8: memref<32x64xf32, #tpu.memory_space<vmem>>, %arg9: memref<8x8x32xf32, #tpu.memory_space<vmem>>, %arg10: memref<8x32xf32, #tpu.memory_space<vmem>>) attributes {dimension_semantics = [#tpu.dimension_semantics<parallel>, #tpu.dimension_semantics<arbitrary>], iteration_bounds = array<i64: 1, 1>, scalar_prefetch = 0 : i64, scratch_operands = 1 : i64, tpu.core_type = #tpu.core_type<tc>, window_params = [{transform_indices = @transform_0, window_bounds = array<i64: 8, 8, 96>}, {transform_indices = @transform_1, window_bounds = array<i64: 8, 32>}, {pipeline_mode = #tpu.pipeline_mode<synchronous>, transform_indices = @transform_2, window_bounds = array<i64: 32, 96>}, {pipeline_mode = #tpu.pipeline_mode<synchronous>, transform_indices = @transform_3, window_bounds = array<i64: 1, 64>}, {pipeline_mode = #tpu.pipeline_mode<synchronous>, transform_indices = @transform_4, window_bounds = array<i64: 96, 32>}, {pipeline_mode = #tpu.pipeline_mode<synchronous>, transform_indices = @transform_5, window_bounds = array<i64: 1, 32>}, {pipeline_mode = #tpu.pipeline_mode<synchronous>, transform_indices = @transform_6, window_bounds = array<i64: 32, 64>}, {transform_indices = @transform_7, window_bounds = array<i64: 8, 8, 32>}]} {
    %c0_i32 = arith.constant 0 : i32
    %0 = arith.cmpi eq, %arg1, %c0_i32 : i32
    %1 = arith.extui %0 : i1 to i32
    %c0_i32_0 = arith.constant 0 : i32
    %2 = arith.cmpi ne, %1, %c0_i32_0 : i32
    scf.if %2 {
      %c0_122 = arith.constant 0 : index
      %c0_123 = arith.constant 0 : index
      %392 = vector.load %arg3[%c0_122, %c0_123] : memref<8x32xf32, #tpu.memory_space<vmem>>, vector<8x32xf32>
      %c0_124 = arith.constant 0 : index
      %c0_125 = arith.constant 0 : index
      %393 = vector.load %arg10[%c0_124, %c0_125] : memref<8x32xf32, #tpu.memory_space<vmem>>, vector<8x32xf32>
      tpu.vector_store %arg10[%c0_124, %c0_125], %392 {strides = array<i32>} : memref<8x32xf32, #tpu.memory_space<vmem>>, vector<8x32xf32>,
    } else {
    }
    %c0 = arith.constant 0 : index
    %c0_1 = arith.constant 0 : index
    %3 = vector.load %arg4[%c0, %c0_1] : memref<32x96xf32, #tpu.memory_space<vmem>>, vector<32x96xf32>
    %c0_2 = arith.constant 0 : index
    %c0_3 = arith.constant 0 : index
    %4 = vector.load %arg6[%c0_2, %c0_3] : memref<96x32xf32, #tpu.memory_space<vmem>>, vector<96x32xf32>
    %c0_4 = arith.constant 0 : index
    %c0_5 = arith.constant 0 : index
    %5 = vector.load %arg8[%c0_4, %c0_5] : memref<32x64xf32, #tpu.memory_space<vmem>>, vector<32x64xf32>
    %c0_6 = arith.constant 0 : index
    %c0_7 = arith.constant 0 : index
    %6 = vector.load %arg5[%c0_6, %c0_7] : memref<1x64xf32, #tpu.memory_space<vmem>>, vector<1x64xf32>
    %c0_8 = arith.constant 0 : index
    %c0_9 = arith.constant 0 : index
    %7 = vector.load %arg7[%c0_8, %c0_9] : memref<1x32xf32, #tpu.memory_space<vmem>>, vector<1x32xf32>
    %c0_i32_10 = arith.constant 0 : i32
    %8 = arith.index_cast %c0_i32_10 : i32 to index
    %c0_11 = arith.constant 0 : index
    %c0_12 = arith.constant 0 : index
    %9 = vector.load %arg2[%8, %c0_11, %c0_12] : memref<8x8x96xf32, #tpu.memory_space<vmem>>, vector<1x8x96xf32>
    %10 = vector.shape_cast %9 : vector<1x8x96xf32> to vector<8x96xf32>
    %c0_13 = arith.constant 0 : index
    %c0_14 = arith.constant 0 : index
    %11 = vector.load %arg10[%c0_13, %c0_14] : memref<8x32xf32, #tpu.memory_space<vmem>>, vector<8x32xf32>
    %cst = arith.constant dense<0.000000e+00> : vector<8x96xf32>
    %12 = tpu.matmul %11, %3, %cst {dimension_numbers = #tpu.dot_dimension_numbers<[1], [0], [0], [1], [0, 0, 1, 1], [], []>} : vector<8x32xf32>, vector<32x96xf32>, vector<8x96xf32> -> vector<8x96xf32>
    %13 = vector.extract_strided_slice %10 {offsets = [0, 0], sizes = [8, 64], strides = [1, 1]} : vector<8x96xf32> to vector<8x64xf32>
    %14 = vector.extract_strided_slice %12 {offsets = [0, 0], sizes = [8, 64], strides = [1, 1]} : vector<8x96xf32> to vector<8x64xf32>
    %15 = arith.addf %13, %14 : vector<8x64xf32>
    %16 = vector.broadcast %6 : vector<1x64xf32> to vector<8x64xf32>
    %17 = arith.addf %15, %16 : vector<8x64xf32>
    %18 = vector.extract_strided_slice %17 {offsets = [0, 0], sizes = [8, 32], strides = [1, 1]} : vector<8x64xf32> to vector<8x32xf32>
    %19 = arith.negf %18 : vector<8x32xf32>
    %20 = math.exp %19 : vector<8x32xf32>
    %cst_15 = arith.constant 1.000000e+00 : f32
    %21 = vector.broadcast %cst_15 : f32 to vector<8x32xf32>
    %22 = arith.addf %21, %20 : vector<8x32xf32>
    %23 = arith.divf %21, %22 : vector<8x32xf32>
    %24 = vector.extract_strided_slice %17 {offsets = [0, 32], sizes = [8, 32], strides = [1, 1]} : vector<8x64xf32> to vector<8x32xf32>
    %25 = math.tanh %24 : vector<8x32xf32>
    %26 = arith.mulf %23, %25 : vector<8x32xf32>
    %27 = vector.extract_strided_slice %10 {offsets = [0, 64], sizes = [8, 32], strides = [1, 1]} : vector<8x96xf32> to vector<8x32xf32>
    %28 = math.tanh %27 : vector<8x32xf32>
    %29 = vector.extract_strided_slice %12 {offsets = [0, 64], sizes = [8, 32], strides = [1, 1]} : vector<8x96xf32> to vector<8x32xf32>
    %30 = math.tanh %29 : vector<8x32xf32>
    %31 = tpu.concatenate %28, %30, %26 in 1 : vector<8x32xf32>, vector<8x32xf32>, vector<8x32xf32> -> vector<8x96xf32>
    %cst_16 = arith.constant dense<0.000000e+00> : vector<8x32xf32>
    %32 = tpu.matmul %31, %4, %cst_16 {dimension_numbers = #tpu.dot_dimension_numbers<[1], [0], [0], [1], [0, 0, 1, 1], [], []>} : vector<8x96xf32>, vector<96x32xf32>, vector<8x32xf32> -> vector<8x32xf32>
    %33 = vector.broadcast %7 : vector<1x32xf32> to vector<8x32xf32>
    %34 = arith.addf %32, %33 : vector<8x32xf32>
    %35 = arith.negf %34 : vector<8x32xf32>
    %36 = math.exp %35 : vector<8x32xf32>
    %cst_17 = arith.constant 1.000000e+00 : f32
    %37 = vector.broadcast %cst_17 : f32 to vector<8x32xf32>
    %38 = arith.addf %37, %36 : vector<8x32xf32>
    %39 = arith.divf %37, %38 : vector<8x32xf32>
    %cst_18 = arith.constant dense<0.000000e+00> : vector<8x64xf32>
    %40 = tpu.matmul %39, %5, %cst_18 {dimension_numbers = #tpu.dot_dimension_numbers<[1], [0], [0], [1], [0, 0, 1, 1], [], []>} : vector<8x32xf32>, vector<32x64xf32>, vector<8x64xf32> -> vector<8x64xf32>
    %41 = vector.extract_strided_slice %40 {offsets = [0, 0], sizes = [8, 32], strides = [1, 1]} : vector<8x64xf32> to vector<8x32xf32>
    %42 = vector.extract_strided_slice %40 {offsets = [0, 32], sizes = [8, 32], strides = [1, 1]} : vector<8x64xf32> to vector<8x32xf32>
    %cst_19 = arith.constant 1.000000e+00 : f32
    %43 = vector.broadcast %cst_19 : f32 to vector<8x32xf32>
    %44 = arith.subf %43, %41 : vector<8x32xf32>
    %45 = arith.subf %44, %42 : vector<8x32xf32>
    %46 = arith.mulf %41, %28 : vector<8x32xf32>
    %47 = arith.mulf %42, %30 : vector<8x32xf32>
    %48 = arith.addf %46, %47 : vector<8x32xf32>
    %49 = arith.mulf %45, %26 : vector<8x32xf32>
    %50 = arith.addf %48, %49 : vector<8x32xf32>
    %c0_20 = arith.constant 0 : index
    %c0_21 = arith.constant 0 : index
    %51 = vector.load %arg10[%c0_20, %c0_21] : memref<8x32xf32, #tpu.memory_space<vmem>>, vector<8x32xf32>
    tpu.vector_store %arg10[%c0_20, %c0_21], %50 {strides = array<i32>} : memref<8x32xf32, #tpu.memory_space<vmem>>, vector<8x32xf32>,
    %52 = arith.index_cast %c0_i32_10 : i32 to index
    %c0_22 = arith.constant 0 : index
    %c0_23 = arith.constant 0 : index
    %53 = vector.load %arg9[%52, %c0_22, %c0_23] : memref<8x8x32xf32, #tpu.memory_space<vmem>>, vector<1x8x32xf32>
    %54 = vector.shape_cast %53 : vector<1x8x32xf32> to vector<8x32xf32>
    %55 = vector.shape_cast %50 : vector<8x32xf32> to vector<1x8x32xf32>
    tpu.vector_store %arg9[%52, %c0_22, %c0_23], %55 {strides = array<i32>} : memref<8x8x32xf32, #tpu.memory_space<vmem>>, vector<1x8x32xf32>,
    %c1_i32 = arith.constant 1 : i32
    %56 = arith.index_cast %c1_i32 : i32 to index
    %c0_24 = arith.constant 0 : index
    %c0_25 = arith.constant 0 : index
    %57 = vector.load %arg2[%56, %c0_24, %c0_25] : memref<8x8x96xf32, #tpu.memory_space<vmem>>, vector<1x8x96xf32>
    %58 = vector.shape_cast %57 : vector<1x8x96xf32> to vector<8x96xf32>
    %c0_26 = arith.constant 0 : index
    %c0_27 = arith.constant 0 : index
    %59 = vector.load %arg10[%c0_26, %c0_27] : memref<8x32xf32, #tpu.memory_space<vmem>>, vector<8x32xf32>
    %cst_28 = arith.constant dense<0.000000e+00> : vector<8x96xf32>
    %60 = tpu.matmul %59, %3, %cst_28 {dimension_numbers = #tpu.dot_dimension_numbers<[1], [0], [0], [1], [0, 0, 1, 1], [], []>} : vector<8x32xf32>, vector<32x96xf32>, vector<8x96xf32> -> vector<8x96xf32>
    %61 = vector.extract_strided_slice %58 {offsets = [0, 0], sizes = [8, 64], strides = [1, 1]} : vector<8x96xf32> to vector<8x64xf32>
    %62 = vector.extract_strided_slice %60 {offsets = [0, 0], sizes = [8, 64], strides = [1, 1]} : vector<8x96xf32> to vector<8x64xf32>
    %63 = arith.addf %61, %62 : vector<8x64xf32>
    %64 = vector.broadcast %6 : vector<1x64xf32> to vector<8x64xf32>
    %65 = arith.addf %63, %64 : vector<8x64xf32>
    %66 = vector.extract_strided_slice %65 {offsets = [0, 0], sizes = [8, 32], strides = [1, 1]} : vector<8x64xf32> to vector<8x32xf32>
    %67 = arith.negf %66 : vector<8x32xf32>
    %68 = math.exp %67 : vector<8x32xf32>
    %cst_29 = arith.constant 1.000000e+00 : f32
    %69 = vector.broadcast %cst_29 : f32 to vector<8x32xf32>
    %70 = arith.addf %69, %68 : vector<8x32xf32>
    %71 = arith.divf %69, %70 : vector<8x32xf32>
    %72 = vector.extract_strided_slice %65 {offsets = [0, 32], sizes = [8, 32], strides = [1, 1]} : vector<8x64xf32> to vector<8x32xf32>
    %73 = math.tanh %72 : vector<8x32xf32>
    %74 = arith.mulf %71, %73 : vector<8x32xf32>
    %75 = vector.extract_strided_slice %58 {offsets = [0, 64], sizes = [8, 32], strides = [1, 1]} : vector<8x96xf32> to vector<8x32xf32>
    %76 = math.tanh %75 : vector<8x32xf32>
    %77 = vector.extract_strided_slice %60 {offsets = [0, 64], sizes = [8, 32], strides = [1, 1]} : vector<8x96xf32> to vector<8x32xf32>
    %78 = math.tanh %77 : vector<8x32xf32>
    %79 = tpu.concatenate %76, %78, %74 in 1 : vector<8x32xf32>, vector<8x32xf32>, vector<8x32xf32> -> vector<8x96xf32>
    %cst_30 = arith.constant dense<0.000000e+00> : vector<8x32xf32>
    %80 = tpu.matmul %79, %4, %cst_30 {dimension_numbers = #tpu.dot_dimension_numbers<[1], [0], [0], [1], [0, 0, 1, 1], [], []>} : vector<8x96xf32>, vector<96x32xf32>, vector<8x32xf32> -> vector<8x32xf32>
    %81 = vector.broadcast %7 : vector<1x32xf32> to vector<8x32xf32>
    %82 = arith.addf %80, %81 : vector<8x32xf32>
    %83 = arith.negf %82 : vector<8x32xf32>
    %84 = math.exp %83 : vector<8x32xf32>
    %cst_31 = arith.constant 1.000000e+00 : f32
    %85 = vector.broadcast %cst_31 : f32 to vector<8x32xf32>
    %86 = arith.addf %85, %84 : vector<8x32xf32>
    %87 = arith.divf %85, %86 : vector<8x32xf32>
    %cst_32 = arith.constant dense<0.000000e+00> : vector<8x64xf32>
    %88 = tpu.matmul %87, %5, %cst_32 {dimension_numbers = #tpu.dot_dimension_numbers<[1], [0], [0], [1], [0, 0, 1, 1], [], []>} : vector<8x32xf32>, vector<32x64xf32>, vector<8x64xf32> -> vector<8x64xf32>
    %89 = vector.extract_strided_slice %88 {offsets = [0, 0], sizes = [8, 32], strides = [1, 1]} : vector<8x64xf32> to vector<8x32xf32>
    %90 = vector.extract_strided_slice %88 {offsets = [0, 32], sizes = [8, 32], strides = [1, 1]} : vector<8x64xf32> to vector<8x32xf32>
    %cst_33 = arith.constant 1.000000e+00 : f32
    %91 = vector.broadcast %cst_33 : f32 to vector<8x32xf32>
    %92 = arith.subf %91, %89 : vector<8x32xf32>
    %93 = arith.subf %92, %90 : vector<8x32xf32>
    %94 = arith.mulf %89, %76 : vector<8x32xf32>
    %95 = arith.mulf %90, %78 : vector<8x32xf32>
    %96 = arith.addf %94, %95 : vector<8x32xf32>
    %97 = arith.mulf %93, %74 : vector<8x32xf32>
    %98 = arith.addf %96, %97 : vector<8x32xf32>
    %c0_34 = arith.constant 0 : index
    %c0_35 = arith.constant 0 : index
    %99 = vector.load %arg10[%c0_34, %c0_35] : memref<8x32xf32, #tpu.memory_space<vmem>>, vector<8x32xf32>
    tpu.vector_store %arg10[%c0_34, %c0_35], %98 {strides = array<i32>} : memref<8x32xf32, #tpu.memory_space<vmem>>, vector<8x32xf32>,
    %100 = arith.index_cast %c1_i32 : i32 to index
    %c0_36 = arith.constant 0 : index
    %c0_37 = arith.constant 0 : index
    %101 = vector.load %arg9[%100, %c0_36, %c0_37] : memref<8x8x32xf32, #tpu.memory_space<vmem>>, vector<1x8x32xf32>
    %102 = vector.shape_cast %101 : vector<1x8x32xf32> to vector<8x32xf32>
    %103 = vector.shape_cast %98 : vector<8x32xf32> to vector<1x8x32xf32>
    tpu.vector_store %arg9[%100, %c0_36, %c0_37], %103 {strides = array<i32>} : memref<8x8x32xf32, #tpu.memory_space<vmem>>, vector<1x8x32xf32>,
    %c2_i32 = arith.constant 2 : i32
    %104 = arith.index_cast %c2_i32 : i32 to index
    %c0_38 = arith.constant 0 : index
    %c0_39 = arith.constant 0 : index
    %105 = vector.load %arg2[%104, %c0_38, %c0_39] : memref<8x8x96xf32, #tpu.memory_space<vmem>>, vector<1x8x96xf32>
    %106 = vector.shape_cast %105 : vector<1x8x96xf32> to vector<8x96xf32>
    %c0_40 = arith.constant 0 : index
    %c0_41 = arith.constant 0 : index
    %107 = vector.load %arg10[%c0_40, %c0_41] : memref<8x32xf32, #tpu.memory_space<vmem>>, vector<8x32xf32>
    %cst_42 = arith.constant dense<0.000000e+00> : vector<8x96xf32>
    %108 = tpu.matmul %107, %3, %cst_42 {dimension_numbers = #tpu.dot_dimension_numbers<[1], [0], [0], [1], [0, 0, 1, 1], [], []>} : vector<8x32xf32>, vector<32x96xf32>, vector<8x96xf32> -> vector<8x96xf32>
    %109 = vector.extract_strided_slice %106 {offsets = [0, 0], sizes = [8, 64], strides = [1, 1]} : vector<8x96xf32> to vector<8x64xf32>
    %110 = vector.extract_strided_slice %108 {offsets = [0, 0], sizes = [8, 64], strides = [1, 1]} : vector<8x96xf32> to vector<8x64xf32>
    %111 = arith.addf %109, %110 : vector<8x64xf32>
    %112 = vector.broadcast %6 : vector<1x64xf32> to vector<8x64xf32>
    %113 = arith.addf %111, %112 : vector<8x64xf32>
    %114 = vector.extract_strided_slice %113 {offsets = [0, 0], sizes = [8, 32], strides = [1, 1]} : vector<8x64xf32> to vector<8x32xf32>
    %115 = arith.negf %114 : vector<8x32xf32>
    %116 = math.exp %115 : vector<8x32xf32>
    %cst_43 = arith.constant 1.000000e+00 : f32
    %117 = vector.broadcast %cst_43 : f32 to vector<8x32xf32>
    %118 = arith.addf %117, %116 : vector<8x32xf32>
    %119 = arith.divf %117, %118 : vector<8x32xf32>
    %120 = vector.extract_strided_slice %113 {offsets = [0, 32], sizes = [8, 32], strides = [1, 1]} : vector<8x64xf32> to vector<8x32xf32>
    %121 = math.tanh %120 : vector<8x32xf32>
    %122 = arith.mulf %119, %121 : vector<8x32xf32>
    %123 = vector.extract_strided_slice %106 {offsets = [0, 64], sizes = [8, 32], strides = [1, 1]} : vector<8x96xf32> to vector<8x32xf32>
    %124 = math.tanh %123 : vector<8x32xf32>
    %125 = vector.extract_strided_slice %108 {offsets = [0, 64], sizes = [8, 32], strides = [1, 1]} : vector<8x96xf32> to vector<8x32xf32>
    %126 = math.tanh %125 : vector<8x32xf32>
    %127 = tpu.concatenate %124, %126, %122 in 1 : vector<8x32xf32>, vector<8x32xf32>, vector<8x32xf32> -> vector<8x96xf32>
    %cst_44 = arith.constant dense<0.000000e+00> : vector<8x32xf32>
    %128 = tpu.matmul %127, %4, %cst_44 {dimension_numbers = #tpu.dot_dimension_numbers<[1], [0], [0], [1], [0, 0, 1, 1], [], []>} : vector<8x96xf32>, vector<96x32xf32>, vector<8x32xf32> -> vector<8x32xf32>
    %129 = vector.broadcast %7 : vector<1x32xf32> to vector<8x32xf32>
    %130 = arith.addf %128, %129 : vector<8x32xf32>
    %131 = arith.negf %130 : vector<8x32xf32>
    %132 = math.exp %131 : vector<8x32xf32>
    %cst_45 = arith.constant 1.000000e+00 : f32
    %133 = vector.broadcast %cst_45 : f32 to vector<8x32xf32>
    %134 = arith.addf %133, %132 : vector<8x32xf32>
    %135 = arith.divf %133, %134 : vector<8x32xf32>
    %cst_46 = arith.constant dense<0.000000e+00> : vector<8x64xf32>
    %136 = tpu.matmul %135, %5, %cst_46 {dimension_numbers = #tpu.dot_dimension_numbers<[1], [0], [0], [1], [0, 0, 1, 1], [], []>} : vector<8x32xf32>, vector<32x64xf32>, vector<8x64xf32> -> vector<8x64xf32>
    %137 = vector.extract_strided_slice %136 {offsets = [0, 0], sizes = [8, 32], strides = [1, 1]} : vector<8x64xf32> to vector<8x32xf32>
    %138 = vector.extract_strided_slice %136 {offsets = [0, 32], sizes = [8, 32], strides = [1, 1]} : vector<8x64xf32> to vector<8x32xf32>
    %cst_47 = arith.constant 1.000000e+00 : f32
    %139 = vector.broadcast %cst_47 : f32 to vector<8x32xf32>
    %140 = arith.subf %139, %137 : vector<8x32xf32>
    %141 = arith.subf %140, %138 : vector<8x32xf32>
    %142 = arith.mulf %137, %124 : vector<8x32xf32>
    %143 = arith.mulf %138, %126 : vector<8x32xf32>
    %144 = arith.addf %142, %143 : vector<8x32xf32>
    %145 = arith.mulf %141, %122 : vector<8x32xf32>
    %146 = arith.addf %144, %145 : vector<8x32xf32>
    %c0_48 = arith.constant 0 : index
    %c0_49 = arith.constant 0 : index
    %147 = vector.load %arg10[%c0_48, %c0_49] : memref<8x32xf32, #tpu.memory_space<vmem>>, vector<8x32xf32>
    tpu.vector_store %arg10[%c0_48, %c0_49], %146 {strides = array<i32>} : memref<8x32xf32, #tpu.memory_space<vmem>>, vector<8x32xf32>,
    %148 = arith.index_cast %c2_i32 : i32 to index
    %c0_50 = arith.constant 0 : index
    %c0_51 = arith.constant 0 : index
    %149 = vector.load %arg9[%148, %c0_50, %c0_51] : memref<8x8x32xf32, #tpu.memory_space<vmem>>, vector<1x8x32xf32>
    %150 = vector.shape_cast %149 : vector<1x8x32xf32> to vector<8x32xf32>
    %151 = vector.shape_cast %146 : vector<8x32xf32> to vector<1x8x32xf32>
    tpu.vector_store %arg9[%148, %c0_50, %c0_51], %151 {strides = array<i32>} : memref<8x8x32xf32, #tpu.memory_space<vmem>>, vector<1x8x32xf32>,
    %c3_i32 = arith.constant 3 : i32
    %152 = arith.index_cast %c3_i32 : i32 to index
    %c0_52 = arith.constant 0 : index
    %c0_53 = arith.constant 0 : index
    %153 = vector.load %arg2[%152, %c0_52, %c0_53] : memref<8x8x96xf32, #tpu.memory_space<vmem>>, vector<1x8x96xf32>
    %154 = vector.shape_cast %153 : vector<1x8x96xf32> to vector<8x96xf32>
    %c0_54 = arith.constant 0 : index
    %c0_55 = arith.constant 0 : index
    %155 = vector.load %arg10[%c0_54, %c0_55] : memref<8x32xf32, #tpu.memory_space<vmem>>, vector<8x32xf32>
    %cst_56 = arith.constant dense<0.000000e+00> : vector<8x96xf32>
    %156 = tpu.matmul %155, %3, %cst_56 {dimension_numbers = #tpu.dot_dimension_numbers<[1], [0], [0], [1], [0, 0, 1, 1], [], []>} : vector<8x32xf32>, vector<32x96xf32>, vector<8x96xf32> -> vector<8x96xf32>
    %157 = vector.extract_strided_slice %154 {offsets = [0, 0], sizes = [8, 64], strides = [1, 1]} : vector<8x96xf32> to vector<8x64xf32>
    %158 = vector.extract_strided_slice %156 {offsets = [0, 0], sizes = [8, 64], strides = [1, 1]} : vector<8x96xf32> to vector<8x64xf32>
    %159 = arith.addf %157, %158 : vector<8x64xf32>
    %160 = vector.broadcast %6 : vector<1x64xf32> to vector<8x64xf32>
    %161 = arith.addf %159, %160 : vector<8x64xf32>
    %162 = vector.extract_strided_slice %161 {offsets = [0, 0], sizes = [8, 32], strides = [1, 1]} : vector<8x64xf32> to vector<8x32xf32>
    %163 = arith.negf %162 : vector<8x32xf32>
    %164 = math.exp %163 : vector<8x32xf32>
    %cst_57 = arith.constant 1.000000e+00 : f32
    %165 = vector.broadcast %cst_57 : f32 to vector<8x32xf32>
    %166 = arith.addf %165, %164 : vector<8x32xf32>
    %167 = arith.divf %165, %166 : vector<8x32xf32>
    %168 = vector.extract_strided_slice %161 {offsets = [0, 32], sizes = [8, 32], strides = [1, 1]} : vector<8x64xf32> to vector<8x32xf32>
    %169 = math.tanh %168 : vector<8x32xf32>
    %170 = arith.mulf %167, %169 : vector<8x32xf32>
    %171 = vector.extract_strided_slice %154 {offsets = [0, 64], sizes = [8, 32], strides = [1, 1]} : vector<8x96xf32> to vector<8x32xf32>
    %172 = math.tanh %171 : vector<8x32xf32>
    %173 = vector.extract_strided_slice %156 {offsets = [0, 64], sizes = [8, 32], strides = [1, 1]} : vector<8x96xf32> to vector<8x32xf32>
    %174 = math.tanh %173 : vector<8x32xf32>
    %175 = tpu.concatenate %172, %174, %170 in 1 : vector<8x32xf32>, vector<8x32xf32>, vector<8x32xf32> -> vector<8x96xf32>
    %cst_58 = arith.constant dense<0.000000e+00> : vector<8x32xf32>
    %176 = tpu.matmul %175, %4, %cst_58 {dimension_numbers = #tpu.dot_dimension_numbers<[1], [0], [0], [1], [0, 0, 1, 1], [], []>} : vector<8x96xf32>, vector<96x32xf32>, vector<8x32xf32> -> vector<8x32xf32>
    %177 = vector.broadcast %7 : vector<1x32xf32> to vector<8x32xf32>
    %178 = arith.addf %176, %177 : vector<8x32xf32>
    %179 = arith.negf %178 : vector<8x32xf32>
    %180 = math.exp %179 : vector<8x32xf32>
    %cst_59 = arith.constant 1.000000e+00 : f32
    %181 = vector.broadcast %cst_59 : f32 to vector<8x32xf32>
    %182 = arith.addf %181, %180 : vector<8x32xf32>
    %183 = arith.divf %181, %182 : vector<8x32xf32>
    %cst_60 = arith.constant dense<0.000000e+00> : vector<8x64xf32>
    %184 = tpu.matmul %183, %5, %cst_60 {dimension_numbers = #tpu.dot_dimension_numbers<[1], [0], [0], [1], [0, 0, 1, 1], [], []>} : vector<8x32xf32>, vector<32x64xf32>, vector<8x64xf32> -> vector<8x64xf32>
    %185 = vector.extract_strided_slice %184 {offsets = [0, 0], sizes = [8, 32], strides = [1, 1]} : vector<8x64xf32> to vector<8x32xf32>
    %186 = vector.extract_strided_slice %184 {offsets = [0, 32], sizes = [8, 32], strides = [1, 1]} : vector<8x64xf32> to vector<8x32xf32>
    %cst_61 = arith.constant 1.000000e+00 : f32
    %187 = vector.broadcast %cst_61 : f32 to vector<8x32xf32>
    %188 = arith.subf %187, %185 : vector<8x32xf32>
    %189 = arith.subf %188, %186 : vector<8x32xf32>
    %190 = arith.mulf %185, %172 : vector<8x32xf32>
    %191 = arith.mulf %186, %174 : vector<8x32xf32>
    %192 = arith.addf %190, %191 : vector<8x32xf32>
    %193 = arith.mulf %189, %170 : vector<8x32xf32>
    %194 = arith.addf %192, %193 : vector<8x32xf32>
    %c0_62 = arith.constant 0 : index
    %c0_63 = arith.constant 0 : index
    %195 = vector.load %arg10[%c0_62, %c0_63] : memref<8x32xf32, #tpu.memory_space<vmem>>, vector<8x32xf32>
    tpu.vector_store %arg10[%c0_62, %c0_63], %194 {strides = array<i32>} : memref<8x32xf32, #tpu.memory_space<vmem>>, vector<8x32xf32>,
    %196 = arith.index_cast %c3_i32 : i32 to index
    %c0_64 = arith.constant 0 : index
    %c0_65 = arith.constant 0 : index
    %197 = vector.load %arg9[%196, %c0_64, %c0_65] : memref<8x8x32xf32, #tpu.memory_space<vmem>>, vector<1x8x32xf32>
    %198 = vector.shape_cast %197 : vector<1x8x32xf32> to vector<8x32xf32>
    %199 = vector.shape_cast %194 : vector<8x32xf32> to vector<1x8x32xf32>
    tpu.vector_store %arg9[%196, %c0_64, %c0_65], %199 {strides = array<i32>} : memref<8x8x32xf32, #tpu.memory_space<vmem>>, vector<1x8x32xf32>,
    %c4_i32 = arith.constant 4 : i32
    %200 = arith.index_cast %c4_i32 : i32 to index
    %c0_66 = arith.constant 0 : index
    %c0_67 = arith.constant 0 : index
    %201 = vector.load %arg2[%200, %c0_66, %c0_67] : memref<8x8x96xf32, #tpu.memory_space<vmem>>, vector<1x8x96xf32>
    %202 = vector.shape_cast %201 : vector<1x8x96xf32> to vector<8x96xf32>
    %c0_68 = arith.constant 0 : index
    %c0_69 = arith.constant 0 : index
    %203 = vector.load %arg10[%c0_68, %c0_69] : memref<8x32xf32, #tpu.memory_space<vmem>>, vector<8x32xf32>
    %cst_70 = arith.constant dense<0.000000e+00> : vector<8x96xf32>
    %204 = tpu.matmul %203, %3, %cst_70 {dimension_numbers = #tpu.dot_dimension_numbers<[1], [0], [0], [1], [0, 0, 1, 1], [], []>} : vector<8x32xf32>, vector<32x96xf32>, vector<8x96xf32> -> vector<8x96xf32>
    %205 = vector.extract_strided_slice %202 {offsets = [0, 0], sizes = [8, 64], strides = [1, 1]} : vector<8x96xf32> to vector<8x64xf32>
    %206 = vector.extract_strided_slice %204 {offsets = [0, 0], sizes = [8, 64], strides = [1, 1]} : vector<8x96xf32> to vector<8x64xf32>
    %207 = arith.addf %205, %206 : vector<8x64xf32>
    %208 = vector.broadcast %6 : vector<1x64xf32> to vector<8x64xf32>
    %209 = arith.addf %207, %208 : vector<8x64xf32>
    %210 = vector.extract_strided_slice %209 {offsets = [0, 0], sizes = [8, 32], strides = [1, 1]} : vector<8x64xf32> to vector<8x32xf32>
    %211 = arith.negf %210 : vector<8x32xf32>
    %212 = math.exp %211 : vector<8x32xf32>
    %cst_71 = arith.constant 1.000000e+00 : f32
    %213 = vector.broadcast %cst_71 : f32 to vector<8x32xf32>
    %214 = arith.addf %213, %212 : vector<8x32xf32>
    %215 = arith.divf %213, %214 : vector<8x32xf32>
    %216 = vector.extract_strided_slice %209 {offsets = [0, 32], sizes = [8, 32], strides = [1, 1]} : vector<8x64xf32> to vector<8x32xf32>
    %217 = math.tanh %216 : vector<8x32xf32>
    %218 = arith.mulf %215, %217 : vector<8x32xf32>
    %219 = vector.extract_strided_slice %202 {offsets = [0, 64], sizes = [8, 32], strides = [1, 1]} : vector<8x96xf32> to vector<8x32xf32>
    %220 = math.tanh %219 : vector<8x32xf32>
    %221 = vector.extract_strided_slice %204 {offsets = [0, 64], sizes = [8, 32], strides = [1, 1]} : vector<8x96xf32> to vector<8x32xf32>
    %222 = math.tanh %221 : vector<8x32xf32>
    %223 = tpu.concatenate %220, %222, %218 in 1 : vector<8x32xf32>, vector<8x32xf32>, vector<8x32xf32> -> vector<8x96xf32>
    %cst_72 = arith.constant dense<0.000000e+00> : vector<8x32xf32>
    %224 = tpu.matmul %223, %4, %cst_72 {dimension_numbers = #tpu.dot_dimension_numbers<[1], [0], [0], [1], [0, 0, 1, 1], [], []>} : vector<8x96xf32>, vector<96x32xf32>, vector<8x32xf32> -> vector<8x32xf32>
    %225 = vector.broadcast %7 : vector<1x32xf32> to vector<8x32xf32>
    %226 = arith.addf %224, %225 : vector<8x32xf32>
    %227 = arith.negf %226 : vector<8x32xf32>
    %228 = math.exp %227 : vector<8x32xf32>
    %cst_73 = arith.constant 1.000000e+00 : f32
    %229 = vector.broadcast %cst_73 : f32 to vector<8x32xf32>
    %230 = arith.addf %229, %228 : vector<8x32xf32>
    %231 = arith.divf %229, %230 : vector<8x32xf32>
    %cst_74 = arith.constant dense<0.000000e+00> : vector<8x64xf32>
    %232 = tpu.matmul %231, %5, %cst_74 {dimension_numbers = #tpu.dot_dimension_numbers<[1], [0], [0], [1], [0, 0, 1, 1], [], []>} : vector<8x32xf32>, vector<32x64xf32>, vector<8x64xf32> -> vector<8x64xf32>
    %233 = vector.extract_strided_slice %232 {offsets = [0, 0], sizes = [8, 32], strides = [1, 1]} : vector<8x64xf32> to vector<8x32xf32>
    %234 = vector.extract_strided_slice %232 {offsets = [0, 32], sizes = [8, 32], strides = [1, 1]} : vector<8x64xf32> to vector<8x32xf32>
    %cst_75 = arith.constant 1.000000e+00 : f32
    %235 = vector.broadcast %cst_75 : f32 to vector<8x32xf32>
    %236 = arith.subf %235, %233 : vector<8x32xf32>
    %237 = arith.subf %236, %234 : vector<8x32xf32>
    %238 = arith.mulf %233, %220 : vector<8x32xf32>
    %239 = arith.mulf %234, %222 : vector<8x32xf32>
    %240 = arith.addf %238, %239 : vector<8x32xf32>
    %241 = arith.mulf %237, %218 : vector<8x32xf32>
    %242 = arith.addf %240, %241 : vector<8x32xf32>
    %c0_76 = arith.constant 0 : index
    %c0_77 = arith.constant 0 : index
    %243 = vector.load %arg10[%c0_76, %c0_77] : memref<8x32xf32, #tpu.memory_space<vmem>>, vector<8x32xf32>
    tpu.vector_store %arg10[%c0_76, %c0_77], %242 {strides = array<i32>} : memref<8x32xf32, #tpu.memory_space<vmem>>, vector<8x32xf32>,
    %244 = arith.index_cast %c4_i32 : i32 to index
    %c0_78 = arith.constant 0 : index
    %c0_79 = arith.constant 0 : index
    %245 = vector.load %arg9[%244, %c0_78, %c0_79] : memref<8x8x32xf32, #tpu.memory_space<vmem>>, vector<1x8x32xf32>
    %246 = vector.shape_cast %245 : vector<1x8x32xf32> to vector<8x32xf32>
    %247 = vector.shape_cast %242 : vector<8x32xf32> to vector<1x8x32xf32>
    tpu.vector_store %arg9[%244, %c0_78, %c0_79], %247 {strides = array<i32>} : memref<8x8x32xf32, #tpu.memory_space<vmem>>, vector<1x8x32xf32>,
    %c5_i32 = arith.constant 5 : i32
    %248 = arith.index_cast %c5_i32 : i32 to index
    %c0_80 = arith.constant 0 : index
    %c0_81 = arith.constant 0 : index
    %249 = vector.load %arg2[%248, %c0_80, %c0_81] : memref<8x8x96xf32, #tpu.memory_space<vmem>>, vector<1x8x96xf32>
    %250 = vector.shape_cast %249 : vector<1x8x96xf32> to vector<8x96xf32>
    %c0_82 = arith.constant 0 : index
    %c0_83 = arith.constant 0 : index
    %251 = vector.load %arg10[%c0_82, %c0_83] : memref<8x32xf32, #tpu.memory_space<vmem>>, vector<8x32xf32>
    %cst_84 = arith.constant dense<0.000000e+00> : vector<8x96xf32>
    %252 = tpu.matmul %251, %3, %cst_84 {dimension_numbers = #tpu.dot_dimension_numbers<[1], [0], [0], [1], [0, 0, 1, 1], [], []>} : vector<8x32xf32>, vector<32x96xf32>, vector<8x96xf32> -> vector<8x96xf32>
    %253 = vector.extract_strided_slice %250 {offsets = [0, 0], sizes = [8, 64], strides = [1, 1]} : vector<8x96xf32> to vector<8x64xf32>
    %254 = vector.extract_strided_slice %252 {offsets = [0, 0], sizes = [8, 64], strides = [1, 1]} : vector<8x96xf32> to vector<8x64xf32>
    %255 = arith.addf %253, %254 : vector<8x64xf32>
    %256 = vector.broadcast %6 : vector<1x64xf32> to vector<8x64xf32>
    %257 = arith.addf %255, %256 : vector<8x64xf32>
    %258 = vector.extract_strided_slice %257 {offsets = [0, 0], sizes = [8, 32], strides = [1, 1]} : vector<8x64xf32> to vector<8x32xf32>
    %259 = arith.negf %258 : vector<8x32xf32>
    %260 = math.exp %259 : vector<8x32xf32>
    %cst_85 = arith.constant 1.000000e+00 : f32
    %261 = vector.broadcast %cst_85 : f32 to vector<8x32xf32>
    %262 = arith.addf %261, %260 : vector<8x32xf32>
    %263 = arith.divf %261, %262 : vector<8x32xf32>
    %264 = vector.extract_strided_slice %257 {offsets = [0, 32], sizes = [8, 32], strides = [1, 1]} : vector<8x64xf32> to vector<8x32xf32>
    %265 = math.tanh %264 : vector<8x32xf32>
    %266 = arith.mulf %263, %265 : vector<8x32xf32>
    %267 = vector.extract_strided_slice %250 {offsets = [0, 64], sizes = [8, 32], strides = [1, 1]} : vector<8x96xf32> to vector<8x32xf32>
    %268 = math.tanh %267 : vector<8x32xf32>
    %269 = vector.extract_strided_slice %252 {offsets = [0, 64], sizes = [8, 32], strides = [1, 1]} : vector<8x96xf32> to vector<8x32xf32>
    %270 = math.tanh %269 : vector<8x32xf32>
    %271 = tpu.concatenate %268, %270, %266 in 1 : vector<8x32xf32>, vector<8x32xf32>, vector<8x32xf32> -> vector<8x96xf32>
    %cst_86 = arith.constant dense<0.000000e+00> : vector<8x32xf32>
    %272 = tpu.matmul %271, %4, %cst_86 {dimension_numbers = #tpu.dot_dimension_numbers<[1], [0], [0], [1], [0, 0, 1, 1], [], []>} : vector<8x96xf32>, vector<96x32xf32>, vector<8x32xf32> -> vector<8x32xf32>
    %273 = vector.broadcast %7 : vector<1x32xf32> to vector<8x32xf32>
    %274 = arith.addf %272, %273 : vector<8x32xf32>
    %275 = arith.negf %274 : vector<8x32xf32>
    %276 = math.exp %275 : vector<8x32xf32>
    %cst_87 = arith.constant 1.000000e+00 : f32
    %277 = vector.broadcast %cst_87 : f32 to vector<8x32xf32>
    %278 = arith.addf %277, %276 : vector<8x32xf32>
    %279 = arith.divf %277, %278 : vector<8x32xf32>
    %cst_88 = arith.constant dense<0.000000e+00> : vector<8x64xf32>
    %280 = tpu.matmul %279, %5, %cst_88 {dimension_numbers = #tpu.dot_dimension_numbers<[1], [0], [0], [1], [0, 0, 1, 1], [], []>} : vector<8x32xf32>, vector<32x64xf32>, vector<8x64xf32> -> vector<8x64xf32>
    %281 = vector.extract_strided_slice %280 {offsets = [0, 0], sizes = [8, 32], strides = [1, 1]} : vector<8x64xf32> to vector<8x32xf32>
    %282 = vector.extract_strided_slice %280 {offsets = [0, 32], sizes = [8, 32], strides = [1, 1]} : vector<8x64xf32> to vector<8x32xf32>
    %cst_89 = arith.constant 1.000000e+00 : f32
    %283 = vector.broadcast %cst_89 : f32 to vector<8x32xf32>
    %284 = arith.subf %283, %281 : vector<8x32xf32>
    %285 = arith.subf %284, %282 : vector<8x32xf32>
    %286 = arith.mulf %281, %268 : vector<8x32xf32>
    %287 = arith.mulf %282, %270 : vector<8x32xf32>
    %288 = arith.addf %286, %287 : vector<8x32xf32>
    %289 = arith.mulf %285, %266 : vector<8x32xf32>
    %290 = arith.addf %288, %289 : vector<8x32xf32>
    %c0_90 = arith.constant 0 : index
    %c0_91 = arith.constant 0 : index
    %291 = vector.load %arg10[%c0_90, %c0_91] : memref<8x32xf32, #tpu.memory_space<vmem>>, vector<8x32xf32>
    tpu.vector_store %arg10[%c0_90, %c0_91], %290 {strides = array<i32>} : memref<8x32xf32, #tpu.memory_space<vmem>>, vector<8x32xf32>,
    %292 = arith.index_cast %c5_i32 : i32 to index
    %c0_92 = arith.constant 0 : index
    %c0_93 = arith.constant 0 : index
    %293 = vector.load %arg9[%292, %c0_92, %c0_93] : memref<8x8x32xf32, #tpu.memory_space<vmem>>, vector<1x8x32xf32>
    %294 = vector.shape_cast %293 : vector<1x8x32xf32> to vector<8x32xf32>
    %295 = vector.shape_cast %290 : vector<8x32xf32> to vector<1x8x32xf32>
    tpu.vector_store %arg9[%292, %c0_92, %c0_93], %295 {strides = array<i32>} : memref<8x8x32xf32, #tpu.memory_space<vmem>>, vector<1x8x32xf32>,
    %c6_i32 = arith.constant 6 : i32
    %296 = arith.index_cast %c6_i32 : i32 to index
    %c0_94 = arith.constant 0 : index
    %c0_95 = arith.constant 0 : index
    %297 = vector.load %arg2[%296, %c0_94, %c0_95] : memref<8x8x96xf32, #tpu.memory_space<vmem>>, vector<1x8x96xf32>
    %298 = vector.shape_cast %297 : vector<1x8x96xf32> to vector<8x96xf32>
    %c0_96 = arith.constant 0 : index
    %c0_97 = arith.constant 0 : index
    %299 = vector.load %arg10[%c0_96, %c0_97] : memref<8x32xf32, #tpu.memory_space<vmem>>, vector<8x32xf32>
    %cst_98 = arith.constant dense<0.000000e+00> : vector<8x96xf32>
    %300 = tpu.matmul %299, %3, %cst_98 {dimension_numbers = #tpu.dot_dimension_numbers<[1], [0], [0], [1], [0, 0, 1, 1], [], []>} : vector<8x32xf32>, vector<32x96xf32>, vector<8x96xf32> -> vector<8x96xf32>
    %301 = vector.extract_strided_slice %298 {offsets = [0, 0], sizes = [8, 64], strides = [1, 1]} : vector<8x96xf32> to vector<8x64xf32>
    %302 = vector.extract_strided_slice %300 {offsets = [0, 0], sizes = [8, 64], strides = [1, 1]} : vector<8x96xf32> to vector<8x64xf32>
    %303 = arith.addf %301, %302 : vector<8x64xf32>
    %304 = vector.broadcast %6 : vector<1x64xf32> to vector<8x64xf32>
    %305 = arith.addf %303, %304 : vector<8x64xf32>
    %306 = vector.extract_strided_slice %305 {offsets = [0, 0], sizes = [8, 32], strides = [1, 1]} : vector<8x64xf32> to vector<8x32xf32>
    %307 = arith.negf %306 : vector<8x32xf32>
    %308 = math.exp %307 : vector<8x32xf32>
    %cst_99 = arith.constant 1.000000e+00 : f32
    %309 = vector.broadcast %cst_99 : f32 to vector<8x32xf32>
    %310 = arith.addf %309, %308 : vector<8x32xf32>
    %311 = arith.divf %309, %310 : vector<8x32xf32>
    %312 = vector.extract_strided_slice %305 {offsets = [0, 32], sizes = [8, 32], strides = [1, 1]} : vector<8x64xf32> to vector<8x32xf32>
    %313 = math.tanh %312 : vector<8x32xf32>
    %314 = arith.mulf %311, %313 : vector<8x32xf32>
    %315 = vector.extract_strided_slice %298 {offsets = [0, 64], sizes = [8, 32], strides = [1, 1]} : vector<8x96xf32> to vector<8x32xf32>
    %316 = math.tanh %315 : vector<8x32xf32>
    %317 = vector.extract_strided_slice %300 {offsets = [0, 64], sizes = [8, 32], strides = [1, 1]} : vector<8x96xf32> to vector<8x32xf32>
    %318 = math.tanh %317 : vector<8x32xf32>
    %319 = tpu.concatenate %316, %318, %314 in 1 : vector<8x32xf32>, vector<8x32xf32>, vector<8x32xf32> -> vector<8x96xf32>
    %cst_100 = arith.constant dense<0.000000e+00> : vector<8x32xf32>
    %320 = tpu.matmul %319, %4, %cst_100 {dimension_numbers = #tpu.dot_dimension_numbers<[1], [0], [0], [1], [0, 0, 1, 1], [], []>} : vector<8x96xf32>, vector<96x32xf32>, vector<8x32xf32> -> vector<8x32xf32>
    %321 = vector.broadcast %7 : vector<1x32xf32> to vector<8x32xf32>
    %322 = arith.addf %320, %321 : vector<8x32xf32>
    %323 = arith.negf %322 : vector<8x32xf32>
    %324 = math.exp %323 : vector<8x32xf32>
    %cst_101 = arith.constant 1.000000e+00 : f32
    %325 = vector.broadcast %cst_101 : f32 to vector<8x32xf32>
    %326 = arith.addf %325, %324 : vector<8x32xf32>
    %327 = arith.divf %325, %326 : vector<8x32xf32>
    %cst_102 = arith.constant dense<0.000000e+00> : vector<8x64xf32>
    %328 = tpu.matmul %327, %5, %cst_102 {dimension_numbers = #tpu.dot_dimension_numbers<[1], [0], [0], [1], [0, 0, 1, 1], [], []>} : vector<8x32xf32>, vector<32x64xf32>, vector<8x64xf32> -> vector<8x64xf32>
    %329 = vector.extract_strided_slice %328 {offsets = [0, 0], sizes = [8, 32], strides = [1, 1]} : vector<8x64xf32> to vector<8x32xf32>
    %330 = vector.extract_strided_slice %328 {offsets = [0, 32], sizes = [8, 32], strides = [1, 1]} : vector<8x64xf32> to vector<8x32xf32>
    %cst_103 = arith.constant 1.000000e+00 : f32
    %331 = vector.broadcast %cst_103 : f32 to vector<8x32xf32>
    %332 = arith.subf %331, %329 : vector<8x32xf32>
    %333 = arith.subf %332, %330 : vector<8x32xf32>
    %334 = arith.mulf %329, %316 : vector<8x32xf32>
    %335 = arith.mulf %330, %318 : vector<8x32xf32>
    %336 = arith.addf %334, %335 : vector<8x32xf32>
    %337 = arith.mulf %333, %314 : vector<8x32xf32>
    %338 = arith.addf %336, %337 : vector<8x32xf32>
    %c0_104 = arith.constant 0 : index
    %c0_105 = arith.constant 0 : index
    %339 = vector.load %arg10[%c0_104, %c0_105] : memref<8x32xf32, #tpu.memory_space<vmem>>, vector<8x32xf32>
    tpu.vector_store %arg10[%c0_104, %c0_105], %338 {strides = array<i32>} : memref<8x32xf32, #tpu.memory_space<vmem>>, vector<8x32xf32>,
    %340 = arith.index_cast %c6_i32 : i32 to index
    %c0_106 = arith.constant 0 : index
    %c0_107 = arith.constant 0 : index
    %341 = vector.load %arg9[%340, %c0_106, %c0_107] : memref<8x8x32xf32, #tpu.memory_space<vmem>>, vector<1x8x32xf32>
    %342 = vector.shape_cast %341 : vector<1x8x32xf32> to vector<8x32xf32>
    %343 = vector.shape_cast %338 : vector<8x32xf32> to vector<1x8x32xf32>
    tpu.vector_store %arg9[%340, %c0_106, %c0_107], %343 {strides = array<i32>} : memref<8x8x32xf32, #tpu.memory_space<vmem>>, vector<1x8x32xf32>,
    %c7_i32 = arith.constant 7 : i32
    %344 = arith.index_cast %c7_i32 : i32 to index
    %c0_108 = arith.constant 0 : index
    %c0_109 = arith.constant 0 : index
    %345 = vector.load %arg2[%344, %c0_108, %c0_109] : memref<8x8x96xf32, #tpu.memory_space<vmem>>, vector<1x8x96xf32>
    %346 = vector.shape_cast %345 : vector<1x8x96xf32> to vector<8x96xf32>
    %c0_110 = arith.constant 0 : index
    %c0_111 = arith.constant 0 : index
    %347 = vector.load %arg10[%c0_110, %c0_111] : memref<8x32xf32, #tpu.memory_space<vmem>>, vector<8x32xf32>
    %cst_112 = arith.constant dense<0.000000e+00> : vector<8x96xf32>
    %348 = tpu.matmul %347, %3, %cst_112 {dimension_numbers = #tpu.dot_dimension_numbers<[1], [0], [0], [1], [0, 0, 1, 1], [], []>} : vector<8x32xf32>, vector<32x96xf32>, vector<8x96xf32> -> vector<8x96xf32>
    %349 = vector.extract_strided_slice %346 {offsets = [0, 0], sizes = [8, 64], strides = [1, 1]} : vector<8x96xf32> to vector<8x64xf32>
    %350 = vector.extract_strided_slice %348 {offsets = [0, 0], sizes = [8, 64], strides = [1, 1]} : vector<8x96xf32> to vector<8x64xf32>
    %351 = arith.addf %349, %350 : vector<8x64xf32>
    %352 = vector.broadcast %6 : vector<1x64xf32> to vector<8x64xf32>
    %353 = arith.addf %351, %352 : vector<8x64xf32>
    %354 = vector.extract_strided_slice %353 {offsets = [0, 0], sizes = [8, 32], strides = [1, 1]} : vector<8x64xf32> to vector<8x32xf32>
    %355 = arith.negf %354 : vector<8x32xf32>
    %356 = math.exp %355 : vector<8x32xf32>
    %cst_113 = arith.constant 1.000000e+00 : f32
    %357 = vector.broadcast %cst_113 : f32 to vector<8x32xf32>
    %358 = arith.addf %357, %356 : vector<8x32xf32>
    %359 = arith.divf %357, %358 : vector<8x32xf32>
    %360 = vector.extract_strided_slice %353 {offsets = [0, 32], sizes = [8, 32], strides = [1, 1]} : vector<8x64xf32> to vector<8x32xf32>
    %361 = math.tanh %360 : vector<8x32xf32>
    %362 = arith.mulf %359, %361 : vector<8x32xf32>
    %363 = vector.extract_strided_slice %346 {offsets = [0, 64], sizes = [8, 32], strides = [1, 1]} : vector<8x96xf32> to vector<8x32xf32>
    %364 = math.tanh %363 : vector<8x32xf32>
    %365 = vector.extract_strided_slice %348 {offsets = [0, 64], sizes = [8, 32], strides = [1, 1]} : vector<8x96xf32> to vector<8x32xf32>
    %366 = math.tanh %365 : vector<8x32xf32>
    %367 = tpu.concatenate %364, %366, %362 in 1 : vector<8x32xf32>, vector<8x32xf32>, vector<8x32xf32> -> vector<8x96xf32>
    %cst_114 = arith.constant dense<0.000000e+00> : vector<8x32xf32>
    %368 = tpu.matmul %367, %4, %cst_114 {dimension_numbers = #tpu.dot_dimension_numbers<[1], [0], [0], [1], [0, 0, 1, 1], [], []>} : vector<8x96xf32>, vector<96x32xf32>, vector<8x32xf32> -> vector<8x32xf32>
    %369 = vector.broadcast %7 : vector<1x32xf32> to vector<8x32xf32>
    %370 = arith.addf %368, %369 : vector<8x32xf32>
    %371 = arith.negf %370 : vector<8x32xf32>
    %372 = math.exp %371 : vector<8x32xf32>
    %cst_115 = arith.constant 1.000000e+00 : f32
    %373 = vector.broadcast %cst_115 : f32 to vector<8x32xf32>
    %374 = arith.addf %373, %372 : vector<8x32xf32>
    %375 = arith.divf %373, %374 : vector<8x32xf32>
    %cst_116 = arith.constant dense<0.000000e+00> : vector<8x64xf32>
    %376 = tpu.matmul %375, %5, %cst_116 {dimension_numbers = #tpu.dot_dimension_numbers<[1], [0], [0], [1], [0, 0, 1, 1], [], []>} : vector<8x32xf32>, vector<32x64xf32>, vector<8x64xf32> -> vector<8x64xf32>
    %377 = vector.extract_strided_slice %376 {offsets = [0, 0], sizes = [8, 32], strides = [1, 1]} : vector<8x64xf32> to vector<8x32xf32>
    %378 = vector.extract_strided_slice %376 {offsets = [0, 32], sizes = [8, 32], strides = [1, 1]} : vector<8x64xf32> to vector<8x32xf32>
    %cst_117 = arith.constant 1.000000e+00 : f32
    %379 = vector.broadcast %cst_117 : f32 to vector<8x32xf32>
    %380 = arith.subf %379, %377 : vector<8x32xf32>
    %381 = arith.subf %380, %378 : vector<8x32xf32>
    %382 = arith.mulf %377, %364 : vector<8x32xf32>
    %383 = arith.mulf %378, %366 : vector<8x32xf32>
    %384 = arith.addf %382, %383 : vector<8x32xf32>
    %385 = arith.mulf %381, %362 : vector<8x32xf32>
    %386 = arith.addf %384, %385 : vector<8x32xf32>
    %c0_118 = arith.constant 0 : index
    %c0_119 = arith.constant 0 : index
    %387 = vector.load %arg10[%c0_118, %c0_119] : memref<8x32xf32, #tpu.memory_space<vmem>>, vector<8x32xf32>
    tpu.vector_store %arg10[%c0_118, %c0_119], %386 {strides = array<i32>} : memref<8x32xf32, #tpu.memory_space<vmem>>, vector<8x32xf32>,
    %388 = arith.index_cast %c7_i32 : i32 to index
    %c0_120 = arith.constant 0 : index
    %c0_121 = arith.constant 0 : index
    %389 = vector.load %arg9[%388, %c0_120, %c0_121] : memref<8x8x32xf32, #tpu.memory_space<vmem>>, vector<1x8x32xf32>
    %390 = vector.shape_cast %389 : vector<1x8x32xf32> to vector<8x32xf32>
    %391 = vector.shape_cast %386 : vector<8x32xf32> to vector<1x8x32xf32>
    tpu.vector_store %arg9[%388, %c0_120, %c0_121], %391 {strides = array<i32>} : memref<8x8x32xf32, #tpu.memory_space<vmem>>, vector<1x8x32xf32>,
    %c8_i32 = arith.constant 8 : i32
    return
  }
  func.func @transform_0(%arg0: i32, %arg1: i32) -> (i32, i32, i32) {
    %c0_i32 = arith.constant 0 : i32
    %c0_i32_0 = arith.constant 0 : i32
    return %arg1, %arg0, %c0_i32 : i32, i32, i32
  }
  func.func @transform_1(%arg0: i32, %arg1: i32) -> (i32, i32) {
    %c0_i32 = arith.constant 0 : i32
    %c0_i32_0 = arith.constant 0 : i32
    return %arg0, %c0_i32 : i32, i32
  }
  func.func @transform_2(%arg0: i32, %arg1: i32) -> (i32, i32) {
    %c0_i32 = arith.constant 0 : i32
    %c0_i32_0 = arith.constant 0 : i32
    %c0_i32_1 = arith.constant 0 : i32
    return %c0_i32, %c0_i32_0 : i32, i32
  }
  func.func @transform_3(%arg0: i32, %arg1: i32) -> (i32, i32) {
    %c0_i32 = arith.constant 0 : i32
    %c0_i32_0 = arith.constant 0 : i32
    %c0_i32_1 = arith.constant 0 : i32
    return %c0_i32, %c0_i32_0 : i32, i32
  }
  func.func @transform_4(%arg0: i32, %arg1: i32) -> (i32, i32) {
    %c0_i32 = arith.constant 0 : i32
    %c0_i32_0 = arith.constant 0 : i32
    %c0_i32_1 = arith.constant 0 : i32
    return %c0_i32, %c0_i32_0 : i32, i32
  }
  func.func @transform_5(%arg0: i32, %arg1: i32) -> (i32, i32) {
    %c0_i32 = arith.constant 0 : i32
    %c0_i32_0 = arith.constant 0 : i32
    %c0_i32_1 = arith.constant 0 : i32
    return %c0_i32, %c0_i32_0 : i32, i32
  }
  func.func @transform_6(%arg0: i32, %arg1: i32) -> (i32, i32) {
    %c0_i32 = arith.constant 0 : i32
    %c0_i32_0 = arith.constant 0 : i32
    %c0_i32_1 = arith.constant 0 : i32
    return %c0_i32, %c0_i32_0 : i32, i32
  }
  func.func @transform_7(%arg0: i32, %arg1: i32) -> (i32, i32, i32) {
    %c0_i32 = arith.constant 0 : i32
    %c0_i32_0 = arith.constant 0 : i32
    return %arg1, %arg0, %c0_i32 : i32, i32, i32
  }
}

module attributes {stable_mosaic.version = 11 : i64} {
  func.func @_eltm_layer_kernel(%arg0: i32, %arg1: i32, %arg2: memref<8x8x96xf32, #tpu.memory_space<vmem>>, %arg3: memref<8x32xf32, #tpu.memory_space<vmem>>, %arg4: memref<32x96xf32, #tpu.memory_space<vmem>>, %arg5: memref<1x64xf32, #tpu.memory_space<vmem>>, %arg6: memref<96x32xf32, #tpu.memory_space<vmem>>, %arg7: memref<1x32xf32, #tpu.memory_space<vmem>>, %arg8: memref<32x64xf32, #tpu.memory_space<vmem>>, %arg9: memref<8x8x32xf32, #tpu.memory_space<vmem>>, %arg10: memref<8x32xf32, #tpu.memory_space<vmem>>) attributes {dimension_semantics = [#tpu.dimension_semantics<parallel>, #tpu.dimension_semantics<arbitrary>], iteration_bounds = array<i64: 1, 1>, scalar_prefetch = 0 : i64, scratch_operands = 1 : i64, tpu.core_type = #tpu.core_type<tc>, window_params = [{transform_indices = @transform_0, window_bounds = array<i64: 8, 8, 96>}, {transform_indices = @transform_1, window_bounds = array<i64: 8, 32>}, {pipeline_mode = #tpu.pipeline_mode<synchronous>, transform_indices = @transform_2, window_bounds = array<i64: 32, 96>}, {pipeline_mode = #tpu.pipeline_mode<synchronous>, transform_indices = @transform_3, window_bounds = array<i64: 1, 64>}, {pipeline_mode = #tpu.pipeline_mode<synchronous>, transform_indices = @transform_4, window_bounds = array<i64: 96, 32>}, {pipeline_mode = #tpu.pipeline_mode<synchronous>, transform_indices = @transform_5, window_bounds = array<i64: 1, 32>}, {pipeline_mode = #tpu.pipeline_mode<synchronous>, transform_indices = @transform_6, window_bounds = array<i64: 32, 64>}, {transform_indices = @transform_7, window_bounds = array<i64: 8, 8, 32>}]} {
    %c0_i32 = arith.constant 0 : i32
    %0 = arith.cmpi eq, %arg1, %c0_i32 : i32
    %1 = arith.extui %0 : i1 to i32
    %c0_i32_0 = arith.constant 0 : i32
    %2 = arith.cmpi ne, %1, %c0_i32_0 : i32
    scf.if %2 {
      %c0_122 = arith.constant 0 : index
      %c0_123 = arith.constant 0 : index
      %392 = vector.load %arg3[%c0_122, %c0_123] : memref<8x32xf32, #tpu.memory_space<vmem>>, vector<8x32xf32>
      %c0_124 = arith.constant 0 : index
      %c0_125 = arith.constant 0 : index
      %393 = vector.load %arg10[%c0_124, %c0_125] : memref<8x32xf32, #tpu.memory_space<vmem>>, vector<8x32xf32>
      tpu.vector_store %arg10[%c0_124, %c0_125], %392 {strides = array<i32>} : memref<8x32xf32, #tpu.memory_space<vmem>>, vector<8x32xf32>,
    } else {
    }
    %c0 = arith.constant 0 : index
    %c0_1 = arith.constant 0 : index
    %3 = vector.load %arg4[%c0, %c0_1] : memref<32x96xf32, #tpu.memory_space<vmem>>, vector<32x96xf32>
    %c0_2 = arith.constant 0 : index
    %c0_3 = arith.constant 0 : index
    %4 = vector.load %arg6[%c0_2, %c0_3] : memref<96x32xf32, #tpu.memory_space<vmem>>, vector<96x32xf32>
    %c0_4 = arith.constant 0 : index
    %c0_5 = arith.constant 0 : index
    %5 = vector.load %arg8[%c0_4, %c0_5] : memref<32x64xf32, #tpu.memory_space<vmem>>, vector<32x64xf32>
    %c0_6 = arith.constant 0 : index
    %c0_7 = arith.constant 0 : index
    %6 = vector.load %arg5[%c0_6, %c0_7] : memref<1x64xf32, #tpu.memory_space<vmem>>, vector<1x64xf32>
    %c0_8 = arith.constant 0 : index
    %c0_9 = arith.constant 0 : index
    %7 = vector.load %arg7[%c0_8, %c0_9] : memref<1x32xf32, #tpu.memory_space<vmem>>, vector<1x32xf32>
    %c0_i32_10 = arith.constant 0 : i32
    %8 = arith.index_cast %c0_i32_10 : i32 to index
    %c0_11 = arith.constant 0 : index
    %c0_12 = arith.constant 0 : index
    %9 = vector.load %arg2[%8, %c0_11, %c0_12] : memref<8x8x96xf32, #tpu.memory_space<vmem>>, vector<1x8x96xf32>
    %10 = vector.shape_cast %9 : vector<1x8x96xf32> to vector<8x96xf32>
    %c0_13 = arith.constant 0 : index
    %c0_14 = arith.constant 0 : index
    %11 = vector.load %arg10[%c0_13, %c0_14] : memref<8x32xf32, #tpu.memory_space<vmem>>, vector<8x32xf32>
    %cst = arith.constant dense<0.000000e+00> : vector<8x96xf32>
    %12 = tpu.matmul %11, %3, %cst {dimension_numbers = #tpu.dot_dimension_numbers<[1], [0], [0], [1], [0, 0, 1, 1], [], []>} : vector<8x32xf32>, vector<32x96xf32>, vector<8x96xf32> -> vector<8x96xf32>
    %13 = vector.extract_strided_slice %10 {offsets = [0, 0], sizes = [8, 64], strides = [1, 1]} : vector<8x96xf32> to vector<8x64xf32>
    %14 = vector.extract_strided_slice %12 {offsets = [0, 0], sizes = [8, 64], strides = [1, 1]} : vector<8x96xf32> to vector<8x64xf32>
    %15 = arith.addf %13, %14 : vector<8x64xf32>
    %16 = vector.broadcast %6 : vector<1x64xf32> to vector<8x64xf32>
    %17 = arith.addf %15, %16 : vector<8x64xf32>
    %18 = vector.extract_strided_slice %17 {offsets = [0, 0], sizes = [8, 32], strides = [1, 1]} : vector<8x64xf32> to vector<8x32xf32>
    %19 = arith.negf %18 : vector<8x32xf32>
    %20 = math.exp %19 : vector<8x32xf32>
    %cst_15 = arith.constant 1.000000e+00 : f32
    %21 = vector.broadcast %cst_15 : f32 to vector<8x32xf32>
    %22 = arith.addf %21, %20 : vector<8x32xf32>
    %23 = arith.divf %21, %22 : vector<8x32xf32>
    %24 = vector.extract_strided_slice %17 {offsets = [0, 32], sizes = [8, 32], strides = [1, 1]} : vector<8x64xf32> to vector<8x32xf32>
    %25 = math.tanh %24 : vector<8x32xf32>
    %26 = arith.mulf %23, %25 : vector<8x32xf32>
    %27 = vector.extract_strided_slice %10 {offsets = [0, 64], sizes = [8, 32], strides = [1, 1]} : vector<8x96xf32> to vector<8x32xf32>
    %28 = math.tanh %27 : vector<8x32xf32>
    %29 = vector.extract_strided_slice %12 {offsets = [0, 64], sizes = [8, 32], strides = [1, 1]} : vector<8x96xf32> to vector<8x32xf32>
    %30 = math.tanh %29 : vector<8x32xf32>
    %31 = tpu.concatenate %28, %30, %26 in 1 : vector<8x32xf32>, vector<8x32xf32>, vector<8x32xf32> -> vector<8x96xf32>
    %cst_16 = arith.constant dense<0.000000e+00> : vector<8x32xf32>
    %32 = tpu.matmul %31, %4, %cst_16 {dimension_numbers = #tpu.dot_dimension_numbers<[1], [0], [0], [1], [0, 0, 1, 1], [], []>} : vector<8x96xf32>, vector<96x32xf32>, vector<8x32xf32> -> vector<8x32xf32>
    %33 = vector.broadcast %7 : vector<1x32xf32> to vector<8x32xf32>
    %34 = arith.addf %32, %33 : vector<8x32xf32>
    %35 = arith.negf %34 : vector<8x32xf32>
    %36 = math.exp %35 : vector<8x32xf32>
    %cst_17 = arith.constant 1.000000e+00 : f32
    %37 = vector.broadcast %cst_17 : f32 to vector<8x32xf32>
    %38 = arith.addf %37, %36 : vector<8x32xf32>
    %39 = arith.divf %37, %38 : vector<8x32xf32>
    %cst_18 = arith.constant dense<0.000000e+00> : vector<8x64xf32>
    %40 = tpu.matmul %39, %5, %cst_18 {dimension_numbers = #tpu.dot_dimension_numbers<[1], [0], [0], [1], [0, 0, 1, 1], [], []>} : vector<8x32xf32>, vector<32x64xf32>, vector<8x64xf32> -> vector<8x64xf32>
    %41 = vector.extract_strided_slice %40 {offsets = [0, 0], sizes = [8, 32], strides = [1, 1]} : vector<8x64xf32> to vector<8x32xf32>
    %42 = vector.extract_strided_slice %40 {offsets = [0, 32], sizes = [8, 32], strides = [1, 1]} : vector<8x64xf32> to vector<8x32xf32>
    %cst_19 = arith.constant 1.000000e+00 : f32
    %43 = vector.broadcast %cst_19 : f32 to vector<8x32xf32>
    %44 = arith.subf %43, %41 : vector<8x32xf32>
    %45 = arith.subf %44, %42 : vector<8x32xf32>
    %46 = arith.mulf %41, %28 : vector<8x32xf32>
    %47 = arith.mulf %42, %30 : vector<8x32xf32>
    %48 = arith.addf %46, %47 : vector<8x32xf32>
    %49 = arith.mulf %45, %26 : vector<8x32xf32>
    %50 = arith.addf %48, %49 : vector<8x32xf32>
    %c0_20 = arith.constant 0 : index
    %c0_21 = arith.constant 0 : index
    %51 = vector.load %arg10[%c0_20, %c0_21] : memref<8x32xf32, #tpu.memory_space<vmem>>, vector<8x32xf32>
    tpu.vector_store %arg10[%c0_20, %c0_21], %50 {strides = array<i32>} : memref<8x32xf32, #tpu.memory_space<vmem>>, vector<8x32xf32>,
    %52 = arith.index_cast %c0_i32_10 : i32 to index
    %c0_22 = arith.constant 0 : index
    %c0_23 = arith.constant 0 : index
    %53 = vector.load %arg9[%52, %c0_22, %c0_23] : memref<8x8x32xf32, #tpu.memory_space<vmem>>, vector<1x8x32xf32>
    %54 = vector.shape_cast %53 : vector<1x8x32xf32> to vector<8x32xf32>
    %55 = vector.shape_cast %50 : vector<8x32xf32> to vector<1x8x32xf32>
    tpu.vector_store %arg9[%52, %c0_22, %c0_23], %55 {strides = array<i32>} : memref<8x8x32xf32, #tpu.memory_space<vmem>>, vector<1x8x32xf32>,
    %c1_i32 = arith.constant 1 : i32
    %56 = arith.index_cast %c1_i32 : i32 to index
    %c0_24 = arith.constant 0 : index
    %c0_25 = arith.constant 0 : index
    %57 = vector.load %arg2[%56, %c0_24, %c0_25] : memref<8x8x96xf32, #tpu.memory_space<vmem>>, vector<1x8x96xf32>
    %58 = vector.shape_cast %57 : vector<1x8x96xf32> to vector<8x96xf32>
    %c0_26 = arith.constant 0 : index
    %c0_27 = arith.constant 0 : index
    %59 = vector.load %arg10[%c0_26, %c0_27] : memref<8x32xf32, #tpu.memory_space<vmem>>, vector<8x32xf32>
    %cst_28 = arith.constant dense<0.000000e+00> : vector<8x96xf32>
    %60 = tpu.matmul %59, %3, %cst_28 {dimension_numbers = #tpu.dot_dimension_numbers<[1], [0], [0], [1], [0, 0, 1, 1], [], []>} : vector<8x32xf32>, vector<32x96xf32>, vector<8x96xf32> -> vector<8x96xf32>
    %61 = vector.extract_strided_slice %58 {offsets = [0, 0], sizes = [8, 64], strides = [1, 1]} : vector<8x96xf32> to vector<8x64xf32>
    %62 = vector.extract_strided_slice %60 {offsets = [0, 0], sizes = [8, 64], strides = [1, 1]} : vector<8x96xf32> to vector<8x64xf32>
    %63 = arith.addf %61, %62 : vector<8x64xf32>
    %64 = vector.broadcast %6 : vector<1x64xf32> to vector<8x64xf32>
    %65 = arith.addf %63, %64 : vector<8x64xf32>
    %66 = vector.extract_strided_slice %65 {offsets = [0, 0], sizes = [8, 32], strides = [1, 1]} : vector<8x64xf32> to vector<8x32xf32>
    %67 = arith.negf %66 : vector<8x32xf32>
    %68 = math.exp %67 : vector<8x32xf32>
    %cst_29 = arith.constant 1.000000e+00 : f32
    %69 = vector.broadcast %cst_29 : f32 to vector<8x32xf32>
    %70 = arith.addf %69, %68 : vector<8x32xf32>
    %71 = arith.divf %69, %70 : vector<8x32xf32>
    %72 = vector.extract_strided_slice %65 {offsets = [0, 32], sizes = [8, 32], strides = [1, 1]} : vector<8x64xf32> to vector<8x32xf32>
    %73 = math.tanh %72 : vector<8x32xf32>
    %74 = arith.mulf %71, %73 : vector<8x32xf32>
    %75 = vector.extract_strided_slice %58 {offsets = [0, 64], sizes = [8, 32], strides = [1, 1]} : vector<8x96xf32> to vector<8x32xf32>
    %76 = math.tanh %75 : vector<8x32xf32>
    %77 = vector.extract_strided_slice %60 {offsets = [0, 64], sizes = [8, 32], strides = [1, 1]} : vector<8x96xf32> to vector<8x32xf32>
    %78 = math.tanh %77 : vector<8x32xf32>
    %79 = tpu.concatenate %76, %78, %74 in 1 : vector<8x32xf32>, vector<8x32xf32>, vector<8x32xf32> -> vector<8x96xf32>
    %cst_30 = arith.constant dense<0.000000e+00> : vector<8x32xf32>
    %80 = tpu.matmul %79, %4, %cst_30 {dimension_numbers = #tpu.dot_dimension_numbers<[1], [0], [0], [1], [0, 0, 1, 1], [], []>} : vector<8x96xf32>, vector<96x32xf32>, vector<8x32xf32> -> vector<8x32xf32>
    %81 = vector.broadcast %7 : vector<1x32xf32> to vector<8x32xf32>
    %82 = arith.addf %80, %81 : vector<8x32xf32>
    %83 = arith.negf %82 : vector<8x32xf32>
    %84 = math.exp %83 : vector<8x32xf32>
    %cst_31 = arith.constant 1.000000e+00 : f32
    %85 = vector.broadcast %cst_31 : f32 to vector<8x32xf32>
    %86 = arith.addf %85, %84 : vector<8x32xf32>
    %87 = arith.divf %85, %86 : vector<8x32xf32>
    %cst_32 = arith.constant dense<0.000000e+00> : vector<8x64xf32>
    %88 = tpu.matmul %87, %5, %cst_32 {dimension_numbers = #tpu.dot_dimension_numbers<[1], [0], [0], [1], [0, 0, 1, 1], [], []>} : vector<8x32xf32>, vector<32x64xf32>, vector<8x64xf32> -> vector<8x64xf32>
    %89 = vector.extract_strided_slice %88 {offsets = [0, 0], sizes = [8, 32], strides = [1, 1]} : vector<8x64xf32> to vector<8x32xf32>
    %90 = vector.extract_strided_slice %88 {offsets = [0, 32], sizes = [8, 32], strides = [1, 1]} : vector<8x64xf32> to vector<8x32xf32>
    %cst_33 = arith.constant 1.000000e+00 : f32
    %91 = vector.broadcast %cst_33 : f32 to vector<8x32xf32>
    %92 = arith.subf %91, %89 : vector<8x32xf32>
    %93 = arith.subf %92, %90 : vector<8x32xf32>
    %94 = arith.mulf %89, %76 : vector<8x32xf32>
    %95 = arith.mulf %90, %78 : vector<8x32xf32>
    %96 = arith.addf %94, %95 : vector<8x32xf32>
    %97 = arith.mulf %93, %74 : vector<8x32xf32>
    %98 = arith.addf %96, %97 : vector<8x32xf32>
    %c0_34 = arith.constant 0 : index
    %c0_35 = arith.constant 0 : index
    %99 = vector.load %arg10[%c0_34, %c0_35] : memref<8x32xf32, #tpu.memory_space<vmem>>, vector<8x32xf32>
    tpu.vector_store %arg10[%c0_34, %c0_35], %98 {strides = array<i32>} : memref<8x32xf32, #tpu.memory_space<vmem>>, vector<8x32xf32>,
    %100 = arith.index_cast %c1_i32 : i32 to index
    %c0_36 = arith.constant 0 : index
    %c0_37 = arith.constant 0 : index
    %101 = vector.load %arg9[%100, %c0_36, %c0_37] : memref<8x8x32xf32, #tpu.memory_space<vmem>>, vector<1x8x32xf32>
    %102 = vector.shape_cast %101 : vector<1x8x32xf32> to vector<8x32xf32>
    %103 = vector.shape_cast %98 : vector<8x32xf32> to vector<1x8x32xf32>
    tpu.vector_store %arg9[%100, %c0_36, %c0_37], %103 {strides = array<i32>} : memref<8x8x32xf32, #tpu.memory_space<vmem>>, vector<1x8x32xf32>,
    %c2_i32 = arith.constant 2 : i32
    %104 = arith.index_cast %c2_i32 : i32 to index
    %c0_38 = arith.constant 0 : index
    %c0_39 = arith.constant 0 : index
    %105 = vector.load %arg2[%104, %c0_38, %c0_39] : memref<8x8x96xf32, #tpu.memory_space<vmem>>, vector<1x8x96xf32>
    %106 = vector.shape_cast %105 : vector<1x8x96xf32> to vector<8x96xf32>
    %c0_40 = arith.constant 0 : index
    %c0_41 = arith.constant 0 : index
    %107 = vector.load %arg10[%c0_40, %c0_41] : memref<8x32xf32, #tpu.memory_space<vmem>>, vector<8x32xf32>
    %cst_42 = arith.constant dense<0.000000e+00> : vector<8x96xf32>
    %108 = tpu.matmul %107, %3, %cst_42 {dimension_numbers = #tpu.dot_dimension_numbers<[1], [0], [0], [1], [0, 0, 1, 1], [], []>} : vector<8x32xf32>, vector<32x96xf32>, vector<8x96xf32> -> vector<8x96xf32>
    %109 = vector.extract_strided_slice %106 {offsets = [0, 0], sizes = [8, 64], strides = [1, 1]} : vector<8x96xf32> to vector<8x64xf32>
    %110 = vector.extract_strided_slice %108 {offsets = [0, 0], sizes = [8, 64], strides = [1, 1]} : vector<8x96xf32> to vector<8x64xf32>
    %111 = arith.addf %109, %110 : vector<8x64xf32>
    %112 = vector.broadcast %6 : vector<1x64xf32> to vector<8x64xf32>
    %113 = arith.addf %111, %112 : vector<8x64xf32>
    %114 = vector.extract_strided_slice %113 {offsets = [0, 0], sizes = [8, 32], strides = [1, 1]} : vector<8x64xf32> to vector<8x32xf32>
    %115 = arith.negf %114 : vector<8x32xf32>
    %116 = math.exp %115 : vector<8x32xf32>
    %cst_43 = arith.constant 1.000000e+00 : f32
    %117 = vector.broadcast %cst_43 : f32 to vector<8x32xf32>
    %118 = arith.addf %117, %116 : vector<8x32xf32>
    %119 = arith.divf %117, %118 : vector<8x32xf32>
    %120 = vector.extract_strided_slice %113 {offsets = [0, 32], sizes = [8, 32], strides = [1, 1]} : vector<8x64xf32> to vector<8x32xf32>
    %121 = math.tanh %120 : vector<8x32xf32>
    %122 = arith.mulf %119, %121 : vector<8x32xf32>
    %123 = vector.extract_strided_slice %106 {offsets = [0, 64], sizes = [8, 32], strides = [1, 1]} : vector<8x96xf32> to vector<8x32xf32>
    %124 = math.tanh %123 : vector<8x32xf32>
    %125 = vector.extract_strided_slice %108 {offsets = [0, 64], sizes = [8, 32], strides = [1, 1]} : vector<8x96xf32> to vector<8x32xf32>
    %126 = math.tanh %125 : vector<8x32xf32>
    %127 = tpu.concatenate %124, %126, %122 in 1 : vector<8x32xf32>, vector<8x32xf32>, vector<8x32xf32> -> vector<8x96xf32>
    %cst_44 = arith.constant dense<0.000000e+00> : vector<8x32xf32>
    %128 = tpu.matmul %127, %4, %cst_44 {dimension_numbers = #tpu.dot_dimension_numbers<[1], [0], [0], [1], [0, 0, 1, 1], [], []>} : vector<8x96xf32>, vector<96x32xf32>, vector<8x32xf32> -> vector<8x32xf32>
    %129 = vector.broadcast %7 : vector<1x32xf32> to vector<8x32xf32>
    %130 = arith.addf %128, %129 : vector<8x32xf32>
    %131 = arith.negf %130 : vector<8x32xf32>
    %132 = math.exp %131 : vector<8x32xf32>
    %cst_45 = arith.constant 1.000000e+00 : f32
    %133 = vector.broadcast %cst_45 : f32 to vector<8x32xf32>
    %134 = arith.addf %133, %132 : vector<8x32xf32>
    %135 = arith.divf %133, %134 : vector<8x32xf32>
    %cst_46 = arith.constant dense<0.000000e+00> : vector<8x64xf32>
    %136 = tpu.matmul %135, %5, %cst_46 {dimension_numbers = #tpu.dot_dimension_numbers<[1], [0], [0], [1], [0, 0, 1, 1], [], []>} : vector<8x32xf32>, vector<32x64xf32>, vector<8x64xf32> -> vector<8x64xf32>
    %137 = vector.extract_strided_slice %136 {offsets = [0, 0], sizes = [8, 32], strides = [1, 1]} : vector<8x64xf32> to vector<8x32xf32>
    %138 = vector.extract_strided_slice %136 {offsets = [0, 32], sizes = [8, 32], strides = [1, 1]} : vector<8x64xf32> to vector<8x32xf32>
    %cst_47 = arith.constant 1.000000e+00 : f32
    %139 = vector.broadcast %cst_47 : f32 to vector<8x32xf32>
    %140 = arith.subf %139, %137 : vector<8x32xf32>
    %141 = arith.subf %140, %138 : vector<8x32xf32>
    %142 = arith.mulf %137, %124 : vector<8x32xf32>
    %143 = arith.mulf %138, %126 : vector<8x32xf32>
    %144 = arith.addf %142, %143 : vector<8x32xf32>
    %145 = arith.mulf %141, %122 : vector<8x32xf32>
    %146 = arith.addf %144, %145 : vector<8x32xf32>
    %c0_48 = arith.constant 0 : index
    %c0_49 = arith.constant 0 : index
    %147 = vector.load %arg10[%c0_48, %c0_49] : memref<8x32xf32, #tpu.memory_space<vmem>>, vector<8x32xf32>
    tpu.vector_store %arg10[%c0_48, %c0_49], %146 {strides = array<i32>} : memref<8x32xf32, #tpu.memory_space<vmem>>, vector<8x32xf32>,
    %148 = arith.index_cast %c2_i32 : i32 to index
    %c0_50 = arith.constant 0 : index
    %c0_51 = arith.constant 0 : index
    %149 = vector.load %arg9[%148, %c0_50, %c0_51] : memref<8x8x32xf32, #tpu.memory_space<vmem>>, vector<1x8x32xf32>
    %150 = vector.shape_cast %149 : vector<1x8x32xf32> to vector<8x32xf32>
    %151 = vector.shape_cast %146 : vector<8x32xf32> to vector<1x8x32xf32>
    tpu.vector_store %arg9[%148, %c0_50, %c0_51], %151 {strides = array<i32>} : memref<8x8x32xf32, #tpu.memory_space<vmem>>, vector<1x8x32xf32>,
    %c3_i32 = arith.constant 3 : i32
    %152 = arith.index_cast %c3_i32 : i32 to index
    %c0_52 = arith.constant 0 : index
    %c0_53 = arith.constant 0 : index
    %153 = vector.load %arg2[%152, %c0_52, %c0_53] : memref<8x8x96xf32, #tpu.memory_space<vmem>>, vector<1x8x96xf32>
    %154 = vector.shape_cast %153 : vector<1x8x96xf32> to vector<8x96xf32>
    %c0_54 = arith.constant 0 : index
    %c0_55 = arith.constant 0 : index
    %155 = vector.load %arg10[%c0_54, %c0_55] : memref<8x32xf32, #tpu.memory_space<vmem>>, vector<8x32xf32>
    %cst_56 = arith.constant dense<0.000000e+00> : vector<8x96xf32>
    %156 = tpu.matmul %155, %3, %cst_56 {dimension_numbers = #tpu.dot_dimension_numbers<[1], [0], [0], [1], [0, 0, 1, 1], [], []>} : vector<8x32xf32>, vector<32x96xf32>, vector<8x96xf32> -> vector<8x96xf32>
    %157 = vector.extract_strided_slice %154 {offsets = [0, 0], sizes = [8, 64], strides = [1, 1]} : vector<8x96xf32> to vector<8x64xf32>
    %158 = vector.extract_strided_slice %156 {offsets = [0, 0], sizes = [8, 64], strides = [1, 1]} : vector<8x96xf32> to vector<8x64xf32>
    %159 = arith.addf %157, %158 : vector<8x64xf32>
    %160 = vector.broadcast %6 : vector<1x64xf32> to vector<8x64xf32>
    %161 = arith.addf %159, %160 : vector<8x64xf32>
    %162 = vector.extract_strided_slice %161 {offsets = [0, 0], sizes = [8, 32], strides = [1, 1]} : vector<8x64xf32> to vector<8x32xf32>
    %163 = arith.negf %162 : vector<8x32xf32>
    %164 = math.exp %163 : vector<8x32xf32>
    %cst_57 = arith.constant 1.000000e+00 : f32
    %165 = vector.broadcast %cst_57 : f32 to vector<8x32xf32>
    %166 = arith.addf %165, %164 : vector<8x32xf32>
    %167 = arith.divf %165, %166 : vector<8x32xf32>
    %168 = vector.extract_strided_slice %161 {offsets = [0, 32], sizes = [8, 32], strides = [1, 1]} : vector<8x64xf32> to vector<8x32xf32>
    %169 = math.tanh %168 : vector<8x32xf32>
    %170 = arith.mulf %167, %169 : vector<8x32xf32>
    %171 = vector.extract_strided_slice %154 {offsets = [0, 64], sizes = [8, 32], strides = [1, 1]} : vector<8x96xf32> to vector<8x32xf32>
    %172 = math.tanh %171 : vector<8x32xf32>
    %173 = vector.extract_strided_slice %156 {offsets = [0, 64], sizes = [8, 32], strides = [1, 1]} : vector<8x96xf32> to vector<8x32xf32>
    %174 = math.tanh %173 : vector<8x32xf32>
    %175 = tpu.concatenate %172, %174, %170 in 1 : vector<8x32xf32>, vector<8x32xf32>, vector<8x32xf32> -> vector<8x96xf32>
    %cst_58 = arith.constant dense<0.000000e+00> : vector<8x32xf32>
    %176 = tpu.matmul %175, %4, %cst_58 {dimension_numbers = #tpu.dot_dimension_numbers<[1], [0], [0], [1], [0, 0, 1, 1], [], []>} : vector<8x96xf32>, vector<96x32xf32>, vector<8x32xf32> -> vector<8x32xf32>
    %177 = vector.broadcast %7 : vector<1x32xf32> to vector<8x32xf32>
    %178 = arith.addf %176, %177 : vector<8x32xf32>
    %179 = arith.negf %178 : vector<8x32xf32>
    %180 = math.exp %179 : vector<8x32xf32>
    %cst_59 = arith.constant 1.000000e+00 : f32
    %181 = vector.broadcast %cst_59 : f32 to vector<8x32xf32>
    %182 = arith.addf %181, %180 : vector<8x32xf32>
    %183 = arith.divf %181, %182 : vector<8x32xf32>
    %cst_60 = arith.constant dense<0.000000e+00> : vector<8x64xf32>
    %184 = tpu.matmul %183, %5, %cst_60 {dimension_numbers = #tpu.dot_dimension_numbers<[1], [0], [0], [1], [0, 0, 1, 1], [], []>} : vector<8x32xf32>, vector<32x64xf32>, vector<8x64xf32> -> vector<8x64xf32>
    %185 = vector.extract_strided_slice %184 {offsets = [0, 0], sizes = [8, 32], strides = [1, 1]} : vector<8x64xf32> to vector<8x32xf32>
    %186 = vector.extract_strided_slice %184 {offsets = [0, 32], sizes = [8, 32], strides = [1, 1]} : vector<8x64xf32> to vector<8x32xf32>
    %cst_61 = arith.constant 1.000000e+00 : f32
    %187 = vector.broadcast %cst_61 : f32 to vector<8x32xf32>
    %188 = arith.subf %187, %185 : vector<8x32xf32>
    %189 = arith.subf %188, %186 : vector<8x32xf32>
    %190 = arith.mulf %185, %172 : vector<8x32xf32>
    %191 = arith.mulf %186, %174 : vector<8x32xf32>
    %192 = arith.addf %190, %191 : vector<8x32xf32>
    %193 = arith.mulf %189, %170 : vector<8x32xf32>
    %194 = arith.addf %192, %193 : vector<8x32xf32>
    %c0_62 = arith.constant 0 : index
    %c0_63 = arith.constant 0 : index
    %195 = vector.load %arg10[%c0_62, %c0_63] : memref<8x32xf32, #tpu.memory_space<vmem>>, vector<8x32xf32>
    tpu.vector_store %arg10[%c0_62, %c0_63], %194 {strides = array<i32>} : memref<8x32xf32, #tpu.memory_space<vmem>>, vector<8x32xf32>,
    %196 = arith.index_cast %c3_i32 : i32 to index
    %c0_64 = arith.constant 0 : index
    %c0_65 = arith.constant 0 : index
    %197 = vector.load %arg9[%196, %c0_64, %c0_65] : memref<8x8x32xf32, #tpu.memory_space<vmem>>, vector<1x8x32xf32>
    %198 = vector.shape_cast %197 : vector<1x8x32xf32> to vector<8x32xf32>
    %199 = vector.shape_cast %194 : vector<8x32xf32> to vector<1x8x32xf32>
    tpu.vector_store %arg9[%196, %c0_64, %c0_65], %199 {strides = array<i32>} : memref<8x8x32xf32, #tpu.memory_space<vmem>>, vector<1x8x32xf32>,
    %c4_i32 = arith.constant 4 : i32
    %200 = arith.index_cast %c4_i32 : i32 to index
    %c0_66 = arith.constant 0 : index
    %c0_67 = arith.constant 0 : index
    %201 = vector.load %arg2[%200, %c0_66, %c0_67] : memref<8x8x96xf32, #tpu.memory_space<vmem>>, vector<1x8x96xf32>
    %202 = vector.shape_cast %201 : vector<1x8x96xf32> to vector<8x96xf32>
    %c0_68 = arith.constant 0 : index
    %c0_69 = arith.constant 0 : index
    %203 = vector.load %arg10[%c0_68, %c0_69] : memref<8x32xf32, #tpu.memory_space<vmem>>, vector<8x32xf32>
    %cst_70 = arith.constant dense<0.000000e+00> : vector<8x96xf32>
    %204 = tpu.matmul %203, %3, %cst_70 {dimension_numbers = #tpu.dot_dimension_numbers<[1], [0], [0], [1], [0, 0, 1, 1], [], []>} : vector<8x32xf32>, vector<32x96xf32>, vector<8x96xf32> -> vector<8x96xf32>
    %205 = vector.extract_strided_slice %202 {offsets = [0, 0], sizes = [8, 64], strides = [1, 1]} : vector<8x96xf32> to vector<8x64xf32>
    %206 = vector.extract_strided_slice %204 {offsets = [0, 0], sizes = [8, 64], strides = [1, 1]} : vector<8x96xf32> to vector<8x64xf32>
    %207 = arith.addf %205, %206 : vector<8x64xf32>
    %208 = vector.broadcast %6 : vector<1x64xf32> to vector<8x64xf32>
    %209 = arith.addf %207, %208 : vector<8x64xf32>
    %210 = vector.extract_strided_slice %209 {offsets = [0, 0], sizes = [8, 32], strides = [1, 1]} : vector<8x64xf32> to vector<8x32xf32>
    %211 = arith.negf %210 : vector<8x32xf32>
    %212 = math.exp %211 : vector<8x32xf32>
    %cst_71 = arith.constant 1.000000e+00 : f32
    %213 = vector.broadcast %cst_71 : f32 to vector<8x32xf32>
    %214 = arith.addf %213, %212 : vector<8x32xf32>
    %215 = arith.divf %213, %214 : vector<8x32xf32>
    %216 = vector.extract_strided_slice %209 {offsets = [0, 32], sizes = [8, 32], strides = [1, 1]} : vector<8x64xf32> to vector<8x32xf32>
    %217 = math.tanh %216 : vector<8x32xf32>
    %218 = arith.mulf %215, %217 : vector<8x32xf32>
    %219 = vector.extract_strided_slice %202 {offsets = [0, 64], sizes = [8, 32], strides = [1, 1]} : vector<8x96xf32> to vector<8x32xf32>
    %220 = math.tanh %219 : vector<8x32xf32>
    %221 = vector.extract_strided_slice %204 {offsets = [0, 64], sizes = [8, 32], strides = [1, 1]} : vector<8x96xf32> to vector<8x32xf32>
    %222 = math.tanh %221 : vector<8x32xf32>
    %223 = tpu.concatenate %220, %222, %218 in 1 : vector<8x32xf32>, vector<8x32xf32>, vector<8x32xf32> -> vector<8x96xf32>
    %cst_72 = arith.constant dense<0.000000e+00> : vector<8x32xf32>
    %224 = tpu.matmul %223, %4, %cst_72 {dimension_numbers = #tpu.dot_dimension_numbers<[1], [0], [0], [1], [0, 0, 1, 1], [], []>} : vector<8x96xf32>, vector<96x32xf32>, vector<8x32xf32> -> vector<8x32xf32>
    %225 = vector.broadcast %7 : vector<1x32xf32> to vector<8x32xf32>
    %226 = arith.addf %224, %225 : vector<8x32xf32>
    %227 = arith.negf %226 : vector<8x32xf32>
    %228 = math.exp %227 : vector<8x32xf32>
    %cst_73 = arith.constant 1.000000e+00 : f32
    %229 = vector.broadcast %cst_73 : f32 to vector<8x32xf32>
    %230 = arith.addf %229, %228 : vector<8x32xf32>
    %231 = arith.divf %229, %230 : vector<8x32xf32>
    %cst_74 = arith.constant dense<0.000000e+00> : vector<8x64xf32>
    %232 = tpu.matmul %231, %5, %cst_74 {dimension_numbers = #tpu.dot_dimension_numbers<[1], [0], [0], [1], [0, 0, 1, 1], [], []>} : vector<8x32xf32>, vector<32x64xf32>, vector<8x64xf32> -> vector<8x64xf32>
    %233 = vector.extract_strided_slice %232 {offsets = [0, 0], sizes = [8, 32], strides = [1, 1]} : vector<8x64xf32> to vector<8x32xf32>
    %234 = vector.extract_strided_slice %232 {offsets = [0, 32], sizes = [8, 32], strides = [1, 1]} : vector<8x64xf32> to vector<8x32xf32>
    %cst_75 = arith.constant 1.000000e+00 : f32
    %235 = vector.broadcast %cst_75 : f32 to vector<8x32xf32>
    %236 = arith.subf %235, %233 : vector<8x32xf32>
    %237 = arith.subf %236, %234 : vector<8x32xf32>
    %238 = arith.mulf %233, %220 : vector<8x32xf32>
    %239 = arith.mulf %234, %222 : vector<8x32xf32>
    %240 = arith.addf %238, %239 : vector<8x32xf32>
    %241 = arith.mulf %237, %218 : vector<8x32xf32>
    %242 = arith.addf %240, %241 : vector<8x32xf32>
    %c0_76 = arith.constant 0 : index
    %c0_77 = arith.constant 0 : index
    %243 = vector.load %arg10[%c0_76, %c0_77] : memref<8x32xf32, #tpu.memory_space<vmem>>, vector<8x32xf32>
    tpu.vector_store %arg10[%c0_76, %c0_77], %242 {strides = array<i32>} : memref<8x32xf32, #tpu.memory_space<vmem>>, vector<8x32xf32>,
    %244 = arith.index_cast %c4_i32 : i32 to index
    %c0_78 = arith.constant 0 : index
    %c0_79 = arith.constant 0 : index
    %245 = vector.load %arg9[%244, %c0_78, %c0_79] : memref<8x8x32xf32, #tpu.memory_space<vmem>>, vector<1x8x32xf32>
    %246 = vector.shape_cast %245 : vector<1x8x32xf32> to vector<8x32xf32>
    %247 = vector.shape_cast %242 : vector<8x32xf32> to vector<1x8x32xf32>
    tpu.vector_store %arg9[%244, %c0_78, %c0_79], %247 {strides = array<i32>} : memref<8x8x32xf32, #tpu.memory_space<vmem>>, vector<1x8x32xf32>,
    %c5_i32 = arith.constant 5 : i32
    %248 = arith.index_cast %c5_i32 : i32 to index
    %c0_80 = arith.constant 0 : index
    %c0_81 = arith.constant 0 : index
    %249 = vector.load %arg2[%248, %c0_80, %c0_81] : memref<8x8x96xf32, #tpu.memory_space<vmem>>, vector<1x8x96xf32>
    %250 = vector.shape_cast %249 : vector<1x8x96xf32> to vector<8x96xf32>
    %c0_82 = arith.constant 0 : index
    %c0_83 = arith.constant 0 : index
    %251 = vector.load %arg10[%c0_82, %c0_83] : memref<8x32xf32, #tpu.memory_space<vmem>>, vector<8x32xf32>
    %cst_84 = arith.constant dense<0.000000e+00> : vector<8x96xf32>
    %252 = tpu.matmul %251, %3, %cst_84 {dimension_numbers = #tpu.dot_dimension_numbers<[1], [0], [0], [1], [0, 0, 1, 1], [], []>} : vector<8x32xf32>, vector<32x96xf32>, vector<8x96xf32> -> vector<8x96xf32>
    %253 = vector.extract_strided_slice %250 {offsets = [0, 0], sizes = [8, 64], strides = [1, 1]} : vector<8x96xf32> to vector<8x64xf32>
    %254 = vector.extract_strided_slice %252 {offsets = [0, 0], sizes = [8, 64], strides = [1, 1]} : vector<8x96xf32> to vector<8x64xf32>
    %255 = arith.addf %253, %254 : vector<8x64xf32>
    %256 = vector.broadcast %6 : vector<1x64xf32> to vector<8x64xf32>
    %257 = arith.addf %255, %256 : vector<8x64xf32>
    %258 = vector.extract_strided_slice %257 {offsets = [0, 0], sizes = [8, 32], strides = [1, 1]} : vector<8x64xf32> to vector<8x32xf32>
    %259 = arith.negf %258 : vector<8x32xf32>
    %260 = math.exp %259 : vector<8x32xf32>
    %cst_85 = arith.constant 1.000000e+00 : f32
    %261 = vector.broadcast %cst_85 : f32 to vector<8x32xf32>
    %262 = arith.addf %261, %260 : vector<8x32xf32>
    %263 = arith.divf %261, %262 : vector<8x32xf32>
    %264 = vector.extract_strided_slice %257 {offsets = [0, 32], sizes = [8, 32], strides = [1, 1]} : vector<8x64xf32> to vector<8x32xf32>
    %265 = math.tanh %264 : vector<8x32xf32>
    %266 = arith.mulf %263, %265 : vector<8x32xf32>
    %267 = vector.extract_strided_slice %250 {offsets = [0, 64], sizes = [8, 32], strides = [1, 1]} : vector<8x96xf32> to vector<8x32xf32>
    %268 = math.tanh %267 : vector<8x32xf32>
    %269 = vector.extract_strided_slice %252 {offsets = [0, 64], sizes = [8, 32], strides = [1, 1]} : vector<8x96xf32> to vector<8x32xf32>
    %270 = math.tanh %269 : vector<8x32xf32>
    %271 = tpu.concatenate %268, %270, %266 in 1 : vector<8x32xf32>, vector<8x32xf32>, vector<8x32xf32> -> vector<8x96xf32>
    %cst_86 = arith.constant dense<0.000000e+00> : vector<8x32xf32>
    %272 = tpu.matmul %271, %4, %cst_86 {dimension_numbers = #tpu.dot_dimension_numbers<[1], [0], [0], [1], [0, 0, 1, 1], [], []>} : vector<8x96xf32>, vector<96x32xf32>, vector<8x32xf32> -> vector<8x32xf32>
    %273 = vector.broadcast %7 : vector<1x32xf32> to vector<8x32xf32>
    %274 = arith.addf %272, %273 : vector<8x32xf32>
    %275 = arith.negf %274 : vector<8x32xf32>
    %276 = math.exp %275 : vector<8x32xf32>
    %cst_87 = arith.constant 1.000000e+00 : f32
    %277 = vector.broadcast %cst_87 : f32 to vector<8x32xf32>
    %278 = arith.addf %277, %276 : vector<8x32xf32>
    %279 = arith.divf %277, %278 : vector<8x32xf32>
    %cst_88 = arith.constant dense<0.000000e+00> : vector<8x64xf32>
    %280 = tpu.matmul %279, %5, %cst_88 {dimension_numbers = #tpu.dot_dimension_numbers<[1], [0], [0], [1], [0, 0, 1, 1], [], []>} : vector<8x32xf32>, vector<32x64xf32>, vector<8x64xf32> -> vector<8x64xf32>
    %281 = vector.extract_strided_slice %280 {offsets = [0, 0], sizes = [8, 32], strides = [1, 1]} : vector<8x64xf32> to vector<8x32xf32>
    %282 = vector.extract_strided_slice %280 {offsets = [0, 32], sizes = [8, 32], strides = [1, 1]} : vector<8x64xf32> to vector<8x32xf32>
    %cst_89 = arith.constant 1.000000e+00 : f32
    %283 = vector.broadcast %cst_89 : f32 to vector<8x32xf32>
    %284 = arith.subf %283, %281 : vector<8x32xf32>
    %285 = arith.subf %284, %282 : vector<8x32xf32>
    %286 = arith.mulf %281, %268 : vector<8x32xf32>
    %287 = arith.mulf %282, %270 : vector<8x32xf32>
    %288 = arith.addf %286, %287 : vector<8x32xf32>
    %289 = arith.mulf %285, %266 : vector<8x32xf32>
    %290 = arith.addf %288, %289 : vector<8x32xf32>
    %c0_90 = arith.constant 0 : index
    %c0_91 = arith.constant 0 : index
    %291 = vector.load %arg10[%c0_90, %c0_91] : memref<8x32xf32, #tpu.memory_space<vmem>>, vector<8x32xf32>
    tpu.vector_store %arg10[%c0_90, %c0_91], %290 {strides = array<i32>} : memref<8x32xf32, #tpu.memory_space<vmem>>, vector<8x32xf32>,
    %292 = arith.index_cast %c5_i32 : i32 to index
    %c0_92 = arith.constant 0 : index
    %c0_93 = arith.constant 0 : index
    %293 = vector.load %arg9[%292, %c0_92, %c0_93] : memref<8x8x32xf32, #tpu.memory_space<vmem>>, vector<1x8x32xf32>
    %294 = vector.shape_cast %293 : vector<1x8x32xf32> to vector<8x32xf32>
    %295 = vector.shape_cast %290 : vector<8x32xf32> to vector<1x8x32xf32>
    tpu.vector_store %arg9[%292, %c0_92, %c0_93], %295 {strides = array<i32>} : memref<8x8x32xf32, #tpu.memory_space<vmem>>, vector<1x8x32xf32>,
    %c6_i32 = arith.constant 6 : i32
    %296 = arith.index_cast %c6_i32 : i32 to index
    %c0_94 = arith.constant 0 : index
    %c0_95 = arith.constant 0 : index
    %297 = vector.load %arg2[%296, %c0_94, %c0_95] : memref<8x8x96xf32, #tpu.memory_space<vmem>>, vector<1x8x96xf32>
    %298 = vector.shape_cast %297 : vector<1x8x96xf32> to vector<8x96xf32>
    %c0_96 = arith.constant 0 : index
    %c0_97 = arith.constant 0 : index
    %299 = vector.load %arg10[%c0_96, %c0_97] : memref<8x32xf32, #tpu.memory_space<vmem>>, vector<8x32xf32>
    %cst_98 = arith.constant dense<0.000000e+00> : vector<8x96xf32>
    %300 = tpu.matmul %299, %3, %cst_98 {dimension_numbers = #tpu.dot_dimension_numbers<[1], [0], [0], [1], [0, 0, 1, 1], [], []>} : vector<8x32xf32>, vector<32x96xf32>, vector<8x96xf32> -> vector<8x96xf32>
    %301 = vector.extract_strided_slice %298 {offsets = [0, 0], sizes = [8, 64], strides = [1, 1]} : vector<8x96xf32> to vector<8x64xf32>
    %302 = vector.extract_strided_slice %300 {offsets = [0, 0], sizes = [8, 64], strides = [1, 1]} : vector<8x96xf32> to vector<8x64xf32>
    %303 = arith.addf %301, %302 : vector<8x64xf32>
    %304 = vector.broadcast %6 : vector<1x64xf32> to vector<8x64xf32>
    %305 = arith.addf %303, %304 : vector<8x64xf32>
    %306 = vector.extract_strided_slice %305 {offsets = [0, 0], sizes = [8, 32], strides = [1, 1]} : vector<8x64xf32> to vector<8x32xf32>
    %307 = arith.negf %306 : vector<8x32xf32>
    %308 = math.exp %307 : vector<8x32xf32>
    %cst_99 = arith.constant 1.000000e+00 : f32
    %309 = vector.broadcast %cst_99 : f32 to vector<8x32xf32>
    %310 = arith.addf %309, %308 : vector<8x32xf32>
    %311 = arith.divf %309, %310 : vector<8x32xf32>
    %312 = vector.extract_strided_slice %305 {offsets = [0, 32], sizes = [8, 32], strides = [1, 1]} : vector<8x64xf32> to vector<8x32xf32>
    %313 = math.tanh %312 : vector<8x32xf32>
    %314 = arith.mulf %311, %313 : vector<8x32xf32>
    %315 = vector.extract_strided_slice %298 {offsets = [0, 64], sizes = [8, 32], strides = [1, 1]} : vector<8x96xf32> to vector<8x32xf32>
    %316 = math.tanh %315 : vector<8x32xf32>
    %317 = vector.extract_strided_slice %300 {offsets = [0, 64], sizes = [8, 32], strides = [1, 1]} : vector<8x96xf32> to vector<8x32xf32>
    %318 = math.tanh %317 : vector<8x32xf32>
    %319 = tpu.concatenate %316, %318, %314 in 1 : vector<8x32xf32>, vector<8x32xf32>, vector<8x32xf32> -> vector<8x96xf32>
    %cst_100 = arith.constant dense<0.000000e+00> : vector<8x32xf32>
    %320 = tpu.matmul %319, %4, %cst_100 {dimension_numbers = #tpu.dot_dimension_numbers<[1], [0], [0], [1], [0, 0, 1, 1], [], []>} : vector<8x96xf32>, vector<96x32xf32>, vector<8x32xf32> -> vector<8x32xf32>
    %321 = vector.broadcast %7 : vector<1x32xf32> to vector<8x32xf32>
    %322 = arith.addf %320, %321 : vector<8x32xf32>
    %323 = arith.negf %322 : vector<8x32xf32>
    %324 = math.exp %323 : vector<8x32xf32>
    %cst_101 = arith.constant 1.000000e+00 : f32
    %325 = vector.broadcast %cst_101 : f32 to vector<8x32xf32>
    %326 = arith.addf %325, %324 : vector<8x32xf32>
    %327 = arith.divf %325, %326 : vector<8x32xf32>
    %cst_102 = arith.constant dense<0.000000e+00> : vector<8x64xf32>
    %328 = tpu.matmul %327, %5, %cst_102 {dimension_numbers = #tpu.dot_dimension_numbers<[1], [0], [0], [1], [0, 0, 1, 1], [], []>} : vector<8x32xf32>, vector<32x64xf32>, vector<8x64xf32> -> vector<8x64xf32>
    %329 = vector.extract_strided_slice %328 {offsets = [0, 0], sizes = [8, 32], strides = [1, 1]} : vector<8x64xf32> to vector<8x32xf32>
    %330 = vector.extract_strided_slice %328 {offsets = [0, 32], sizes = [8, 32], strides = [1, 1]} : vector<8x64xf32> to vector<8x32xf32>
    %cst_103 = arith.constant 1.000000e+00 : f32
    %331 = vector.broadcast %cst_103 : f32 to vector<8x32xf32>
    %332 = arith.subf %331, %329 : vector<8x32xf32>
    %333 = arith.subf %332, %330 : vector<8x32xf32>
    %334 = arith.mulf %329, %316 : vector<8x32xf32>
    %335 = arith.mulf %330, %318 : vector<8x32xf32>
    %336 = arith.addf %334, %335 : vector<8x32xf32>
    %337 = arith.mulf %333, %314 : vector<8x32xf32>
    %338 = arith.addf %336, %337 : vector<8x32xf32>
    %c0_104 = arith.constant 0 : index
    %c0_105 = arith.constant 0 : index
    %339 = vector.load %arg10[%c0_104, %c0_105] : memref<8x32xf32, #tpu.memory_space<vmem>>, vector<8x32xf32>
    tpu.vector_store %arg10[%c0_104, %c0_105], %338 {strides = array<i32>} : memref<8x32xf32, #tpu.memory_space<vmem>>, vector<8x32xf32>,
    %340 = arith.index_cast %c6_i32 : i32 to index
    %c0_106 = arith.constant 0 : index
    %c0_107 = arith.constant 0 : index
    %341 = vector.load %arg9[%340, %c0_106, %c0_107] : memref<8x8x32xf32, #tpu.memory_space<vmem>>, vector<1x8x32xf32>
    %342 = vector.shape_cast %341 : vector<1x8x32xf32> to vector<8x32xf32>
    %343 = vector.shape_cast %338 : vector<8x32xf32> to vector<1x8x32xf32>
    tpu.vector_store %arg9[%340, %c0_106, %c0_107], %343 {strides = array<i32>} : memref<8x8x32xf32, #tpu.memory_space<vmem>>, vector<1x8x32xf32>,
    %c7_i32 = arith.constant 7 : i32
    %344 = arith.index_cast %c7_i32 : i32 to index
    %c0_108 = arith.constant 0 : index
    %c0_109 = arith.constant 0 : index
    %345 = vector.load %arg2[%344, %c0_108, %c0_109] : memref<8x8x96xf32, #tpu.memory_space<vmem>>, vector<1x8x96xf32>
    %346 = vector.shape_cast %345 : vector<1x8x96xf32> to vector<8x96xf32>
    %c0_110 = arith.constant 0 : index
    %c0_111 = arith.constant 0 : index
    %347 = vector.load %arg10[%c0_110, %c0_111] : memref<8x32xf32, #tpu.memory_space<vmem>>, vector<8x32xf32>
    %cst_112 = arith.constant dense<0.000000e+00> : vector<8x96xf32>
    %348 = tpu.matmul %347, %3, %cst_112 {dimension_numbers = #tpu.dot_dimension_numbers<[1], [0], [0], [1], [0, 0, 1, 1], [], []>} : vector<8x32xf32>, vector<32x96xf32>, vector<8x96xf32> -> vector<8x96xf32>
    %349 = vector.extract_strided_slice %346 {offsets = [0, 0], sizes = [8, 64], strides = [1, 1]} : vector<8x96xf32> to vector<8x64xf32>
    %350 = vector.extract_strided_slice %348 {offsets = [0, 0], sizes = [8, 64], strides = [1, 1]} : vector<8x96xf32> to vector<8x64xf32>
    %351 = arith.addf %349, %350 : vector<8x64xf32>
    %352 = vector.broadcast %6 : vector<1x64xf32> to vector<8x64xf32>
    %353 = arith.addf %351, %352 : vector<8x64xf32>
    %354 = vector.extract_strided_slice %353 {offsets = [0, 0], sizes = [8, 32], strides = [1, 1]} : vector<8x64xf32> to vector<8x32xf32>
    %355 = arith.negf %354 : vector<8x32xf32>
    %356 = math.exp %355 : vector<8x32xf32>
    %cst_113 = arith.constant 1.000000e+00 : f32
    %357 = vector.broadcast %cst_113 : f32 to vector<8x32xf32>
    %358 = arith.addf %357, %356 : vector<8x32xf32>
    %359 = arith.divf %357, %358 : vector<8x32xf32>
    %360 = vector.extract_strided_slice %353 {offsets = [0, 32], sizes = [8, 32], strides = [1, 1]} : vector<8x64xf32> to vector<8x32xf32>
    %361 = math.tanh %360 : vector<8x32xf32>
    %362 = arith.mulf %359, %361 : vector<8x32xf32>
    %363 = vector.extract_strided_slice %346 {offsets = [0, 64], sizes = [8, 32], strides = [1, 1]} : vector<8x96xf32> to vector<8x32xf32>
    %364 = math.tanh %363 : vector<8x32xf32>
    %365 = vector.extract_strided_slice %348 {offsets = [0, 64], sizes = [8, 32], strides = [1, 1]} : vector<8x96xf32> to vector<8x32xf32>
    %366 = math.tanh %365 : vector<8x32xf32>
    %367 = tpu.concatenate %364, %366, %362 in 1 : vector<8x32xf32>, vector<8x32xf32>, vector<8x32xf32> -> vector<8x96xf32>
    %cst_114 = arith.constant dense<0.000000e+00> : vector<8x32xf32>
    %368 = tpu.matmul %367, %4, %cst_114 {dimension_numbers = #tpu.dot_dimension_numbers<[1], [0], [0], [1], [0, 0, 1, 1], [], []>} : vector<8x96xf32>, vector<96x32xf32>, vector<8x32xf32> -> vector<8x32xf32>
    %369 = vector.broadcast %7 : vector<1x32xf32> to vector<8x32xf32>
    %370 = arith.addf %368, %369 : vector<8x32xf32>
    %371 = arith.negf %370 : vector<8x32xf32>
    %372 = math.exp %371 : vector<8x32xf32>
    %cst_115 = arith.constant 1.000000e+00 : f32
    %373 = vector.broadcast %cst_115 : f32 to vector<8x32xf32>
    %374 = arith.addf %373, %372 : vector<8x32xf32>
    %375 = arith.divf %373, %374 : vector<8x32xf32>
    %cst_116 = arith.constant dense<0.000000e+00> : vector<8x64xf32>
    %376 = tpu.matmul %375, %5, %cst_116 {dimension_numbers = #tpu.dot_dimension_numbers<[1], [0], [0], [1], [0, 0, 1, 1], [], []>} : vector<8x32xf32>, vector<32x64xf32>, vector<8x64xf32> -> vector<8x64xf32>
    %377 = vector.extract_strided_slice %376 {offsets = [0, 0], sizes = [8, 32], strides = [1, 1]} : vector<8x64xf32> to vector<8x32xf32>
    %378 = vector.extract_strided_slice %376 {offsets = [0, 32], sizes = [8, 32], strides = [1, 1]} : vector<8x64xf32> to vector<8x32xf32>
    %cst_117 = arith.constant 1.000000e+00 : f32
    %379 = vector.broadcast %cst_117 : f32 to vector<8x32xf32>
    %380 = arith.subf %379, %377 : vector<8x32xf32>
    %381 = arith.subf %380, %378 : vector<8x32xf32>
    %382 = arith.mulf %377, %364 : vector<8x32xf32>
    %383 = arith.mulf %378, %366 : vector<8x32xf32>
    %384 = arith.addf %382, %383 : vector<8x32xf32>
    %385 = arith.mulf %381, %362 : vector<8x32xf32>
    %386 = arith.addf %384, %385 : vector<8x32xf32>
    %c0_118 = arith.constant 0 : index
    %c0_119 = arith.constant 0 : index
    %387 = vector.load %arg10[%c0_118, %c0_119] : memref<8x32xf32, #tpu.memory_space<vmem>>, vector<8x32xf32>
    tpu.vector_store %arg10[%c0_118, %c0_119], %386 {strides = array<i32>} : memref<8x32xf32, #tpu.memory_space<vmem>>, vector<8x32xf32>,
    %388 = arith.index_cast %c7_i32 : i32 to index
    %c0_120 = arith.constant 0 : index
    %c0_121 = arith.constant 0 : index
    %389 = vector.load %arg9[%388, %c0_120, %c0_121] : memref<8x8x32xf32, #tpu.memory_space<vmem>>, vector<1x8x32xf32>
    %390 = vector.shape_cast %389 : vector<1x8x32xf32> to vector<8x32xf32>
    %391 = vector.shape_cast %386 : vector<8x32xf32> to vector<1x8x32xf32>
    tpu.vector_store %arg9[%388, %c0_120, %c0_121], %391 {strides = array<i32>} : memref<8x8x32xf32, #tpu.memory_space<vmem>>, vector<1x8x32xf32>,
    %c8_i32 = arith.constant 8 : i32
    return
  }
  func.func @transform_0(%arg0: i32, %arg1: i32) -> (i32, i32, i32) {
    %c0_i32 = arith.constant 0 : i32
    %c0_i32_0 = arith.constant 0 : i32
    return %arg1, %arg0, %c0_i32 : i32, i32, i32
  }
  func.func @transform_1(%arg0: i32, %arg1: i32) -> (i32, i32) {
    %c0_i32 = arith.constant 0 : i32
    %c0_i32_0 = arith.constant 0 : i32
    return %arg0, %c0_i32 : i32, i32
  }
  func.func @transform_2(%arg0: i32, %arg1: i32) -> (i32, i32) {
    %c0_i32 = arith.constant 0 : i32
    %c0_i32_0 = arith.constant 0 : i32
    %c0_i32_1 = arith.constant 0 : i32
    return %c0_i32, %c0_i32_0 : i32, i32
  }
  func.func @transform_3(%arg0: i32, %arg1: i32) -> (i32, i32) {
    %c0_i32 = arith.constant 0 : i32
    %c0_i32_0 = arith.constant 0 : i32
    %c0_i32_1 = arith.constant 0 : i32
    return %c0_i32, %c0_i32_0 : i32, i32
  }
  func.func @transform_4(%arg0: i32, %arg1: i32) -> (i32, i32) {
    %c0_i32 = arith.constant 0 : i32
    %c0_i32_0 = arith.constant 0 : i32
    %c0_i32_1 = arith.constant 0 : i32
    return %c0_i32, %c0_i32_0 : i32, i32
  }
  func.func @transform_5(%arg0: i32, %arg1: i32) -> (i32, i32) {
    %c0_i32 = arith.constant 0 : i32
    %c0_i32_0 = arith.constant 0 : i32
    %c0_i32_1 = arith.constant 0 : i32
    return %c0_i32, %c0_i32_0 : i32, i32
  }
  func.func @transform_6(%arg0: i32, %arg1: i32) -> (i32, i32) {
    %c0_i32 = arith.constant 0 : i32
    %c0_i32_0 = arith.constant 0 : i32
    %c0_i32_1 = arith.constant 0 : i32
    return %c0_i32, %c0_i32_0 : i32, i32
  }
  func.func @transform_7(%arg0: i32, %arg1: i32) -> (i32, i32, i32) {
    %c0_i32 = arith.constant 0 : i32
    %c0_i32_0 = arith.constant 0 : i32
    return %arg1, %arg0, %c0_i32 : i32, i32, i32
  }
}

</mosaic_0001>

<llo_original>
// kernel: tpu_custom_call.1
$region0: #{tpu_custom_call.1}
  #allocation0 [shape = 'u32[]', space=smem, size = 0x4, offset = 0x4, fixed_abs, tag = 'smem constant byte address 0x4 - core index']
  #allocation1 [shape = 'u32[144,128]{1,0:T(1,128)}', space=vmem, size = 0x12000, scoped, tag = 'internal scratch']
  #allocation2 [shape = 'f32[8,32]{1,0:T(8,128)}', space=vmem, size = 0x1000, scoped, tag = 'scratch operand']
  %s0 = inlined_call_operand.vmem [shape: f32[8,8,96], index: 0, kind: input, shape index: {}]
  %s1 = inlined_call_operand.hbm [shape: f32[8,32], index: 1, kind: input, shape index: {}]
  %s2 = inlined_call_operand.vmem [shape: f32[32,96], index: 2, kind: input, shape index: {}]
  %s3 = inlined_call_operand.vmem [shape: f32[1,64], index: 3, kind: input, shape index: {}]
  %s4 = inlined_call_operand.vmem [shape: f32[96,32], index: 4, kind: input, shape index: {}]
  %s5 = inlined_call_operand.vmem [shape: f32[1,32], index: 5, kind: input, shape index: {}]
  %s6 = inlined_call_operand.vmem [shape: f32[32,64], index: 6, kind: input, shape index: {}]
  %s7 = inlined_call_operand.hbm [shape: f32[8,8,32], index: 7, kind: output, shape index: {}]
  %s8 = sld [smem:[#allocation0]]
  $region46: #{tpu_custom_call.1} parent=0
    _
  %s10 = ssub.s32 1, %s8
  %s11 = scalar_select 0, %s10, %s8
  $region1: #{tpu_custom_call.1} parent=0
    #allocation3 [shape = 'u8[4096]{0}', space=vmem, size = 0x1000, scoped, tag = 'input window, operand 1, single buffered']
    #allocation4 [shape = 's32[1]{0}', space=sflag, size = 0x4, scoped, tag = 'scoped memory for tpu_custom_call.1']
    #allocation5 [shape = 's32[1]{0}', space=sflag, size = 0x4, scoped, tag = 'scoped memory for tpu_custom_call.1']
    #allocation6 [shape = 'u8[32768]{0}', space=vmem, size = 0x8000, scoped, tag = 'output window, operand 0, single buffered']
    %12 = vsyncpa [#allocation4], 0
    %13 = vsyncpa [#allocation5], 0
    // Predicated region
    $region2: #{tpu_custom_call.1} parent=1 // pred_check
      _
    $region3: #{tpu_custom_call.1} parent=1 // pred_check_branch
      %15 = sbr.rel (0) target = $region5
    $region4: #{tpu_custom_call.1} parent=1 // pred_region
      _
    $region5: #{tpu_custom_call.1} parent=1 // pred_fallthru
      _
    // Predicated region
    $region6: #{tpu_custom_call.1} parent=1 // pred_check
      _
    $region7: #{tpu_custom_call.1} parent=1 // pred_check_branch
      %17 = sbr.rel (0) target = $region9
    $region8: #{tpu_custom_call.1} parent=1 // pred_region
      %s19 = ssub.s32 128, 128
      %20 = vsyncadd [#allocation4], %s19
      %s22 = sshll.u32 [#allocation3], 4
      %s23 = int_to_ptr.vmem [resolvable:$true] %s22
      %25 = dma.hbm_to_vmem [thread:$0]  %s1, 128, %s23, [#allocation4]
    $region9: #{tpu_custom_call.1} parent=1 // pred_fallthru
      _
    // Predicated region
    $region10: #{tpu_custom_call.1} parent=1 // pred_check
      _
    $region11: #{tpu_custom_call.1} parent=1 // pred_check_branch
      %27 = sbr.rel (0) target = $region13
    $region12: #{tpu_custom_call.1} parent=1 // pred_region
      _
    $region13: #{tpu_custom_call.1} parent=1 // pred_fallthru
      _
    // Predicated region
    $region14: #{tpu_custom_call.1} parent=1 // pred_check
      _
    $region15: #{tpu_custom_call.1} parent=1 // pred_check_branch
      %29 = sbr.rel (0) target = $region17
    $region16: #{tpu_custom_call.1} parent=1 // pred_region
      _
    $region17: #{tpu_custom_call.1} parent=1 // pred_fallthru
      _
    // Predicated region
    $region18: #{tpu_custom_call.1} parent=1 // pred_check
      _
    $region19: #{tpu_custom_call.1} parent=1 // pred_check_branch
      %31 = sbr.rel (0) target = $region21
    $region20: #{tpu_custom_call.1} parent=1 // pred_region
      _
    $region21: #{tpu_custom_call.1} parent=1 // pred_fallthru
      _
    // Predicated region
    $region22: #{tpu_custom_call.1} parent=1 // pred_check
      _
    $region23: #{tpu_custom_call.1} parent=1 // pred_check_branch
      %33 = sbr.rel (0) target = $region25
    $region24: #{tpu_custom_call.1} parent=1 // pred_region
      _
    $region25: #{tpu_custom_call.1} parent=1 // pred_fallthru
      _
    // Predicated region
    $region26: #{tpu_custom_call.1} parent=1 // pred_check
      _
    $region27: #{tpu_custom_call.1} parent=1 // pred_check_branch
      %35 = sbr.rel (0) target = $region29
    $region28: #{tpu_custom_call.1} parent=1 // pred_region
      _
    $region29: #{tpu_custom_call.1} parent=1 // pred_fallthru
      _
    // Predicated region
    $region30: #{tpu_custom_call.1} parent=1 // pred_check
      _
    $region31: #{tpu_custom_call.1} parent=1 // pred_check_branch
      %37 = sbr.rel (0) target = $region33
    $region32: #{tpu_custom_call.1} parent=1 // pred_region
      %38 = dma.done [#allocation4], 128
    $region33: #{tpu_custom_call.1} parent=1 // pred_fallthru
      _
    %p39 = scmp.eq.s32.totalorder 0, 0
    // Predicated region
    $region34: #{tpu_custom_call.1} parent=1 // pred_check
      %p40 = pneg %p39
    $region35: #{tpu_custom_call.1} parent=1 // pred_check_branch
      %42 = sbr.rel (%p40) target = $region37
    $region36: #{tpu_custom_call.1} parent=1 // pred_region
      %v43 = vld [vmem:[#allocation3] sm:$0xff]
      %vm44 = vcmask 261120
      %45 = vst.msk [vmem:[#allocation2] sm:$0xff] %vm44, %v43
    $region37: #{tpu_custom_call.1} parent=1 // pred_fallthru
      _
    %v46 = vld [vmem:[%s2] sm:$0xff]
    %v47 = vld [vmem:[%s2 + $0x8] sm:$0xff]
    %v48 = vld [vmem:[%s2 + $0x10] sm:$0xff]
    %v49 = vld [vmem:[%s2 + $0x18] sm:$0xff]
    %v50 = vld [vmem:[%s4] sm:$0xff]
    %v51 = vld [vmem:[%s4 + $0x8] sm:$0xff]
    %v52 = vld [vmem:[%s4 + $0x10] sm:$0xff]
    %v53 = vld [vmem:[%s4 + $0x18] sm:$0xff]
    %v54 = vld [vmem:[%s4 + $0x20] sm:$0xff]
    %v55 = vld [vmem:[%s4 + $0x28] sm:$0xff]
    %v56 = vld [vmem:[%s4 + $0x30] sm:$0xff]
    %v57 = vld [vmem:[%s4 + $0x38] sm:$0xff]
    %v58 = vld [vmem:[%s4 + $0x40] sm:$0xff]
    %v59 = vld [vmem:[%s4 + $0x48] sm:$0xff]
    %v60 = vld [vmem:[%s4 + $0x50] sm:$0xff]
    %v61 = vld [vmem:[%s4 + $0x58] sm:$0xff]
    %v62 = vld [vmem:[%s6] sm:$0xff]
    %v63 = vld [vmem:[%s6 + $0x8] sm:$0xff]
    %v64 = vld [vmem:[%s6 + $0x10] sm:$0xff]
    %v65 = vld [vmem:[%s6 + $0x18] sm:$0xff]
    %v66 = vld [vmem:[%s3] sm:$0x1]
    %v67 = vld [vmem:[%s5] sm:$0x1]
    %v68 = vld [vmem:[%s0] sm:$0xff]
    %v69 = vld [vmem:[#allocation2] sm:$0xff]
    %vm70 = vcmask 261120
    %v72 = vsel %vm70, %v69, 0
    %74 = vmatprep.subr.mxu0 0.0
    %75 = vmatpush1.msra.mxu0 %v46
    %76 = vmatprep.subr.mxu0 0.0
    %77 = vmatpush1.msra.mxu0 %v47
    %78 = vmatprep.subr.mxu0 0.0
    %79 = vmatpush1.msra.mxu0 %v48
    %80 = vmatprep.subr.mxu0 0.0
    %81 = vmatpush1.msra.mxu0 %v49
    %82 = vmatprep.subr.mxu0 0.0
    %83 = vmatpush1.msra.mxu0 0.0
    %84 = vmatprep.subr.mxu0 0.0
    %85 = vmatpush1.msra.mxu0 0.0
    %86 = vmatprep.subr.mxu0 0.0
    %87 = vmatpush1.msra.mxu0 0.0
    %88 = vmatprep.subr.mxu0 0.0
    %89 = vmatpush1.msra.mxu0 0.0
    %90 = vmatprep.subr.mxu0 0.0
    %91 = vmatpush1.msra.mxu0 0.0
    %92 = vmatprep.subr.mxu0 0.0
    %93 = vmatpush1.msra.mxu0 0.0
    %94 = vmatprep.subr.mxu0 0.0
    %95 = vmatpush1.msra.mxu0 0.0
    %96 = vmatprep.subr.mxu0 0.0
    %97 = vmatpush1.msra.mxu0 0.0
    %98 = vmatprep.subr.mxu0 0.0
    %99 = vmatpush1.msra.mxu0 0.0
    %100 = vmatprep.subr.mxu0 0.0
    %101 = vmatpush1.msra.mxu0 0.0
    %102 = vmatprep.subr.mxu0 0.0
    %103 = vmatpush1.msra.mxu0 0.0
    %104 = vmatprep.subr.mxu0 0.0
    %105 = vmatpush1.msra.mxu0 0.0
    %106 = vmatprep.subr.mxu0 0.0
    %107 = vmatpush1.msra.mxu0 0.0
    %108 = vmatprep.subr.mxu0 0.0
    %109 = vmatpush1.msra.mxu0 0.0
    %110 = vmatprep.subr.mxu0 0.0
    %111 = vmatpush1.msra.mxu0 0.0
    %112 = vmatprep.subr.mxu0 0.0
    %113 = vmatpush1.msra.mxu0 0.0
    %114 = vmatprep.subr.mxu0 0.0
    %115 = vmatpush1.msra.mxu0 0.0
    %116 = vmatprep.subr.mxu0 0.0
    %117 = vmatpush1.msra.mxu0 0.0
    %118 = vmatprep.subr.mxu0 0.0
    %119 = vmatpush1.msra.mxu0 0.0
    %120 = vmatprep.subr.mxu0 0.0
    %121 = vmatpush1.msra.mxu0 0.0
    %122 = vmatprep.subr.mxu0 0.0
    %123 = vmatpush1.msra.mxu0 0.0
    %124 = vmatprep.subr.mxu0 0.0
    %125 = vmatpush1.msra.mxu0 0.0
    %126 = vmatprep.subr.mxu0 0.0
    %127 = vmatpush1.msra.mxu0 0.0
    %128 = vmatprep.subr.mxu0 0.0
    %129 = vmatpush1.msra.mxu0 0.0
    %130 = vmatprep.subr.mxu0 0.0
    %131 = vmatpush1.msra.mxu0 0.0
    %132 = vmatprep.subr.mxu0 0.0
    %133 = vmatpush1.msra.mxu0 0.0
    %134 = vmatprep.subr.mxu0 0.0
    %135 = vmatpush1.msra.mxu0 0.0
    %136 = vmatprep.subr.mxu0 0.0
    %137 = vmatpush1.msra.mxu0 0.0
    %138 = vmatprep.mubr.f32.mxu0 0.0
    %139 = vmatmul.mubr.f32.gmra.mrb[0].mxu0 %v72
    %v140 = vpop.f32.mrb[0].mxu0
    %v141 = vadd.f32 0.0, %v140
    %v142 = vpop.f32.mrb[0].mxu0
    %143 = vdwg.mxu0
    %v144 = vadd.f32 %v68, %v141
    %v146 = vlaneseq
    %v147 = vshrl.u32 %v146, 7
    %v148 = vsub.s32 0, %v147
    %v149 = vrot.slane %v66, %v148
    %v151 = vadd.f32 %v144, %v149
    %v152 = vxor.u32 %v151, 2147483648
    %v153 = vmul.f32 %v152, 1.442695
    %v154 = vpow.pop %v153
    %v155 = vadd.f32 %v154, 1.0
    %v156 = vrcp.pop %v155
    %v157 = vmul.f32 1.0, %v156
    %v158 = vtanh.pop %v151
    %160 = vrot.lane.b32.xlu0 %v158, 96
    %v161 = vpop.permute.xlu0 %160
    %v163 = vmul.f32 %v157, %v161
    %v164 = vtanh.pop %v68
    %v165 = vtanh.pop %v141
    %167 = vrot.lane.b32.xlu0 %v164, 64
    %v168 = vpop.permute.xlu0 %167
    %171 = vrot.lane.b32.xlu0 %v165, 96
    %v172 = vpop.permute.xlu0 %171
    %175 = vrot.lane.b32.xlu0 %v163, 64
    %v176 = vpop.permute.xlu0 %175
    %v178 = vsel %vm70, %v168, %v172
    %vm179 = vcmask 523264
    %v180 = vsel %vm179, %v178, %v176
    %v182 = vlaneseq
    %v183 = vshrl.u32 %v182, 7
    %v184 = vsub.s32 0, %v183
    %v185 = vrot.slane %v67, %v184
    %vm187 = vcmask 785408
    %v189 = vsel %vm187, %v180, 0
    %191 = vmatprep.subr.mxu0 0.0
    %192 = vmatpush1.msra.mxu0 %v50
    %193 = vmatprep.subr.mxu0 0.0
    %194 = vmatpush1.msra.mxu0 %v51
    %195 = vmatprep.subr.mxu0 0.0
    %196 = vmatpush1.msra.mxu0 %v52
    %197 = vmatprep.subr.mxu0 0.0
    %198 = vmatpush1.msra.mxu0 %v53
    %199 = vmatprep.subr.mxu0 0.0
    %200 = vmatpush1.msra.mxu0 %v54
    %201 = vmatprep.subr.mxu0 0.0
    %202 = vmatpush1.msra.mxu0 %v55
    %203 = vmatprep.subr.mxu0 0.0
    %204 = vmatpush1.msra.mxu0 %v56
    %205 = vmatprep.subr.mxu0 0.0
    %206 = vmatpush1.msra.mxu0 %v57
    %207 = vmatprep.subr.mxu0 0.0
    %208 = vmatpush1.msra.mxu0 %v58
    %209 = vmatprep.subr.mxu0 0.0
    %210 = vmatpush1.msra.mxu0 %v59
    %211 = vmatprep.subr.mxu0 0.0
    %212 = vmatpush1.msra.mxu0 %v60
    %213 = vmatprep.subr.mxu0 0.0
    %214 = vmatpush1.msra.mxu0 %v61
    %215 = vmatprep.subr.mxu0 0.0
    %216 = vmatpush1.msra.mxu0 0.0
    %217 = vmatprep.subr.mxu0 0.0
    %218 = vmatpush1.msra.mxu0 0.0
    %219 = vmatprep.subr.mxu0 0.0
    %220 = vmatpush1.msra.mxu0 0.0
    %221 = vmatprep.subr.mxu0 0.0
    %222 = vmatpush1.msra.mxu0 0.0
    %223 = vmatprep.subr.mxu0 0.0
    %224 = vmatpush1.msra.mxu0 0.0
    %225 = vmatprep.subr.mxu0 0.0
    %226 = vmatpush1.msra.mxu0 0.0
    %227 = vmatprep.subr.mxu0 0.0
    %228 = vmatpush1.msra.mxu0 0.0
    %229 = vmatprep.subr.mxu0 0.0
    %230 = vmatpush1.msra.mxu0 0.0
    %231 = vmatprep.subr.mxu0 0.0
    %232 = vmatpush1.msra.mxu0 0.0
    %233 = vmatprep.subr.mxu0 0.0
    %234 = vmatpush1.msra.mxu0 0.0
    %235 = vmatprep.subr.mxu0 0.0
    %236 = vmatpush1.msra.mxu0 0.0
    %237 = vmatprep.subr.mxu0 0.0
    %238 = vmatpush1.msra.mxu0 0.0
    %239 = vmatprep.subr.mxu0 0.0
    %240 = vmatpush1.msra.mxu0 0.0
    %241 = vmatprep.subr.mxu0 0.0
    %242 = vmatpush1.msra.mxu0 0.0
    %243 = vmatprep.subr.mxu0 0.0
    %244 = vmatpush1.msra.mxu0 0.0
    %245 = vmatprep.subr.mxu0 0.0
    %246 = vmatpush1.msra.mxu0 0.0
    %247 = vmatprep.subr.mxu0 0.0
    %248 = vmatpush1.msra.mxu0 0.0
    %249 = vmatprep.subr.mxu0 0.0
    %250 = vmatpush1.msra.mxu0 0.0
    %251 = vmatprep.subr.mxu0 0.0
    %252 = vmatpush1.msra.mxu0 0.0
    %253 = vmatprep.subr.mxu0 0.0
    %254 = vmatpush1.msra.mxu0 0.0
    %255 = vmatprep.mubr.f32.mxu0 0.0
    %256 = vmatmul.mubr.f32.gmra.mrb[0].mxu0 %v189
    %v257 = vpop.f32.mrb[0].mxu0
    %v258 = vadd.f32 %v185, %v257
    %v259 = vpop.f32.mrb[0].mxu0
    %260 = vdwg.mxu0
    %v261 = vxor.u32 %v258, 2147483648
    %v262 = vmul.f32 %v261, 1.442695
    %v263 = vpow.pop %v262
    %v264 = vadd.f32 %v263, 1.0
    %v265 = vrcp.pop %v264
    %v266 = vmul.f32 1.0, %v265
    %v268 = vsel %vm70, %v266, 0
    %270 = vmatprep.subr.mxu0 0.0
    %271 = vmatpush1.msra.mxu0 %v62
    %272 = vmatprep.subr.mxu0 0.0
    %273 = vmatpush1.msra.mxu0 %v63
    %274 = vmatprep.subr.mxu0 0.0
    %275 = vmatpush1.msra.mxu0 %v64
    %276 = vmatprep.subr.mxu0 0.0
    %277 = vmatpush1.msra.mxu0 %v65
    %278 = vmatprep.subr.mxu0 0.0
    %279 = vmatpush1.msra.mxu0 0.0
    %280 = vmatprep.subr.mxu0 0.0
    %281 = vmatpush1.msra.mxu0 0.0
    %282 = vmatprep.subr.mxu0 0.0
    %283 = vmatpush1.msra.mxu0 0.0
    %284 = vmatprep.subr.mxu0 0.0
    %285 = vmatpush1.msra.mxu0 0.0
    %286 = vmatprep.subr.mxu0 0.0
    %287 = vmatpush1.msra.mxu0 0.0
    %288 = vmatprep.subr.mxu0 0.0
    %289 = vmatpush1.msra.mxu0 0.0
    %290 = vmatprep.subr.mxu0 0.0
    %291 = vmatpush1.msra.mxu0 0.0
    %292 = vmatprep.subr.mxu0 0.0
    %293 = vmatpush1.msra.mxu0 0.0
    %294 = vmatprep.subr.mxu0 0.0
    %295 = vmatpush1.msra.mxu0 0.0
    %296 = vmatprep.subr.mxu0 0.0
    %297 = vmatpush1.msra.mxu0 0.0
    %298 = vmatprep.subr.mxu0 0.0
    %299 = vmatpush1.msra.mxu0 0.0
    %300 = vmatprep.subr.mxu0 0.0
    %301 = vmatpush1.msra.mxu0 0.0
    %302 = vmatprep.subr.mxu0 0.0
    %303 = vmatpush1.msra.mxu0 0.0
    %304 = vmatprep.subr.mxu0 0.0
    %305 = vmatpush1.msra.mxu0 0.0
    %306 = vmatprep.subr.mxu0 0.0
    %307 = vmatpush1.msra.mxu0 0.0
    %308 = vmatprep.subr.mxu0 0.0
    %309 = vmatpush1.msra.mxu0 0.0
    %310 = vmatprep.subr.mxu0 0.0
    %311 = vmatpush1.msra.mxu0 0.0
    %312 = vmatprep.subr.mxu0 0.0
    %313 = vmatpush1.msra.mxu0 0.0
    %314 = vmatprep.subr.mxu0 0.0
    %315 = vmatpush1.msra.mxu0 0.0
    %316 = vmatprep.subr.mxu0 0.0
    %317 = vmatpush1.msra.mxu0 0.0
    %318 = vmatprep.subr.mxu0 0.0
    %319 = vmatpush1.msra.mxu0 0.0
    %320 = vmatprep.subr.mxu0 0.0
    %321 = vmatpush1.msra.mxu0 0.0
    %322 = vmatprep.subr.mxu0 0.0
    %323 = vmatpush1.msra.mxu0 0.0
    %324 = vmatprep.subr.mxu0 0.0
    %325 = vmatpush1.msra.mxu0 0.0
    %326 = vmatprep.subr.mxu0 0.0
    %327 = vmatpush1.msra.mxu0 0.0
    %328 = vmatprep.subr.mxu0 0.0
    %329 = vmatpush1.msra.mxu0 0.0
    %330 = vmatprep.subr.mxu0 0.0
    %331 = vmatpush1.msra.mxu0 0.0
    %332 = vmatprep.subr.mxu0 0.0
    %333 = vmatpush1.msra.mxu0 0.0
    %334 = vmatprep.mubr.f32.mxu0 0.0
    %335 = vmatmul.mubr.f32.gmra.mrb[0].mxu0 %v268
    %v336 = vpop.f32.mrb[0].mxu0
    %v337 = vadd.f32 0.0, %v336
    %v338 = vpop.f32.mrb[0].mxu0
    %339 = vdwg.mxu0
    %v340 = vsub.f32 1.0, %v337
    %342 = vrot.lane.b32.xlu0 %v337, 96
    %v343 = vpop.permute.xlu0 %342
    %v345 = vsub.f32 %v340, %v343
    %v346 = vmul.f32 %v337, %v168
    %v347 = vmul.f32 %v337, %v172
    %349 = vrot.lane.b32.xlu0 %v347, 96
    %v350 = vpop.permute.xlu0 %349
    %v352 = vadd.f32 %v346, %v350
    %v353 = vmul.f32 %v345, %v163
    %v354 = vadd.f32 %v352, %v353
    %355 = vst.msk [vmem:[#allocation2] sm:$0xff] %vm70, %v354
    %356 = vst.msk [vmem:[#allocation6] sm:$0xff] %vm70, %v354
    %s357 = scalar_lea.vmem %s0, 8
    %v358 = vld [vmem:[%s357] sm:$0xff]
    %v359 = vld [vmem:[#allocation2] sm:$0xff]
    %v361 = vsel %vm70, %v359, 0
    %363 = vmatprep.subr.mxu0 0.0
    %364 = vmatpush1.msra.mxu0 %v46
    %365 = vmatprep.subr.mxu0 0.0
    %366 = vmatpush1.msra.mxu0 %v47
    %367 = vmatprep.subr.mxu0 0.0
    %368 = vmatpush1.msra.mxu0 %v48
    %369 = vmatprep.subr.mxu0 0.0
    %370 = vmatpush1.msra.mxu0 %v49
    %371 = vmatprep.subr.mxu0 0.0
    %372 = vmatpush1.msra.mxu0 0.0
    %373 = vmatprep.subr.mxu0 0.0
    %374 = vmatpush1.msra.mxu0 0.0
    %375 = vmatprep.subr.mxu0 0.0
    %376 = vmatpush1.msra.mxu0 0.0
    %377 = vmatprep.subr.mxu0 0.0
    %378 = vmatpush1.msra.mxu0 0.0
    %379 = vmatprep.subr.mxu0 0.0
    %380 = vmatpush1.msra.mxu0 0.0
    %381 = vmatprep.subr.mxu0 0.0
    %382 = vmatpush1.msra.mxu0 0.0
    %383 = vmatprep.subr.mxu0 0.0
    %384 = vmatpush1.msra.mxu0 0.0
    %385 = vmatprep.subr.mxu0 0.0
    %386 = vmatpush1.msra.mxu0 0.0
    %387 = vmatprep.subr.mxu0 0.0
    %388 = vmatpush1.msra.mxu0 0.0
    %389 = vmatprep.subr.mxu0 0.0
    %390 = vmatpush1.msra.mxu0 0.0
    %391 = vmatprep.subr.mxu0 0.0
    %392 = vmatpush1.msra.mxu0 0.0
    %393 = vmatprep.subr.mxu0 0.0
    %394 = vmatpush1.msra.mxu0 0.0
    %395 = vmatprep.subr.mxu0 0.0
    %396 = vmatpush1.msra.mxu0 0.0
    %397 = vmatprep.subr.mxu0 0.0
    %398 = vmatpush1.msra.mxu0 0.0
    %399 = vmatprep.subr.mxu0 0.0
    %400 = vmatpush1.msra.mxu0 0.0
    %401 = vmatprep.subr.mxu0 0.0
    %402 = vmatpush1.msra.mxu0 0.0
    %403 = vmatprep.subr.mxu0 0.0
    %404 = vmatpush1.msra.mxu0 0.0
    %405 = vmatprep.subr.mxu0 0.0
    %406 = vmatpush1.msra.mxu0 0.0
    %407 = vmatprep.subr.mxu0 0.0
    %408 = vmatpush1.msra.mxu0 0.0
    %409 = vmatprep.subr.mxu0 0.0
    %410 = vmatpush1.msra.mxu0 0.0
    %411 = vmatprep.subr.mxu0 0.0
    %412 = vmatpush1.msra.mxu0 0.0
    %413 = vmatprep.subr.mxu0 0.0
    %414 = vmatpush1.msra.mxu0 0.0
    %415 = vmatprep.subr.mxu0 0.0
    %416 = vmatpush1.msra.mxu0 0.0
    %417 = vmatprep.subr.mxu0 0.0
    %418 = vmatpush1.msra.mxu0 0.0
    %419 = vmatprep.subr.mxu0 0.0
    %420 = vmatpush1.msra.mxu0 0.0
    %421 = vmatprep.subr.mxu0 0.0
    %422 = vmatpush1.msra.mxu0 0.0
    %423 = vmatprep.subr.mxu0 0.0
    %424 = vmatpush1.msra.mxu0 0.0
    %425 = vmatprep.subr.mxu0 0.0
    %426 = vmatpush1.msra.mxu0 0.0
    %427 = vmatprep.mubr.f32.mxu0 0.0
    %428 = vmatmul.mubr.f32.gmra.mrb[0].mxu0 %v361
    %v429 = vpop.f32.mrb[0].mxu0
    %v430 = vadd.f32 0.0, %v429
    %v431 = vpop.f32.mrb[0].mxu0
    %432 = vdwg.mxu0
    %v433 = vadd.f32 %v358, %v430
    %v434 = vadd.f32 %v433, %v149
    %v435 = vxor.u32 %v434, 2147483648
    %v436 = vmul.f32 %v435, 1.442695
    %v437 = vpow.pop %v436
    %v438 = vadd.f32 %v437, 1.0
    %v439 = vrcp.pop %v438
    %v440 = vmul.f32 1.0, %v439
    %v441 = vtanh.pop %v434
    %443 = vrot.lane.b32.xlu0 %v441, 96
    %v444 = vpop.permute.xlu0 %443
    %v446 = vmul.f32 %v440, %v444
    %v447 = vtanh.pop %v358
    %v448 = vtanh.pop %v430
    %450 = vrot.lane.b32.xlu0 %v447, 64
    %v451 = vpop.permute.xlu0 %450
    %454 = vrot.lane.b32.xlu0 %v448, 96
    %v455 = vpop.permute.xlu0 %454
    %458 = vrot.lane.b32.xlu0 %v446, 64
    %v459 = vpop.permute.xlu0 %458
    %v461 = vsel %vm70, %v451, %v455
    %v462 = vsel %vm179, %v461, %v459
    %v464 = vsel %vm187, %v462, 0
    %466 = vmatprep.subr.mxu0 0.0
    %467 = vmatpush1.msra.mxu0 %v50
    %468 = vmatprep.subr.mxu0 0.0
    %469 = vmatpush1.msra.mxu0 %v51
    %470 = vmatprep.subr.mxu0 0.0
    %471 = vmatpush1.msra.mxu0 %v52
    %472 = vmatprep.subr.mxu0 0.0
    %473 = vmatpush1.msra.mxu0 %v53
    %474 = vmatprep.subr.mxu0 0.0
    %475 = vmatpush1.msra.mxu0 %v54
    %476 = vmatprep.subr.mxu0 0.0
    %477 = vmatpush1.msra.mxu0 %v55
    %478 = vmatprep.subr.mxu0 0.0
    %479 = vmatpush1.msra.mxu0 %v56
    %480 = vmatprep.subr.mxu0 0.0
    %481 = vmatpush1.msra.mxu0 %v57
    %482 = vmatprep.subr.mxu0 0.0
    %483 = vmatpush1.msra.mxu0 %v58
    %484 = vmatprep.subr.mxu0 0.0
    %485 = vmatpush1.msra.mxu0 %v59
    %486 = vmatprep.subr.mxu0 0.0
    %487 = vmatpush1.msra.mxu0 %v60
    %488 = vmatprep.subr.mxu0 0.0
    %489 = vmatpush1.msra.mxu0 %v61
    %490 = vmatprep.subr.mxu0 0.0
    %491 = vmatpush1.msra.mxu0 0.0
    %492 = vmatprep.subr.mxu0 0.0
    %493 = vmatpush1.msra.mxu0 0.0
    %494 = vmatprep.subr.mxu0 0.0
    %495 = vmatpush1.msra.mxu0 0.0
    %496 = vmatprep.subr.mxu0 0.0
    %497 = vmatpush1.msra.mxu0 0.0
    %498 = vmatprep.subr.mxu0 0.0
    %499 = vmatpush1.msra.mxu0 0.0
    %500 = vmatprep.subr.mxu0 0.0
    %501 = vmatpush1.msra.mxu0 0.0
    %502 = vmatprep.subr.mxu0 0.0
    %503 = vmatpush1.msra.mxu0 0.0
    %504 = vmatprep.subr.mxu0 0.0
    %505 = vmatpush1.msra.mxu0 0.0
    %506 = vmatprep.subr.mxu0 0.0
    %507 = vmatpush1.msra.mxu0 0.0
    %508 = vmatprep.subr.mxu0 0.0
    %509 = vmatpush1.msra.mxu0 0.0
    %510 = vmatprep.subr.mxu0 0.0
    %511 = vmatpush1.msra.mxu0 0.0
    %512 = vmatprep.subr.mxu0 0.0
    %513 = vmatpush1.msra.mxu0 0.0
    %514 = vmatprep.subr.mxu0 0.0
    %515 = vmatpush1.msra.mxu0 0.0
    %516 = vmatprep.subr.mxu0 0.0
    %517 = vmatpush1.msra.mxu0 0.0
    %518 = vmatprep.subr.mxu0 0.0
    %519 = vmatpush1.msra.mxu0 0.0
    %520 = vmatprep.subr.mxu0 0.0
    %521 = vmatpush1.msra.mxu0 0.0
    %522 = vmatprep.subr.mxu0 0.0
    %523 = vmatpush1.msra.mxu0 0.0
    %524 = vmatprep.subr.mxu0 0.0
    %525 = vmatpush1.msra.mxu0 0.0
    %526 = vmatprep.subr.mxu0 0.0
    %527 = vmatpush1.msra.mxu0 0.0
    %528 = vmatprep.subr.mxu0 0.0
    %529 = vmatpush1.msra.mxu0 0.0
    %530 = vmatprep.mubr.f32.mxu0 0.0
    %531 = vmatmul.mubr.f32.gmra.mrb[0].mxu0 %v464
    %v532 = vpop.f32.mrb[0].mxu0
    %v533 = vadd.f32 %v185, %v532
    %v534 = vpop.f32.mrb[0].mxu0
    %535 = vdwg.mxu0
    %v536 = vxor.u32 %v533, 2147483648
    %v537 = vmul.f32 %v536, 1.442695
    %v538 = vpow.pop %v537
    %v539 = vadd.f32 %v538, 1.0
    %v540 = vrcp.pop %v539
    %v541 = vmul.f32 1.0, %v540
    %v543 = vsel %vm70, %v541, 0
    %545 = vmatprep.subr.mxu0 0.0
    %546 = vmatpush1.msra.mxu0 %v62
    %547 = vmatprep.subr.mxu0 0.0
    %548 = vmatpush1.msra.mxu0 %v63
    %549 = vmatprep.subr.mxu0 0.0
    %550 = vmatpush1.msra.mxu0 %v64
    %551 = vmatprep.subr.mxu0 0.0
    %552 = vmatpush1.msra.mxu0 %v65
    %553 = vmatprep.subr.mxu0 0.0
    %554 = vmatpush1.msra.mxu0 0.0
    %555 = vmatprep.subr.mxu0 0.0
    %556 = vmatpush1.msra.mxu0 0.0
    %557 = vmatprep.subr.mxu0 0.0
    %558 = vmatpush1.msra.mxu0 0.0
    %559 = vmatprep.subr.mxu0 0.0
    %560 = vmatpush1.msra.mxu0 0.0
    %561 = vmatprep.subr.mxu0 0.0
    %562 = vmatpush1.msra.mxu0 0.0
    %563 = vmatprep.subr.mxu0 0.0
    %564 = vmatpush1.msra.mxu0 0.0
    %565 = vmatprep.subr.mxu0 0.0
    %566 = vmatpush1.msra.mxu0 0.0
    %567 = vmatprep.subr.mxu0 0.0
    %568 = vmatpush1.msra.mxu0 0.0
    %569 = vmatprep.subr.mxu0 0.0
    %570 = vmatpush1.msra.mxu0 0.0
    %571 = vmatprep.subr.mxu0 0.0
    %572 = vmatpush1.msra.mxu0 0.0
    %573 = vmatprep.subr.mxu0 0.0
    %574 = vmatpush1.msra.mxu0 0.0
    %575 = vmatprep.subr.mxu0 0.0
    %576 = vmatpush1.msra.mxu0 0.0
    %577 = vmatprep.subr.mxu0 0.0
    %578 = vmatpush1.msra.mxu0 0.0
    %579 = vmatprep.subr.mxu0 0.0
    %580 = vmatpush1.msra.mxu0 0.0
    %581 = vmatprep.subr.mxu0 0.0
    %582 = vmatpush1.msra.mxu0 0.0
    %583 = vmatprep.subr.mxu0 0.0
    %584 = vmatpush1.msra.mxu0 0.0
    %585 = vmatprep.subr.mxu0 0.0
    %586 = vmatpush1.msra.mxu0 0.0
    %587 = vmatprep.subr.mxu0 0.0
    %588 = vmatpush1.msra.mxu0 0.0
    %589 = vmatprep.subr.mxu0 0.0
    %590 = vmatpush1.msra.mxu0 0.0
    %591 = vmatprep.subr.mxu0 0.0
    %592 = vmatpush1.msra.mxu0 0.0
    %593 = vmatprep.subr.mxu0 0.0
    %594 = vmatpush1.msra.mxu0 0.0
    %595 = vmatprep.subr.mxu0 0.0
    %596 = vmatpush1.msra.mxu0 0.0
    %597 = vmatprep.subr.mxu0 0.0
    %598 = vmatpush1.msra.mxu0 0.0
    %599 = vmatprep.subr.mxu0 0.0
    %600 = vmatpush1.msra.mxu0 0.0
    %601 = vmatprep.subr.mxu0 0.0
    %602 = vmatpush1.msra.mxu0 0.0
    %603 = vmatprep.subr.mxu0 0.0
    %604 = vmatpush1.msra.mxu0 0.0
    %605 = vmatprep.subr.mxu0 0.0
    %606 = vmatpush1.msra.mxu0 0.0
    %607 = vmatprep.subr.mxu0 0.0
    %608 = vmatpush1.msra.mxu0 0.0
    %609 = vmatprep.mubr.f32.mxu0 0.0
    %610 = vmatmul.mubr.f32.gmra.mrb[0].mxu0 %v543
    %v611 = vpop.f32.mrb[0].mxu0
    %v612 = vadd.f32 0.0, %v611
    %v613 = vpop.f32.mrb[0].mxu0
    %614 = vdwg.mxu0
    %v615 = vsub.f32 1.0, %v612
    %617 = vrot.lane.b32.xlu0 %v612, 96
    %v618 = vpop.permute.xlu0 %617
    %v620 = vsub.f32 %v615, %v618
    %v621 = vmul.f32 %v612, %v451
    %v622 = vmul.f32 %v612, %v455
    %624 = vrot.lane.b32.xlu0 %v622, 96
    %v625 = vpop.permute.xlu0 %624
    %v627 = vadd.f32 %v621, %v625
    %v628 = vmul.f32 %v620, %v446
    %v629 = vadd.f32 %v627, %v628
    %630 = vst.msk [vmem:[#allocation2] sm:$0xff] %vm70, %v629
    %s631 = scalar_lea.vmem [#allocation6], 8
    %632 = vst.msk [vmem:[%s631] sm:$0xff] %vm70, %v629
    %s633 = scalar_lea.vmem %s0, 16
    %v634 = vld [vmem:[%s633] sm:$0xff]
    %v635 = vld [vmem:[#allocation2] sm:$0xff]
    %v637 = vsel %vm70, %v635, 0
    %639 = vmatprep.subr.mxu0 0.0
    %640 = vmatpush1.msra.mxu0 %v46
    %641 = vmatprep.subr.mxu0 0.0
    %642 = vmatpush1.msra.mxu0 %v47
    %643 = vmatprep.subr.mxu0 0.0
    %644 = vmatpush1.msra.mxu0 %v48
    %645 = vmatprep.subr.mxu0 0.0
    %646 = vmatpush1.msra.mxu0 %v49
    %647 = vmatprep.subr.mxu0 0.0
    %648 = vmatpush1.msra.mxu0 0.0
    %649 = vmatprep.subr.mxu0 0.0
    %650 = vmatpush1.msra.mxu0 0.0
    %651 = vmatprep.subr.mxu0 0.0
    %652 = vmatpush1.msra.mxu0 0.0
    %653 = vmatprep.subr.mxu0 0.0
    %654 = vmatpush1.msra.mxu0 0.0
    %655 = vmatprep.subr.mxu0 0.0
    %656 = vmatpush1.msra.mxu0 0.0
    %657 = vmatprep.subr.mxu0 0.0
    %658 = vmatpush1.msra.mxu0 0.0
    %659 = vmatprep.subr.mxu0 0.0
    %660 = vmatpush1.msra.mxu0 0.0
    %661 = vmatprep.subr.mxu0 0.0
    %662 = vmatpush1.msra.mxu0 0.0
    %663 = vmatprep.subr.mxu0 0.0
    %664 = vmatpush1.msra.mxu0 0.0
    %665 = vmatprep.subr.mxu0 0.0
    %666 = vmatpush1.msra.mxu0 0.0
    %667 = vmatprep.subr.mxu0 0.0
    %668 = vmatpush1.msra.mxu0 0.0
    %669 = vmatprep.subr.mxu0 0.0
    %670 = vmatpush1.msra.mxu0 0.0
    %671 = vmatprep.subr.mxu0 0.0
    %672 = vmatpush1.msra.mxu0 0.0
    %673 = vmatprep.subr.mxu0 0.0
    %674 = vmatpush1.msra.mxu0 0.0
    %675 = vmatprep.subr.mxu0 0.0
    %676 = vmatpush1.msra.mxu0 0.0
    %677 = vmatprep.subr.mxu0 0.0
    %678 = vmatpush1.msra.mxu0 0.0
    %679 = vmatprep.subr.mxu0 0.0
    %680 = vmatpush1.msra.mxu0 0.0
    %681 = vmatprep.subr.mxu0 0.0
    %682 = vmatpush1.msra.mxu0 0.0
    %683 = vmatprep.subr.mxu0 0.0
    %684 = vmatpush1.msra.mxu0 0.0
    %685 = vmatprep.subr.mxu0 0.0
    %686 = vmatpush1.msra.mxu0 0.0
    %687 = vmatprep.subr.mxu0 0.0
    %688 = vmatpush1.msra.mxu0 0.0
    %689 = vmatprep.subr.mxu0 0.0
    %690 = vmatpush1.msra.mxu0 0.0
    %691 = vmatprep.subr.mxu0 0.0
    %692 = vmatpush1.msra.mxu0 0.0
    %693 = vmatprep.subr.mxu0 0.0
    %694 = vmatpush1.msra.mxu0 0.0
    %695 = vmatprep.subr.mxu0 0.0
    %696 = vmatpush1.msra.mxu0 0.0
    %697 = vmatprep.subr.mxu0 0.0
    %698 = vmatpush1.msra.mxu0 0.0
    %699 = vmatprep.subr.mxu0 0.0
    %700 = vmatpush1.msra.mxu0 0.0
    %701 = vmatprep.subr.mxu0 0.0
    %702 = vmatpush1.msra.mxu0 0.0
    %703 = vmatprep.mubr.f32.mxu0 0.0
    %704 = vmatmul.mubr.f32.gmra.mrb[0].mxu0 %v637
    %v705 = vpop.f32.mrb[0].mxu0
    %v706 = vadd.f32 0.0, %v705
    %v707 = vpop.f32.mrb[0].mxu0
    %708 = vdwg.mxu0
    %v709 = vadd.f32 %v634, %v706
    %v710 = vadd.f32 %v709, %v149
    %v711 = vxor.u32 %v710, 2147483648
    %v712 = vmul.f32 %v711, 1.442695
    %v713 = vpow.pop %v712
    %v714 = vadd.f32 %v713, 1.0
    %v715 = vrcp.pop %v714
    %v716 = vmul.f32 1.0, %v715
    %v717 = vtanh.pop %v710
    %719 = vrot.lane.b32.xlu0 %v717, 96
    %v720 = vpop.permute.xlu0 %719
    %v722 = vmul.f32 %v716, %v720
    %v723 = vtanh.pop %v634
    %v724 = vtanh.pop %v706
    %726 = vrot.lane.b32.xlu0 %v723, 64
    %v727 = vpop.permute.xlu0 %726
    %730 = vrot.lane.b32.xlu0 %v724, 96
    %v731 = vpop.permute.xlu0 %730
    %734 = vrot.lane.b32.xlu0 %v722, 64
    %v735 = vpop.permute.xlu0 %734
    %v737 = vsel %vm70, %v727, %v731
    %v738 = vsel %vm179, %v737, %v735
    %v740 = vsel %vm187, %v738, 0
    %742 = vmatprep.subr.mxu0 0.0
    %743 = vmatpush1.msra.mxu0 %v50
    %744 = vmatprep.subr.mxu0 0.0
    %745 = vmatpush1.msra.mxu0 %v51
    %746 = vmatprep.subr.mxu0 0.0
    %747 = vmatpush1.msra.mxu0 %v52
    %748 = vmatprep.subr.mxu0 0.0
    %749 = vmatpush1.msra.mxu0 %v53
    %750 = vmatprep.subr.mxu0 0.0
    %751 = vmatpush1.msra.mxu0 %v54
    %752 = vmatprep.subr.mxu0 0.0
    %753 = vmatpush1.msra.mxu0 %v55
    %754 = vmatprep.subr.mxu0 0.0
    %755 = vmatpush1.msra.mxu0 %v56
    %756 = vmatprep.subr.mxu0 0.0
    %757 = vmatpush1.msra.mxu0 %v57
    %758 = vmatprep.subr.mxu0 0.0
    %759 = vmatpush1.msra.mxu0 %v58
    %760 = vmatprep.subr.mxu0 0.0
    %761 = vmatpush1.msra.mxu0 %v59
    %762 = vmatprep.subr.mxu0 0.0
    %763 = vmatpush1.msra.mxu0 %v60
    %764 = vmatprep.subr.mxu0 0.0
    %765 = vmatpush1.msra.mxu0 %v61
    %766 = vmatprep.subr.mxu0 0.0
    %767 = vmatpush1.msra.mxu0 0.0
    %768 = vmatprep.subr.mxu0 0.0
    %769 = vmatpush1.msra.mxu0 0.0
    %770 = vmatprep.subr.mxu0 0.0
    %771 = vmatpush1.msra.mxu0 0.0
    %772 = vmatprep.subr.mxu0 0.0
    %773 = vmatpush1.msra.mxu0 0.0
    %774 = vmatprep.subr.mxu0 0.0
    %775 = vmatpush1.msra.mxu0 0.0
    %776 = vmatprep.subr.mxu0 0.0
    %777 = vmatpush1.msra.mxu0 0.0
    %778 = vmatprep.subr.mxu0 0.0
    %779 = vmatpush1.msra.mxu0 0.0
    %780 = vmatprep.subr.mxu0 0.0
    %781 = vmatpush1.msra.mxu0 0.0
    %782 = vmatprep.subr.mxu0 0.0
    %783 = vmatpush1.msra.mxu0 0.0
    %784 = vmatprep.subr.mxu0 0.0
    %785 = vmatpush1.msra.mxu0 0.0
    %786 = vmatprep.subr.mxu0 0.0
    %787 = vmatpush1.msra.mxu0 0.0
    %788 = vmatprep.subr.mxu0 0.0
    %789 = vmatpush1.msra.mxu0 0.0
    %790 = vmatprep.subr.mxu0 0.0
    %791 = vmatpush1.msra.mxu0 0.0
    %792 = vmatprep.subr.mxu0 0.0
    %793 = vmatpush1.msra.mxu0 0.0
    %794 = vmatprep.subr.mxu0 0.0
    %795 = vmatpush1.msra.mxu0 0.0
    %796 = vmatprep.subr.mxu0 0.0
    %797 = vmatpush1.msra.mxu0 0.0
    %798 = vmatprep.subr.mxu0 0.0
    %799 = vmatpush1.msra.mxu0 0.0
    %800 = vmatprep.subr.mxu0 0.0
    %801 = vmatpush1.msra.mxu0 0.0
    %802 = vmatprep.subr.mxu0 0.0
    %803 = vmatpush1.msra.mxu0 0.0
    %804 = vmatprep.subr.mxu0 0.0
    %805 = vmatpush1.msra.mxu0 0.0
    %806 = vmatprep.mubr.f32.mxu0 0.0
    %807 = vmatmul.mubr.f32.gmra.mrb[0].mxu0 %v740
    %v808 = vpop.f32.mrb[0].mxu0
    %v809 = vadd.f32 %v185, %v808
    %v810 = vpop.f32.mrb[0].mxu0
    %811 = vdwg.mxu0
    %v812 = vxor.u32 %v809, 2147483648
    %v813 = vmul.f32 %v812, 1.442695
    %v814 = vpow.pop %v813
    %v815 = vadd.f32 %v814, 1.0
    %v816 = vrcp.pop %v815
    %v817 = vmul.f32 1.0, %v816
    %v819 = vsel %vm70, %v817, 0
    %821 = vmatprep.subr.mxu0 0.0
    %822 = vmatpush1.msra.mxu0 %v62
    %823 = vmatprep.subr.mxu0 0.0
    %824 = vmatpush1.msra.mxu0 %v63
    %825 = vmatprep.subr.mxu0 0.0
    %826 = vmatpush1.msra.mxu0 %v64
    %827 = vmatprep.subr.mxu0 0.0
    %828 = vmatpush1.msra.mxu0 %v65
    %829 = vmatprep.subr.mxu0 0.0
    %830 = vmatpush1.msra.mxu0 0.0
    %831 = vmatprep.subr.mxu0 0.0
    %832 = vmatpush1.msra.mxu0 0.0
    %833 = vmatprep.subr.mxu0 0.0
    %834 = vmatpush1.msra.mxu0 0.0
    %835 = vmatprep.subr.mxu0 0.0
    %836 = vmatpush1.msra.mxu0 0.0
    %837 = vmatprep.subr.mxu0 0.0
    %838 = vmatpush1.msra.mxu0 0.0
    %839 = vmatprep.subr.mxu0 0.0
    %840 = vmatpush1.msra.mxu0 0.0
    %841 = vmatprep.subr.mxu0 0.0
    %842 = vmatpush1.msra.mxu0 0.0
    %843 = vmatprep.subr.mxu0 0.0
    %844 = vmatpush1.msra.mxu0 0.0
    %845 = vmatprep.subr.mxu0 0.0
    %846 = vmatpush1.msra.mxu0 0.0
    %847 = vmatprep.subr.mxu0 0.0
    %848 = vmatpush1.msra.mxu0 0.0
    %849 = vmatprep.subr.mxu0 0.0
    %850 = vmatpush1.msra.mxu0 0.0
    %851 = vmatprep.subr.mxu0 0.0
    %852 = vmatpush1.msra.mxu0 0.0
    %853 = vmatprep.subr.mxu0 0.0
    %854 = vmatpush1.msra.mxu0 0.0
    %855 = vmatprep.subr.mxu0 0.0
    %856 = vmatpush1.msra.mxu0 0.0
    %857 = vmatprep.subr.mxu0 0.0
    %858 = vmatpush1.msra.mxu0 0.0
    %859 = vmatprep.subr.mxu0 0.0
    %860 = vmatpush1.msra.mxu0 0.0
    %861 = vmatprep.subr.mxu0 0.0
    %862 = vmatpush1.msra.mxu0 0.0
    %863 = vmatprep.subr.mxu0 0.0
    %864 = vmatpush1.msra.mxu0 0.0
    %865 = vmatprep.subr.mxu0 0.0
    %866 = vmatpush1.msra.mxu0 0.0
    %867 = vmatprep.subr.mxu0 0.0
    %868 = vmatpush1.msra.mxu0 0.0
    %869 = vmatprep.subr.mxu0 0.0
    %870 = vmatpush1.msra.mxu0 0.0
    %871 = vmatprep.subr.mxu0 0.0
    %872 = vmatpush1.msra.mxu0 0.0
    %873 = vmatprep.subr.mxu0 0.0
    %874 = vmatpush1.msra.mxu0 0.0
    %875 = vmatprep.subr.mxu0 0.0
    %876 = vmatpush1.msra.mxu0 0.0
    %877 = vmatprep.subr.mxu0 0.0
    %878 = vmatpush1.msra.mxu0 0.0
    %879 = vmatprep.subr.mxu0 0.0
    %880 = vmatpush1.msra.mxu0 0.0
    %881 = vmatprep.subr.mxu0 0.0
    %882 = vmatpush1.msra.mxu0 0.0
    %883 = vmatprep.subr.mxu0 0.0
    %884 = vmatpush1.msra.mxu0 0.0
    %885 = vmatprep.mubr.f32.mxu0 0.0
    %886 = vmatmul.mubr.f32.gmra.mrb[0].mxu0 %v819
    %v887 = vpop.f32.mrb[0].mxu0
    %v888 = vadd.f32 0.0, %v887
    %v889 = vpop.f32.mrb[0].mxu0
    %890 = vdwg.mxu0
    %v891 = vsub.f32 1.0, %v888
    %893 = vrot.lane.b32.xlu0 %v888, 96
    %v894 = vpop.permute.xlu0 %893
    %v896 = vsub.f32 %v891, %v894
    %v897 = vmul.f32 %v888, %v727
    %v898 = vmul.f32 %v888, %v731
    %900 = vrot.lane.b32.xlu0 %v898, 96
    %v901 = vpop.permute.xlu0 %900
    %v903 = vadd.f32 %v897, %v901
    %v904 = vmul.f32 %v896, %v722
    %v905 = vadd.f32 %v903, %v904
    %906 = vst.msk [vmem:[#allocation2] sm:$0xff] %vm70, %v905
    %s907 = scalar_lea.vmem [#allocation6], 16
    %908 = vst.msk [vmem:[%s907] sm:$0xff] %vm70, %v905
    %s909 = scalar_lea.vmem %s0, 24
    %v910 = vld [vmem:[%s909] sm:$0xff]
    %v911 = vld [vmem:[#allocation2] sm:$0xff]
    %v913 = vsel %vm70, %v911, 0
    %915 = vmatprep.subr.mxu0 0.0
    %916 = vmatpush1.msra.mxu0 %v46
    %917 = vmatprep.subr.mxu0 0.0
    %918 = vmatpush1.msra.mxu0 %v47
    %919 = vmatprep.subr.mxu0 0.0
    %920 = vmatpush1.msra.mxu0 %v48
    %921 = vmatprep.subr.mxu0 0.0
    %922 = vmatpush1.msra.mxu0 %v49
    %923 = vmatprep.subr.mxu0 0.0
    %924 = vmatpush1.msra.mxu0 0.0
    %925 = vmatprep.subr.mxu0 0.0
    %926 = vmatpush1.msra.mxu0 0.0
    %927 = vmatprep.subr.mxu0 0.0
    %928 = vmatpush1.msra.mxu0 0.0
    %929 = vmatprep.subr.mxu0 0.0
    %930 = vmatpush1.msra.mxu0 0.0
    %931 = vmatprep.subr.mxu0 0.0
    %932 = vmatpush1.msra.mxu0 0.0
    %933 = vmatprep.subr.mxu0 0.0
    %934 = vmatpush1.msra.mxu0 0.0
    %935 = vmatprep.subr.mxu0 0.0
    %936 = vmatpush1.msra.mxu0 0.0
    %937 = vmatprep.subr.mxu0 0.0
    %938 = vmatpush1.msra.mxu0 0.0
    %939 = vmatprep.subr.mxu0 0.0
    %940 = vmatpush1.msra.mxu0 0.0
    %941 = vmatprep.subr.mxu0 0.0
    %942 = vmatpush1.msra.mxu0 0.0
    %943 = vmatprep.subr.mxu0 0.0
    %944 = vmatpush1.msra.mxu0 0.0
    %945 = vmatprep.subr.mxu0 0.0
    %946 = vmatpush1.msra.mxu0 0.0
    %947 = vmatprep.subr.mxu0 0.0
    %948 = vmatpush1.msra.mxu0 0.0
    %949 = vmatprep.subr.mxu0 0.0
    %950 = vmatpush1.msra.mxu0 0.0
    %951 = vmatprep.subr.mxu0 0.0
    %952 = vmatpush1.msra.mxu0 0.0
    %953 = vmatprep.subr.mxu0 0.0
    %954 = vmatpush1.msra.mxu0 0.0
    %955 = vmatprep.subr.mxu0 0.0
    %956 = vmatpush1.msra.mxu0 0.0
    %957 = vmatprep.subr.mxu0 0.0
    %958 = vmatpush1.msra.mxu0 0.0
    %959 = vmatprep.subr.mxu0 0.0
    %960 = vmatpush1.msra.mxu0 0.0
    %961 = vmatprep.subr.mxu0 0.0
    %962 = vmatpush1.msra.mxu0 0.0
    %963 = vmatprep.subr.mxu0 0.0
    %964 = vmatpush1.msra.mxu0 0.0
    %965 = vmatprep.subr.mxu0 0.0
    %966 = vmatpush1.msra.mxu0 0.0
    %967 = vmatprep.subr.mxu0 0.0
    %968 = vmatpush1.msra.mxu0 0.0
    %969 = vmatprep.subr.mxu0 0.0
    %970 = vmatpush1.msra.mxu0 0.0
    %971 = vmatprep.subr.mxu0 0.0
    %972 = vmatpush1.msra.mxu0 0.0
    %973 = vmatprep.subr.mxu0 0.0
    %974 = vmatpush1.msra.mxu0 0.0
    %975 = vmatprep.subr.mxu0 0.0
    %976 = vmatpush1.msra.mxu0 0.0
    %977 = vmatprep.subr.mxu0 0.0
    %978 = vmatpush1.msra.mxu0 0.0
    %979 = vmatprep.mubr.f32.mxu0 0.0
    %980 = vmatmul.mubr.f32.gmra.mrb[0].mxu0 %v913
    %v981 = vpop.f32.mrb[0].mxu0
    %v982 = vadd.f32 0.0, %v981
    %v983 = vpop.f32.mrb[0].mxu0
    %984 = vdwg.mxu0
    %v985 = vadd.f32 %v910, %v982
    %v986 = vadd.f32 %v985, %v149
    %v987 = vxor.u32 %v986, 2147483648
    %v988 = vmul.f32 %v987, 1.442695
    %v989 = vpow.pop %v988
    %v990 = vadd.f32 %v989, 1.0
    %v991 = vrcp.pop %v990
    %v992 = vmul.f32 1.0, %v991
    %v993 = vtanh.pop %v986
    %995 = vrot.lane.b32.xlu0 %v993, 96
    %v996 = vpop.permute.xlu0 %995
    %v998 = vmul.f32 %v992, %v996
    %v999 = vtanh.pop %v910
    %v1000 = vtanh.pop %v982
    %1002 = vrot.lane.b32.xlu0 %v999, 64
    %v1003 = vpop.permute.xlu0 %1002
    %1006 = vrot.lane.b32.xlu0 %v1000, 96
    %v1007 = vpop.permute.xlu0 %1006
    %1010 = vrot.lane.b32.xlu0 %v998, 64
    %v1011 = vpop.permute.xlu0 %1010
    %v1013 = vsel %vm70, %v1003, %v1007
    %v1014 = vsel %vm179, %v1013, %v1011
    %v1016 = vsel %vm187, %v1014, 0
    %1018 = vmatprep.subr.mxu0 0.0
    %1019 = vmatpush1.msra.mxu0 %v50
    %1020 = vmatprep.subr.mxu0 0.0
    %1021 = vmatpush1.msra.mxu0 %v51
    %1022 = vmatprep.subr.mxu0 0.0
    %1023 = vmatpush1.msra.mxu0 %v52
    %1024 = vmatprep.subr.mxu0 0.0
    %1025 = vmatpush1.msra.mxu0 %v53
    %1026 = vmatprep.subr.mxu0 0.0
    %1027 = vmatpush1.msra.mxu0 %v54
    %1028 = vmatprep.subr.mxu0 0.0
    %1029 = vmatpush1.msra.mxu0 %v55
    %1030 = vmatprep.subr.mxu0 0.0
    %1031 = vmatpush1.msra.mxu0 %v56
    %1032 = vmatprep.subr.mxu0 0.0
    %1033 = vmatpush1.msra.mxu0 %v57
    %1034 = vmatprep.subr.mxu0 0.0
    %1035 = vmatpush1.msra.mxu0 %v58
    %1036 = vmatprep.subr.mxu0 0.0
    %1037 = vmatpush1.msra.mxu0 %v59
    %1038 = vmatprep.subr.mxu0 0.0
    %1039 = vmatpush1.msra.mxu0 %v60
    %1040 = vmatprep.subr.mxu0 0.0
    %1041 = vmatpush1.msra.mxu0 %v61
    %1042 = vmatprep.subr.mxu0 0.0
    %1043 = vmatpush1.msra.mxu0 0.0
    %1044 = vmatprep.subr.mxu0 0.0
    %1045 = vmatpush1.msra.mxu0 0.0
    %1046 = vmatprep.subr.mxu0 0.0
    %1047 = vmatpush1.msra.mxu0 0.0
    %1048 = vmatprep.subr.mxu0 0.0
    %1049 = vmatpush1.msra.mxu0 0.0
    %1050 = vmatprep.subr.mxu0 0.0
    %1051 = vmatpush1.msra.mxu0 0.0
    %1052 = vmatprep.subr.mxu0 0.0
    %1053 = vmatpush1.msra.mxu0 0.0
    %1054 = vmatprep.subr.mxu0 0.0
    %1055 = vmatpush1.msra.mxu0 0.0
    %1056 = vmatprep.subr.mxu0 0.0
    %1057 = vmatpush1.msra.mxu0 0.0
    %1058 = vmatprep.subr.mxu0 0.0
    %1059 = vmatpush1.msra.mxu0 0.0
    %1060 = vmatprep.subr.mxu0 0.0
    %1061 = vmatpush1.msra.mxu0 0.0
    %1062 = vmatprep.subr.mxu0 0.0
    %1063 = vmatpush1.msra.mxu0 0.0
    %1064 = vmatprep.subr.mxu0 0.0
    %1065 = vmatpush1.msra.mxu0 0.0
    %1066 = vmatprep.subr.mxu0 0.0
    %1067 = vmatpush1.msra.mxu0 0.0
    %1068 = vmatprep.subr.mxu0 0.0
    %1069 = vmatpush1.msra.mxu0 0.0
    %1070 = vmatprep.subr.mxu0 0.0
    %1071 = vmatpush1.msra.mxu0 0.0
    %1072 = vmatprep.subr.mxu0 0.0
    %1073 = vmatpush1.msra.mxu0 0.0
    %1074 = vmatprep.subr.mxu0 0.0
    %1075 = vmatpush1.msra.mxu0 0.0
    %1076 = vmatprep.subr.mxu0 0.0
    %1077 = vmatpush1.msra.mxu0 0.0
    %1078 = vmatprep.subr.mxu0 0.0
    %1079 = vmatpush1.msra.mxu0 0.0
    %1080 = vmatprep.subr.mxu0 0.0
    %1081 = vmatpush1.msra.mxu0 0.0
    %1082 = vmatprep.mubr.f32.mxu0 0.0
    %1083 = vmatmul.mubr.f32.gmra.mrb[0].mxu0 %v1016
    %v1084 = vpop.f32.mrb[0].mxu0
    %v1085 = vadd.f32 %v185, %v1084
    %v1086 = vpop.f32.mrb[0].mxu0
    %1087 = vdwg.mxu0
    %v1088 = vxor.u32 %v1085, 2147483648
    %v1089 = vmul.f32 %v1088, 1.442695
    %v1090 = vpow.pop %v1089
    %v1091 = vadd.f32 %v1090, 1.0
    %v1092 = vrcp.pop %v1091
    %v1093 = vmul.f32 1.0, %v1092
    %v1095 = vsel %vm70, %v1093, 0
    %1097 = vmatprep.subr.mxu0 0.0
    %1098 = vmatpush1.msra.mxu0 %v62
    %1099 = vmatprep.subr.mxu0 0.0
    %1100 = vmatpush1.msra.mxu0 %v63
    %1101 = vmatprep.subr.mxu0 0.0
    %1102 = vmatpush1.msra.mxu0 %v64
    %1103 = vmatprep.subr.mxu0 0.0
    %1104 = vmatpush1.msra.mxu0 %v65
    %1105 = vmatprep.subr.mxu0 0.0
    %1106 = vmatpush1.msra.mxu0 0.0
    %1107 = vmatprep.subr.mxu0 0.0
    %1108 = vmatpush1.msra.mxu0 0.0
    %1109 = vmatprep.subr.mxu0 0.0
    %1110 = vmatpush1.msra.mxu0 0.0
    %1111 = vmatprep.subr.mxu0 0.0
    %1112 = vmatpush1.msra.mxu0 0.0
    %1113 = vmatprep.subr.mxu0 0.0
    %1114 = vmatpush1.msra.mxu0 0.0
    %1115 = vmatprep.subr.mxu0 0.0
    %1116 = vmatpush1.msra.mxu0 0.0
    %1117 = vmatprep.subr.mxu0 0.0
    %1118 = vmatpush1.msra.mxu0 0.0
    %1119 = vmatprep.subr.mxu0 0.0
    %1120 = vmatpush1.msra.mxu0 0.0
    %1121 = vmatprep.subr.mxu0 0.0
    %1122 = vmatpush1.msra.mxu0 0.0
    %1123 = vmatprep.subr.mxu0 0.0
    %1124 = vmatpush1.msra.mxu0 0.0
    %1125 = vmatprep.subr.mxu0 0.0
    %1126 = vmatpush1.msra.mxu0 0.0
    %1127 = vmatprep.subr.mxu0 0.0
    %1128 = vmatpush1.msra.mxu0 0.0
    %1129 = vmatprep.subr.mxu0 0.0
    %1130 = vmatpush1.msra.mxu0 0.0
    %1131 = vmatprep.subr.mxu0 0.0
    %1132 = vmatpush1.msra.mxu0 0.0
    %1133 = vmatprep.subr.mxu0 0.0
    %1134 = vmatpush1.msra.mxu0 0.0
    %1135 = vmatprep.subr.mxu0 0.0
    %1136 = vmatpush1.msra.mxu0 0.0
    %1137 = vmatprep.subr.mxu0 0.0
    %1138 = vmatpush1.msra.mxu0 0.0
    %1139 = vmatprep.subr.mxu0 0.0
    %1140 = vmatpush1.msra.mxu0 0.0
    %1141 = vmatprep.subr.mxu0 0.0
    %1142 = vmatpush1.msra.mxu0 0.0
    %1143 = vmatprep.subr.mxu0 0.0
    %1144 = vmatpush1.msra.mxu0 0.0
    %1145 = vmatprep.subr.mxu0 0.0
    %1146 = vmatpush1.msra.mxu0 0.0
    %1147 = vmatprep.subr.mxu0 0.0
    %1148 = vmatpush1.msra.mxu0 0.0
    %1149 = vmatprep.subr.mxu0 0.0
    %1150 = vmatpush1.msra.mxu0 0.0
    %1151 = vmatprep.subr.mxu0 0.0
    %1152 = vmatpush1.msra.mxu0 0.0
    %1153 = vmatprep.subr.mxu0 0.0
    %1154 = vmatpush1.msra.mxu0 0.0
    %1155 = vmatprep.subr.mxu0 0.0
    %1156 = vmatpush1.msra.mxu0 0.0
    %1157 = vmatprep.subr.mxu0 0.0
    %1158 = vmatpush1.msra.mxu0 0.0
    %1159 = vmatprep.subr.mxu0 0.0
    %1160 = vmatpush1.msra.mxu0 0.0
    %1161 = vmatprep.mubr.f32.mxu0 0.0
    %1162 = vmatmul.mubr.f32.gmra.mrb[0].mxu0 %v1095
    %v1163 = vpop.f32.mrb[0].mxu0
    %v1164 = vadd.f32 0.0, %v1163
    %v1165 = vpop.f32.mrb[0].mxu0
    %1166 = vdwg.mxu0
    %v1167 = vsub.f32 1.0, %v1164
    %1169 = vrot.lane.b32.xlu0 %v1164, 96
    %v1170 = vpop.permute.xlu0 %1169
    %v1172 = vsub.f32 %v1167, %v1170
    %v1173 = vmul.f32 %v1164, %v1003
    %v1174 = vmul.f32 %v1164, %v1007
    %1176 = vrot.lane.b32.xlu0 %v1174, 96
    %v1177 = vpop.permute.xlu0 %1176
    %v1179 = vadd.f32 %v1173, %v1177
    %v1180 = vmul.f32 %v1172, %v998
    %v1181 = vadd.f32 %v1179, %v1180
    %1182 = vst.msk [vmem:[#allocation2] sm:$0xff] %vm70, %v1181
    %s1183 = scalar_lea.vmem [#allocation6], 24
    %1184 = vst.msk [vmem:[%s1183] sm:$0xff] %vm70, %v1181
    %s1185 = scalar_lea.vmem %s0, 32
    %v1186 = vld [vmem:[%s1185] sm:$0xff]
    %v1187 = vld [vmem:[#allocation2] sm:$0xff]
    %v1189 = vsel %vm70, %v1187, 0
    %1191 = vmatprep.subr.mxu0 0.0
    %1192 = vmatpush1.msra.mxu0 %v46
    %1193 = vmatprep.subr.mxu0 0.0
    %1194 = vmatpush1.msra.mxu0 %v47
    %1195 = vmatprep.subr.mxu0 0.0
    %1196 = vmatpush1.msra.mxu0 %v48
    %1197 = vmatprep.subr.mxu0 0.0
    %1198 = vmatpush1.msra.mxu0 %v49
    %1199 = vmatprep.subr.mxu0 0.0
    %1200 = vmatpush1.msra.mxu0 0.0
    %1201 = vmatprep.subr.mxu0 0.0
    %1202 = vmatpush1.msra.mxu0 0.0
    %1203 = vmatprep.subr.mxu0 0.0
    %1204 = vmatpush1.msra.mxu0 0.0
    %1205 = vmatprep.subr.mxu0 0.0
    %1206 = vmatpush1.msra.mxu0 0.0
    %1207 = vmatprep.subr.mxu0 0.0
    %1208 = vmatpush1.msra.mxu0 0.0
    %1209 = vmatprep.subr.mxu0 0.0
    %1210 = vmatpush1.msra.mxu0 0.0
    %1211 = vmatprep.subr.mxu0 0.0
    %1212 = vmatpush1.msra.mxu0 0.0
    %1213 = vmatprep.subr.mxu0 0.0
    %1214 = vmatpush1.msra.mxu0 0.0
    %1215 = vmatprep.subr.mxu0 0.0
    %1216 = vmatpush1.msra.mxu0 0.0
    %1217 = vmatprep.subr.mxu0 0.0
    %1218 = vmatpush1.msra.mxu0 0.0
    %1219 = vmatprep.subr.mxu0 0.0
    %1220 = vmatpush1.msra.mxu0 0.0
    %1221 = vmatprep.subr.mxu0 0.0
    %1222 = vmatpush1.msra.mxu0 0.0
    %1223 = vmatprep.subr.mxu0 0.0
    %1224 = vmatpush1.msra.mxu0 0.0
    %1225 = vmatprep.subr.mxu0 0.0
    %1226 = vmatpush1.msra.mxu0 0.0
    %1227 = vmatprep.subr.mxu0 0.0
    %1228 = vmatpush1.msra.mxu0 0.0
    %1229 = vmatprep.subr.mxu0 0.0
    %1230 = vmatpush1.msra.mxu0 0.0
    %1231 = vmatprep.subr.mxu0 0.0
    %1232 = vmatpush1.msra.mxu0 0.0
    %1233 = vmatprep.subr.mxu0 0.0
    %1234 = vmatpush1.msra.mxu0 0.0
    %1235 = vmatprep.subr.mxu0 0.0
    %1236 = vmatpush1.msra.mxu0 0.0
    %1237 = vmatprep.subr.mxu0 0.0
    %1238 = vmatpush1.msra.mxu0 0.0
    %1239 = vmatprep.subr.mxu0 0.0
    %1240 = vmatpush1.msra.mxu0 0.0
    %1241 = vmatprep.subr.mxu0 0.0
    %1242 = vmatpush1.msra.mxu0 0.0
    %1243 = vmatprep.subr.mxu0 0.0
    %1244 = vmatpush1.msra.mxu0 0.0
    %1245 = vmatprep.subr.mxu0 0.0
    %1246 = vmatpush1.msra.mxu0 0.0
    %1247 = vmatprep.subr.mxu0 0.0
    %1248 = vmatpush1.msra.mxu0 0.0
    %1249 = vmatprep.subr.mxu0 0.0
    %1250 = vmatpush1.msra.mxu0 0.0
    %1251 = vmatprep.subr.mxu0 0.0
    %1252 = vmatpush1.msra.mxu0 0.0
    %1253 = vmatprep.subr.mxu0 0.0
    %1254 = vmatpush1.msra.mxu0 0.0
    %1255 = vmatprep.mubr.f32.mxu0 0.0
    %1256 = vmatmul.mubr.f32.gmra.mrb[0].mxu0 %v1189
    %v1257 = vpop.f32.mrb[0].mxu0
    %v1258 = vadd.f32 0.0, %v1257
    %v1259 = vpop.f32.mrb[0].mxu0
    %1260 = vdwg.mxu0
    %v1261 = vadd.f32 %v1186, %v1258
    %v1262 = vadd.f32 %v1261, %v149
    %v1263 = vxor.u32 %v1262, 2147483648
    %v1264 = vmul.f32 %v1263, 1.442695
    %v1265 = vpow.pop %v1264
    %v1266 = vadd.f32 %v1265, 1.0
    %v1267 = vrcp.pop %v1266
    %v1268 = vmul.f32 1.0, %v1267
    %v1269 = vtanh.pop %v1262
    %1271 = vrot.lane.b32.xlu0 %v1269, 96
    %v1272 = vpop.permute.xlu0 %1271
    %v1274 = vmul.f32 %v1268, %v1272
    %v1275 = vtanh.pop %v1186
    %v1276 = vtanh.pop %v1258
    %1278 = vrot.lane.b32.xlu0 %v1275, 64
    %v1279 = vpop.permute.xlu0 %1278
    %1282 = vrot.lane.b32.xlu0 %v1276, 96
    %v1283 = vpop.permute.xlu0 %1282
    %1286 = vrot.lane.b32.xlu0 %v1274, 64
    %v1287 = vpop.permute.xlu0 %1286
    %v1289 = vsel %vm70, %v1279, %v1283
    %v1290 = vsel %vm179, %v1289, %v1287
    %v1292 = vsel %vm187, %v1290, 0
    %1294 = vmatprep.subr.mxu0 0.0
    %1295 = vmatpush1.msra.mxu0 %v50
    %1296 = vmatprep.subr.mxu0 0.0
    %1297 = vmatpush1.msra.mxu0 %v51
    %1298 = vmatprep.subr.mxu0 0.0
    %1299 = vmatpush1.msra.mxu0 %v52
    %1300 = vmatprep.subr.mxu0 0.0
    %1301 = vmatpush1.msra.mxu0 %v53
    %1302 = vmatprep.subr.mxu0 0.0
    %1303 = vmatpush1.msra.mxu0 %v54
    %1304 = vmatprep.subr.mxu0 0.0
    %1305 = vmatpush1.msra.mxu0 %v55
    %1306 = vmatprep.subr.mxu0 0.0
    %1307 = vmatpush1.msra.mxu0 %v56
    %1308 = vmatprep.subr.mxu0 0.0
    %1309 = vmatpush1.msra.mxu0 %v57
    %1310 = vmatprep.subr.mxu0 0.0
    %1311 = vmatpush1.msra.mxu0 %v58
    %1312 = vmatprep.subr.mxu0 0.0
    %1313 = vmatpush1.msra.mxu0 %v59
    %1314 = vmatprep.subr.mxu0 0.0
    %1315 = vmatpush1.msra.mxu0 %v60
    %1316 = vmatprep.subr.mxu0 0.0
    %1317 = vmatpush1.msra.mxu0 %v61
    %1318 = vmatprep.subr.mxu0 0.0
    %1319 = vmatpush1.msra.mxu0 0.0
    %1320 = vmatprep.subr.mxu0 0.0
    %1321 = vmatpush1.msra.mxu0 0.0
    %1322 = vmatprep.subr.mxu0 0.0
    %1323 = vmatpush1.msra.mxu0 0.0
    %1324 = vmatprep.subr.mxu0 0.0
    %1325 = vmatpush1.msra.mxu0 0.0
    %1326 = vmatprep.subr.mxu0 0.0
    %1327 = vmatpush1.msra.mxu0 0.0
    %1328 = vmatprep.subr.mxu0 0.0
    %1329 = vmatpush1.msra.mxu0 0.0
    %1330 = vmatprep.subr.mxu0 0.0
    %1331 = vmatpush1.msra.mxu0 0.0
    %1332 = vmatprep.subr.mxu0 0.0
    %1333 = vmatpush1.msra.mxu0 0.0
    %1334 = vmatprep.subr.mxu0 0.0
    %1335 = vmatpush1.msra.mxu0 0.0
    %1336 = vmatprep.subr.mxu0 0.0
    %1337 = vmatpush1.msra.mxu0 0.0
    %1338 = vmatprep.subr.mxu0 0.0
    %1339 = vmatpush1.msra.mxu0 0.0
    %1340 = vmatprep.subr.mxu0 0.0
    %1341 = vmatpush1.msra.mxu0 0.0
    %1342 = vmatprep.subr.mxu0 0.0
    %1343 = vmatpush1.msra.mxu0 0.0
    %1344 = vmatprep.subr.mxu0 0.0
    %1345 = vmatpush1.msra.mxu0 0.0
    %1346 = vmatprep.subr.mxu0 0.0
    %1347 = vmatpush1.msra.mxu0 0.0
    %1348 = vmatprep.subr.mxu0 0.0
    %1349 = vmatpush1.msra.mxu0 0.0
    %1350 = vmatprep.subr.mxu0 0.0
    %1351 = vmatpush1.msra.mxu0 0.0
    %1352 = vmatprep.subr.mxu0 0.0
    %1353 = vmatpush1.msra.mxu0 0.0
    %1354 = vmatprep.subr.mxu0 0.0
    %1355 = vmatpush1.msra.mxu0 0.0
    %1356 = vmatprep.subr.mxu0 0.0
    %1357 = vmatpush1.msra.mxu0 0.0
    %1358 = vmatprep.mubr.f32.mxu0 0.0
    %1359 = vmatmul.mubr.f32.gmra.mrb[0].mxu0 %v1292
    %v1360 = vpop.f32.mrb[0].mxu0
    %v1361 = vadd.f32 %v185, %v1360
    %v1362 = vpop.f32.mrb[0].mxu0
    %1363 = vdwg.mxu0
    %v1364 = vxor.u32 %v1361, 2147483648
    %v1365 = vmul.f32 %v1364, 1.442695
    %v1366 = vpow.pop %v1365
    %v1367 = vadd.f32 %v1366, 1.0
    %v1368 = vrcp.pop %v1367
    %v1369 = vmul.f32 1.0, %v1368
    %v1371 = vsel %vm70, %v1369, 0
    %1373 = vmatprep.subr.mxu0 0.0
    %1374 = vmatpush1.msra.mxu0 %v62
    %1375 = vmatprep.subr.mxu0 0.0
    %1376 = vmatpush1.msra.mxu0 %v63
    %1377 = vmatprep.subr.mxu0 0.0
    %1378 = vmatpush1.msra.mxu0 %v64
    %1379 = vmatprep.subr.mxu0 0.0
    %1380 = vmatpush1.msra.mxu0 %v65
    %1381 = vmatprep.subr.mxu0 0.0
    %1382 = vmatpush1.msra.mxu0 0.0
    %1383 = vmatprep.subr.mxu0 0.0
    %1384 = vmatpush1.msra.mxu0 0.0
    %1385 = vmatprep.subr.mxu0 0.0
    %1386 = vmatpush1.msra.mxu0 0.0
    %1387 = vmatprep.subr.mxu0 0.0
    %1388 = vmatpush1.msra.mxu0 0.0
    %1389 = vmatprep.subr.mxu0 0.0
    %1390 = vmatpush1.msra.mxu0 0.0
    %1391 = vmatprep.subr.mxu0 0.0
    %1392 = vmatpush1.msra.mxu0 0.0
    %1393 = vmatprep.subr.mxu0 0.0
    %1394 = vmatpush1.msra.mxu0 0.0
    %1395 = vmatprep.subr.mxu0 0.0
    %1396 = vmatpush1.msra.mxu0 0.0
    %1397 = vmatprep.subr.mxu0 0.0
    %1398 = vmatpush1.msra.mxu0 0.0
    %1399 = vmatprep.subr.mxu0 0.0
    %1400 = vmatpush1.msra.mxu0 0.0
    %1401 = vmatprep.subr.mxu0 0.0
    %1402 = vmatpush1.msra.mxu0 0.0
    %1403 = vmatprep.subr.mxu0 0.0
    %1404 = vmatpush1.msra.mxu0 0.0
    %1405 = vmatprep.subr.mxu0 0.0
    %1406 = vmatpush1.msra.mxu0 0.0
    %1407 = vmatprep.subr.mxu0 0.0
    %1408 = vmatpush1.msra.mxu0 0.0
    %1409 = vmatprep.subr.mxu0 0.0
    %1410 = vmatpush1.msra.mxu0 0.0
    %1411 = vmatprep.subr.mxu0 0.0
    %1412 = vmatpush1.msra.mxu0 0.0
    %1413 = vmatprep.subr.mxu0 0.0
    %1414 = vmatpush1.msra.mxu0 0.0
    %1415 = vmatprep.subr.mxu0 0.0
    %1416 = vmatpush1.msra.mxu0 0.0
    %1417 = vmatprep.subr.mxu0 0.0
    %1418 = vmatpush1.msra.mxu0 0.0
    %1419 = vmatprep.subr.mxu0 0.0
    %1420 = vmatpush1.msra.mxu0 0.0
    %1421 = vmatprep.subr.mxu0 0.0
    %1422 = vmatpush1.msra.mxu0 0.0
    %1423 = vmatprep.subr.mxu0 0.0
    %1424 = vmatpush1.msra.mxu0 0.0
    %1425 = vmatprep.subr.mxu0 0.0
    %1426 = vmatpush1.msra.mxu0 0.0
    %1427 = vmatprep.subr.mxu0 0.0
    %1428 = vmatpush1.msra.mxu0 0.0
    %1429 = vmatprep.subr.mxu0 0.0
    %1430 = vmatpush1.msra.mxu0 0.0
    %1431 = vmatprep.subr.mxu0 0.0
    %1432 = vmatpush1.msra.mxu0 0.0
    %1433 = vmatprep.subr.mxu0 0.0
    %1434 = vmatpush1.msra.mxu0 0.0
    %1435 = vmatprep.subr.mxu0 0.0
    %1436 = vmatpush1.msra.mxu0 0.0
    %1437 = vmatprep.mubr.f32.mxu0 0.0
    %1438 = vmatmul.mubr.f32.gmra.mrb[0].mxu0 %v1371
    %v1439 = vpop.f32.mrb[0].mxu0
    %v1440 = vadd.f32 0.0, %v1439
    %v1441 = vpop.f32.mrb[0].mxu0
    %1442 = vdwg.mxu0
    %v1443 = vsub.f32 1.0, %v1440
    %1445 = vrot.lane.b32.xlu0 %v1440, 96
    %v1446 = vpop.permute.xlu0 %1445
    %v1448 = vsub.f32 %v1443, %v1446
    %v1449 = vmul.f32 %v1440, %v1279
    %v1450 = vmul.f32 %v1440, %v1283
    %1452 = vrot.lane.b32.xlu0 %v1450, 96
    %v1453 = vpop.permute.xlu0 %1452
    %v1455 = vadd.f32 %v1449, %v1453
    %v1456 = vmul.f32 %v1448, %v1274
    %v1457 = vadd.f32 %v1455, %v1456
    %1458 = vst.msk [vmem:[#allocation2] sm:$0xff] %vm70, %v1457
    %s1459 = scalar_lea.vmem [#allocation6], 32
    %1460 = vst.msk [vmem:[%s1459] sm:$0xff] %vm70, %v1457
    %s1461 = scalar_lea.vmem %s0, 40
    %v1462 = vld [vmem:[%s1461] sm:$0xff]
    %v1463 = vld [vmem:[#allocation2] sm:$0xff]
    %v1465 = vsel %vm70, %v1463, 0
    %1467 = vmatprep.subr.mxu0 0.0
    %1468 = vmatpush1.msra.mxu0 %v46
    %1469 = vmatprep.subr.mxu0 0.0
    %1470 = vmatpush1.msra.mxu0 %v47
    %1471 = vmatprep.subr.mxu0 0.0
    %1472 = vmatpush1.msra.mxu0 %v48
    %1473 = vmatprep.subr.mxu0 0.0
    %1474 = vmatpush1.msra.mxu0 %v49
    %1475 = vmatprep.subr.mxu0 0.0
    %1476 = vmatpush1.msra.mxu0 0.0
    %1477 = vmatprep.subr.mxu0 0.0
    %1478 = vmatpush1.msra.mxu0 0.0
    %1479 = vmatprep.subr.mxu0 0.0
    %1480 = vmatpush1.msra.mxu0 0.0
    %1481 = vmatprep.subr.mxu0 0.0
    %1482 = vmatpush1.msra.mxu0 0.0
    %1483 = vmatprep.subr.mxu0 0.0
    %1484 = vmatpush1.msra.mxu0 0.0
    %1485 = vmatprep.subr.mxu0 0.0
    %1486 = vmatpush1.msra.mxu0 0.0
    %1487 = vmatprep.subr.mxu0 0.0
    %1488 = vmatpush1.msra.mxu0 0.0
    %1489 = vmatprep.subr.mxu0 0.0
    %1490 = vmatpush1.msra.mxu0 0.0
    %1491 = vmatprep.subr.mxu0 0.0
    %1492 = vmatpush1.msra.mxu0 0.0
    %1493 = vmatprep.subr.mxu0 0.0
    %1494 = vmatpush1.msra.mxu0 0.0
    %1495 = vmatprep.subr.mxu0 0.0
    %1496 = vmatpush1.msra.mxu0 0.0
    %1497 = vmatprep.subr.mxu0 0.0
    %1498 = vmatpush1.msra.mxu0 0.0
    %1499 = vmatprep.subr.mxu0 0.0
    %1500 = vmatpush1.msra.mxu0 0.0
    %1501 = vmatprep.subr.mxu0 0.0
    %1502 = vmatpush1.msra.mxu0 0.0
    %1503 = vmatprep.subr.mxu0 0.0
    %1504 = vmatpush1.msra.mxu0 0.0
    %1505 = vmatprep.subr.mxu0 0.0
    %1506 = vmatpush1.msra.mxu0 0.0
    %1507 = vmatprep.subr.mxu0 0.0
    %1508 = vmatpush1.msra.mxu0 0.0
    %1509 = vmatprep.subr.mxu0 0.0
    %1510 = vmatpush1.msra.mxu0 0.0
    %1511 = vmatprep.subr.mxu0 0.0
    %1512 = vmatpush1.msra.mxu0 0.0
    %1513 = vmatprep.subr.mxu0 0.0
    %1514 = vmatpush1.msra.mxu0 0.0
    %1515 = vmatprep.subr.mxu0 0.0
    %1516 = vmatpush1.msra.mxu0 0.0
    %1517 = vmatprep.subr.mxu0 0.0
    %1518 = vmatpush1.msra.mxu0 0.0
    %1519 = vmatprep.subr.mxu0 0.0
    %1520 = vmatpush1.msra.mxu0 0.0
    %1521 = vmatprep.subr.mxu0 0.0
    %1522 = vmatpush1.msra.mxu0 0.0
    %1523 = vmatprep.subr.mxu0 0.0
    %1524 = vmatpush1.msra.mxu0 0.0
    %1525 = vmatprep.subr.mxu0 0.0
    %1526 = vmatpush1.msra.mxu0 0.0
    %1527 = vmatprep.subr.mxu0 0.0
    %1528 = vmatpush1.msra.mxu0 0.0
    %1529 = vmatprep.subr.mxu0 0.0
    %1530 = vmatpush1.msra.mxu0 0.0
    %1531 = vmatprep.mubr.f32.mxu0 0.0
    %1532 = vmatmul.mubr.f32.gmra.mrb[0].mxu0 %v1465
    %v1533 = vpop.f32.mrb[0].mxu0
    %v1534 = vadd.f32 0.0, %v1533
    %v1535 = vpop.f32.mrb[0].mxu0
    %1536 = vdwg.mxu0
    %v1537 = vadd.f32 %v1462, %v1534
    %v1538 = vadd.f32 %v1537, %v149
    %v1539 = vxor.u32 %v1538, 2147483648
    %v1540 = vmul.f32 %v1539, 1.442695
    %v1541 = vpow.pop %v1540
    %v1542 = vadd.f32 %v1541, 1.0
    %v1543 = vrcp.pop %v1542
    %v1544 = vmul.f32 1.0, %v1543
    %v1545 = vtanh.pop %v1538
    %1547 = vrot.lane.b32.xlu0 %v1545, 96
    %v1548 = vpop.permute.xlu0 %1547
    %v1550 = vmul.f32 %v1544, %v1548
    %v1551 = vtanh.pop %v1462
    %v1552 = vtanh.pop %v1534
    %1554 = vrot.lane.b32.xlu0 %v1551, 64
    %v1555 = vpop.permute.xlu0 %1554
    %1558 = vrot.lane.b32.xlu0 %v1552, 96
    %v1559 = vpop.permute.xlu0 %1558
    %1562 = vrot.lane.b32.xlu0 %v1550, 64
    %v1563 = vpop.permute.xlu0 %1562
    %v1565 = vsel %vm70, %v1555, %v1559
    %v1566 = vsel %vm179, %v1565, %v1563
    %v1568 = vsel %vm187, %v1566, 0
    %1570 = vmatprep.subr.mxu0 0.0
    %1571 = vmatpush1.msra.mxu0 %v50
    %1572 = vmatprep.subr.mxu0 0.0
    %1573 = vmatpush1.msra.mxu0 %v51
    %1574 = vmatprep.subr.mxu0 0.0
    %1575 = vmatpush1.msra.mxu0 %v52
    %1576 = vmatprep.subr.mxu0 0.0
    %1577 = vmatpush1.msra.mxu0 %v53
    %1578 = vmatprep.subr.mxu0 0.0
    %1579 = vmatpush1.msra.mxu0 %v54
    %1580 = vmatprep.subr.mxu0 0.0
    %1581 = vmatpush1.msra.mxu0 %v55
    %1582 = vmatprep.subr.mxu0 0.0
    %1583 = vmatpush1.msra.mxu0 %v56
    %1584 = vmatprep.subr.mxu0 0.0
    %1585 = vmatpush1.msra.mxu0 %v57
    %1586 = vmatprep.subr.mxu0 0.0
    %1587 = vmatpush1.msra.mxu0 %v58
    %1588 = vmatprep.subr.mxu0 0.0
    %1589 = vmatpush1.msra.mxu0 %v59
    %1590 = vmatprep.subr.mxu0 0.0
    %1591 = vmatpush1.msra.mxu0 %v60
    %1592 = vmatprep.subr.mxu0 0.0
    %1593 = vmatpush1.msra.mxu0 %v61
    %1594 = vmatprep.subr.mxu0 0.0
    %1595 = vmatpush1.msra.mxu0 0.0
    %1596 = vmatprep.subr.mxu0 0.0
    %1597 = vmatpush1.msra.mxu0 0.0
    %1598 = vmatprep.subr.mxu0 0.0
    %1599 = vmatpush1.msra.mxu0 0.0
    %1600 = vmatprep.subr.mxu0 0.0
    %1601 = vmatpush1.msra.mxu0 0.0
    %1602 = vmatprep.subr.mxu0 0.0
    %1603 = vmatpush1.msra.mxu0 0.0
    %1604 = vmatprep.subr.mxu0 0.0
    %1605 = vmatpush1.msra.mxu0 0.0
    %1606 = vmatprep.subr.mxu0 0.0
    %1607 = vmatpush1.msra.mxu0 0.0
    %1608 = vmatprep.subr.mxu0 0.0
    %1609 = vmatpush1.msra.mxu0 0.0
    %1610 = vmatprep.subr.mxu0 0.0
    %1611 = vmatpush1.msra.mxu0 0.0
    %1612 = vmatprep.subr.mxu0 0.0
    %1613 = vmatpush1.msra.mxu0 0.0
    %1614 = vmatprep.subr.mxu0 0.0
    %1615 = vmatpush1.msra.mxu0 0.0
    %1616 = vmatprep.subr.mxu0 0.0
    %1617 = vmatpush1.msra.mxu0 0.0
    %1618 = vmatprep.subr.mxu0 0.0
    %1619 = vmatpush1.msra.mxu0 0.0
    %1620 = vmatprep.subr.mxu0 0.0
    %1621 = vmatpush1.msra.mxu0 0.0
    %1622 = vmatprep.subr.mxu0 0.0
    %1623 = vmatpush1.msra.mxu0 0.0
    %1624 = vmatprep.subr.mxu0 0.0
    %1625 = vmatpush1.msra.mxu0 0.0
    %1626 = vmatprep.subr.mxu0 0.0
    %1627 = vmatpush1.msra.mxu0 0.0
    %1628 = vmatprep.subr.mxu0 0.0
    %1629 = vmatpush1.msra.mxu0 0.0
    %1630 = vmatprep.subr.mxu0 0.0
    %1631 = vmatpush1.msra.mxu0 0.0
    %1632 = vmatprep.subr.mxu0 0.0
    %1633 = vmatpush1.msra.mxu0 0.0
    %1634 = vmatprep.mubr.f32.mxu0 0.0
    %1635 = vmatmul.mubr.f32.gmra.mrb[0].mxu0 %v1568
    %v1636 = vpop.f32.mrb[0].mxu0
    %v1637 = vadd.f32 %v185, %v1636
    %v1638 = vpop.f32.mrb[0].mxu0
    %1639 = vdwg.mxu0
    %v1640 = vxor.u32 %v1637, 2147483648
    %v1641 = vmul.f32 %v1640, 1.442695
    %v1642 = vpow.pop %v1641
    %v1643 = vadd.f32 %v1642, 1.0
    %v1644 = vrcp.pop %v1643
    %v1645 = vmul.f32 1.0, %v1644
    %v1647 = vsel %vm70, %v1645, 0
    %1649 = vmatprep.subr.mxu0 0.0
    %1650 = vmatpush1.msra.mxu0 %v62
    %1651 = vmatprep.subr.mxu0 0.0
    %1652 = vmatpush1.msra.mxu0 %v63
    %1653 = vmatprep.subr.mxu0 0.0
    %1654 = vmatpush1.msra.mxu0 %v64
    %1655 = vmatprep.subr.mxu0 0.0
    %1656 = vmatpush1.msra.mxu0 %v65
    %1657 = vmatprep.subr.mxu0 0.0
    %1658 = vmatpush1.msra.mxu0 0.0
    %1659 = vmatprep.subr.mxu0 0.0
    %1660 = vmatpush1.msra.mxu0 0.0
    %1661 = vmatprep.subr.mxu0 0.0
    %1662 = vmatpush1.msra.mxu0 0.0
    %1663 = vmatprep.subr.mxu0 0.0
    %1664 = vmatpush1.msra.mxu0 0.0
    %1665 = vmatprep.subr.mxu0 0.0
    %1666 = vmatpush1.msra.mxu0 0.0
    %1667 = vmatprep.subr.mxu0 0.0
    %1668 = vmatpush1.msra.mxu0 0.0
    %1669 = vmatprep.subr.mxu0 0.0
    %1670 = vmatpush1.msra.mxu0 0.0
    %1671 = vmatprep.subr.mxu0 0.0
    %1672 = vmatpush1.msra.mxu0 0.0
    %1673 = vmatprep.subr.mxu0 0.0
    %1674 = vmatpush1.msra.mxu0 0.0
    %1675 = vmatprep.subr.mxu0 0.0
    %1676 = vmatpush1.msra.mxu0 0.0
    %1677 = vmatprep.subr.mxu0 0.0
    %1678 = vmatpush1.msra.mxu0 0.0
    %1679 = vmatprep.subr.mxu0 0.0
    %1680 = vmatpush1.msra.mxu0 0.0
    %1681 = vmatprep.subr.mxu0 0.0
    %1682 = vmatpush1.msra.mxu0 0.0
    %1683 = vmatprep.subr.mxu0 0.0
    %1684 = vmatpush1.msra.mxu0 0.0
    %1685 = vmatprep.subr.mxu0 0.0
    %1686 = vmatpush1.msra.mxu0 0.0
    %1687 = vmatprep.subr.mxu0 0.0
    %1688 = vmatpush1.msra.mxu0 0.0
    %1689 = vmatprep.subr.mxu0 0.0
    %1690 = vmatpush1.msra.mxu0 0.0
    %1691 = vmatprep.subr.mxu0 0.0
    %1692 = vmatpush1.msra.mxu0 0.0
    %1693 = vmatprep.subr.mxu0 0.0
    %1694 = vmatpush1.msra.mxu0 0.0
    %1695 = vmatprep.subr.mxu0 0.0
    %1696 = vmatpush1.msra.mxu0 0.0
    %1697 = vmatprep.subr.mxu0 0.0
    %1698 = vmatpush1.msra.mxu0 0.0
    %1699 = vmatprep.subr.mxu0 0.0
    %1700 = vmatpush1.msra.mxu0 0.0
    %1701 = vmatprep.subr.mxu0 0.0
    %1702 = vmatpush1.msra.mxu0 0.0
    %1703 = vmatprep.subr.mxu0 0.0
    %1704 = vmatpush1.msra.mxu0 0.0
    %1705 = vmatprep.subr.mxu0 0.0
    %1706 = vmatpush1.msra.mxu0 0.0
    %1707 = vmatprep.subr.mxu0 0.0
    %1708 = vmatpush1.msra.mxu0 0.0
    %1709 = vmatprep.subr.mxu0 0.0
    %1710 = vmatpush1.msra.mxu0 0.0
    %1711 = vmatprep.subr.mxu0 0.0
    %1712 = vmatpush1.msra.mxu0 0.0
    %1713 = vmatprep.mubr.f32.mxu0 0.0
    %1714 = vmatmul.mubr.f32.gmra.mrb[0].mxu0 %v1647
    %v1715 = vpop.f32.mrb[0].mxu0
    %v1716 = vadd.f32 0.0, %v1715
    %v1717 = vpop.f32.mrb[0].mxu0
    %1718 = vdwg.mxu0
    %v1719 = vsub.f32 1.0, %v1716
    %1721 = vrot.lane.b32.xlu0 %v1716, 96
    %v1722 = vpop.permute.xlu0 %1721
    %v1724 = vsub.f32 %v1719, %v1722
    %v1725 = vmul.f32 %v1716, %v1555
    %v1726 = vmul.f32 %v1716, %v1559
    %1728 = vrot.lane.b32.xlu0 %v1726, 96
    %v1729 = vpop.permute.xlu0 %1728
    %v1731 = vadd.f32 %v1725, %v1729
    %v1732 = vmul.f32 %v1724, %v1550
    %v1733 = vadd.f32 %v1731, %v1732
    %1734 = vst.msk [vmem:[#allocation2] sm:$0xff] %vm70, %v1733
    %s1735 = scalar_lea.vmem [#allocation6], 40
    %1736 = vst.msk [vmem:[%s1735] sm:$0xff] %vm70, %v1733
    %s1737 = scalar_lea.vmem %s0, 48
    %v1738 = vld [vmem:[%s1737] sm:$0xff]
    %v1739 = vld [vmem:[#allocation2] sm:$0xff]
    %v1741 = vsel %vm70, %v1739, 0
    %1743 = vmatprep.subr.mxu0 0.0
    %1744 = vmatpush1.msra.mxu0 %v46
    %1745 = vmatprep.subr.mxu0 0.0
    %1746 = vmatpush1.msra.mxu0 %v47
    %1747 = vmatprep.subr.mxu0 0.0
    %1748 = vmatpush1.msra.mxu0 %v48
    %1749 = vmatprep.subr.mxu0 0.0
    %1750 = vmatpush1.msra.mxu0 %v49
    %1751 = vmatprep.subr.mxu0 0.0
    %1752 = vmatpush1.msra.mxu0 0.0
    %1753 = vmatprep.subr.mxu0 0.0
    %1754 = vmatpush1.msra.mxu0 0.0
    %1755 = vmatprep.subr.mxu0 0.0
    %1756 = vmatpush1.msra.mxu0 0.0
    %1757 = vmatprep.subr.mxu0 0.0
    %1758 = vmatpush1.msra.mxu0 0.0
    %1759 = vmatprep.subr.mxu0 0.0
    %1760 = vmatpush1.msra.mxu0 0.0
    %1761 = vmatprep.subr.mxu0 0.0
    %1762 = vmatpush1.msra.mxu0 0.0
    %1763 = vmatprep.subr.mxu0 0.0
    %1764 = vmatpush1.msra.mxu0 0.0
    %1765 = vmatprep.subr.mxu0 0.0
    %1766 = vmatpush1.msra.mxu0 0.0
    %1767 = vmatprep.subr.mxu0 0.0
    %1768 = vmatpush1.msra.mxu0 0.0
    %1769 = vmatprep.subr.mxu0 0.0
    %1770 = vmatpush1.msra.mxu0 0.0
    %1771 = vmatprep.subr.mxu0 0.0
    %1772 = vmatpush1.msra.mxu0 0.0
    %1773 = vmatprep.subr.mxu0 0.0
    %1774 = vmatpush1.msra.mxu0 0.0
    %1775 = vmatprep.subr.mxu0 0.0
    %1776 = vmatpush1.msra.mxu0 0.0
    %1777 = vmatprep.subr.mxu0 0.0
    %1778 = vmatpush1.msra.mxu0 0.0
    %1779 = vmatprep.subr.mxu0 0.0
    %1780 = vmatpush1.msra.mxu0 0.0
    %1781 = vmatprep.subr.mxu0 0.0
    %1782 = vmatpush1.msra.mxu0 0.0
    %1783 = vmatprep.subr.mxu0 0.0
    %1784 = vmatpush1.msra.mxu0 0.0
    %1785 = vmatprep.subr.mxu0 0.0
    %1786 = vmatpush1.msra.mxu0 0.0
    %1787 = vmatprep.subr.mxu0 0.0
    %1788 = vmatpush1.msra.mxu0 0.0
    %1789 = vmatprep.subr.mxu0 0.0
    %1790 = vmatpush1.msra.mxu0 0.0
    %1791 = vmatprep.subr.mxu0 0.0
    %1792 = vmatpush1.msra.mxu0 0.0
    %1793 = vmatprep.subr.mxu0 0.0
    %1794 = vmatpush1.msra.mxu0 0.0
    %1795 = vmatprep.subr.mxu0 0.0
    %1796 = vmatpush1.msra.mxu0 0.0
    %1797 = vmatprep.subr.mxu0 0.0
    %1798 = vmatpush1.msra.mxu0 0.0
    %1799 = vmatprep.subr.mxu0 0.0
    %1800 = vmatpush1.msra.mxu0 0.0
    %1801 = vmatprep.subr.mxu0 0.0
    %1802 = vmatpush1.msra.mxu0 0.0
    %1803 = vmatprep.subr.mxu0 0.0
    %1804 = vmatpush1.msra.mxu0 0.0
    %1805 = vmatprep.subr.mxu0 0.0
    %1806 = vmatpush1.msra.mxu0 0.0
    %1807 = vmatprep.mubr.f32.mxu0 0.0
    %1808 = vmatmul.mubr.f32.gmra.mrb[0].mxu0 %v1741
    %v1809 = vpop.f32.mrb[0].mxu0
    %v1810 = vadd.f32 0.0, %v1809
    %v1811 = vpop.f32.mrb[0].mxu0
    %1812 = vdwg.mxu0
    %v1813 = vadd.f32 %v1738, %v1810
    %v1814 = vadd.f32 %v1813, %v149
    %v1815 = vxor.u32 %v1814, 2147483648
    %v1816 = vmul.f32 %v1815, 1.442695
    %v1817 = vpow.pop %v1816
    %v1818 = vadd.f32 %v1817, 1.0
    %v1819 = vrcp.pop %v1818
    %v1820 = vmul.f32 1.0, %v1819
    %v1821 = vtanh.pop %v1814
    %1823 = vrot.lane.b32.xlu0 %v1821, 96
    %v1824 = vpop.permute.xlu0 %1823
    %v1826 = vmul.f32 %v1820, %v1824
    %v1827 = vtanh.pop %v1738
    %v1828 = vtanh.pop %v1810
    %1830 = vrot.lane.b32.xlu0 %v1827, 64
    %v1831 = vpop.permute.xlu0 %1830
    %1834 = vrot.lane.b32.xlu0 %v1828, 96
    %v1835 = vpop.permute.xlu0 %1834
    %1838 = vrot.lane.b32.xlu0 %v1826, 64
    %v1839 = vpop.permute.xlu0 %1838
    %v1841 = vsel %vm70, %v1831, %v1835
    %v1842 = vsel %vm179, %v1841, %v1839
    %v1844 = vsel %vm187, %v1842, 0
    %1846 = vmatprep.subr.mxu0 0.0
    %1847 = vmatpush1.msra.mxu0 %v50
    %1848 = vmatprep.subr.mxu0 0.0
    %1849 = vmatpush1.msra.mxu0 %v51
    %1850 = vmatprep.subr.mxu0 0.0
    %1851 = vmatpush1.msra.mxu0 %v52
    %1852 = vmatprep.subr.mxu0 0.0
    %1853 = vmatpush1.msra.mxu0 %v53
    %1854 = vmatprep.subr.mxu0 0.0
    %1855 = vmatpush1.msra.mxu0 %v54
    %1856 = vmatprep.subr.mxu0 0.0
    %1857 = vmatpush1.msra.mxu0 %v55
    %1858 = vmatprep.subr.mxu0 0.0
    %1859 = vmatpush1.msra.mxu0 %v56
    %1860 = vmatprep.subr.mxu0 0.0
    %1861 = vmatpush1.msra.mxu0 %v57
    %1862 = vmatprep.subr.mxu0 0.0
    %1863 = vmatpush1.msra.mxu0 %v58
    %1864 = vmatprep.subr.mxu0 0.0
    %1865 = vmatpush1.msra.mxu0 %v59
    %1866 = vmatprep.subr.mxu0 0.0
    %1867 = vmatpush1.msra.mxu0 %v60
    %1868 = vmatprep.subr.mxu0 0.0
    %1869 = vmatpush1.msra.mxu0 %v61
    %1870 = vmatprep.subr.mxu0 0.0
    %1871 = vmatpush1.msra.mxu0 0.0
    %1872 = vmatprep.subr.mxu0 0.0
    %1873 = vmatpush1.msra.mxu0 0.0
    %1874 = vmatprep.subr.mxu0 0.0
    %1875 = vmatpush1.msra.mxu0 0.0
    %1876 = vmatprep.subr.mxu0 0.0
    %1877 = vmatpush1.msra.mxu0 0.0
    %1878 = vmatprep.subr.mxu0 0.0
    %1879 = vmatpush1.msra.mxu0 0.0
    %1880 = vmatprep.subr.mxu0 0.0
    %1881 = vmatpush1.msra.mxu0 0.0
    %1882 = vmatprep.subr.mxu0 0.0
    %1883 = vmatpush1.msra.mxu0 0.0
    %1884 = vmatprep.subr.mxu0 0.0
    %1885 = vmatpush1.msra.mxu0 0.0
    %1886 = vmatprep.subr.mxu0 0.0
    %1887 = vmatpush1.msra.mxu0 0.0
    %1888 = vmatprep.subr.mxu0 0.0
    %1889 = vmatpush1.msra.mxu0 0.0
    %1890 = vmatprep.subr.mxu0 0.0
    %1891 = vmatpush1.msra.mxu0 0.0
    %1892 = vmatprep.subr.mxu0 0.0
    %1893 = vmatpush1.msra.mxu0 0.0
    %1894 = vmatprep.subr.mxu0 0.0
    %1895 = vmatpush1.msra.mxu0 0.0
    %1896 = vmatprep.subr.mxu0 0.0
    %1897 = vmatpush1.msra.mxu0 0.0
    %1898 = vmatprep.subr.mxu0 0.0
    %1899 = vmatpush1.msra.mxu0 0.0
    %1900 = vmatprep.subr.mxu0 0.0
    %1901 = vmatpush1.msra.mxu0 0.0
    %1902 = vmatprep.subr.mxu0 0.0
    %1903 = vmatpush1.msra.mxu0 0.0
    %1904 = vmatprep.subr.mxu0 0.0
    %1905 = vmatpush1.msra.mxu0 0.0
    %1906 = vmatprep.subr.mxu0 0.0
    %1907 = vmatpush1.msra.mxu0 0.0
    %1908 = vmatprep.subr.mxu0 0.0
    %1909 = vmatpush1.msra.mxu0 0.0
    %1910 = vmatprep.mubr.f32.mxu0 0.0
    %1911 = vmatmul.mubr.f32.gmra.mrb[0].mxu0 %v1844
    %v1912 = vpop.f32.mrb[0].mxu0
    %v1913 = vadd.f32 %v185, %v1912
    %v1914 = vpop.f32.mrb[0].mxu0
    %1915 = vdwg.mxu0
    %v1916 = vxor.u32 %v1913, 2147483648
    %v1917 = vmul.f32 %v1916, 1.442695
    %v1918 = vpow.pop %v1917
    %v1919 = vadd.f32 %v1918, 1.0
    %v1920 = vrcp.pop %v1919
    %v1921 = vmul.f32 1.0, %v1920
    %v1923 = vsel %vm70, %v1921, 0
    %1925 = vmatprep.subr.mxu0 0.0
    %1926 = vmatpush1.msra.mxu0 %v62
    %1927 = vmatprep.subr.mxu0 0.0
    %1928 = vmatpush1.msra.mxu0 %v63
    %1929 = vmatprep.subr.mxu0 0.0
    %1930 = vmatpush1.msra.mxu0 %v64
    %1931 = vmatprep.subr.mxu0 0.0
    %1932 = vmatpush1.msra.mxu0 %v65
    %1933 = vmatprep.subr.mxu0 0.0
    %1934 = vmatpush1.msra.mxu0 0.0
    %1935 = vmatprep.subr.mxu0 0.0
    %1936 = vmatpush1.msra.mxu0 0.0
    %1937 = vmatprep.subr.mxu0 0.0
    %1938 = vmatpush1.msra.mxu0 0.0
    %1939 = vmatprep.subr.mxu0 0.0
    %1940 = vmatpush1.msra.mxu0 0.0
    %1941 = vmatprep.subr.mxu0 0.0
    %1942 = vmatpush1.msra.mxu0 0.0
    %1943 = vmatprep.subr.mxu0 0.0
    %1944 = vmatpush1.msra.mxu0 0.0
    %1945 = vmatprep.subr.mxu0 0.0
    %1946 = vmatpush1.msra.mxu0 0.0
    %1947 = vmatprep.subr.mxu0 0.0
    %1948 = vmatpush1.msra.mxu0 0.0
    %1949 = vmatprep.subr.mxu0 0.0
    %1950 = vmatpush1.msra.mxu0 0.0
    %1951 = vmatprep.subr.mxu0 0.0
    %1952 = vmatpush1.msra.mxu0 0.0
    %1953 = vmatprep.subr.mxu0 0.0
    %1954 = vmatpush1.msra.mxu0 0.0
    %1955 = vmatprep.subr.mxu0 0.0
    %1956 = vmatpush1.msra.mxu0 0.0
    %1957 = vmatprep.subr.mxu0 0.0
    %1958 = vmatpush1.msra.mxu0 0.0
    %1959 = vmatprep.subr.mxu0 0.0
    %1960 = vmatpush1.msra.mxu0 0.0
    %1961 = vmatprep.subr.mxu0 0.0
    %1962 = vmatpush1.msra.mxu0 0.0
    %1963 = vmatprep.subr.mxu0 0.0
    %1964 = vmatpush1.msra.mxu0 0.0
    %1965 = vmatprep.subr.mxu0 0.0
    %1966 = vmatpush1.msra.mxu0 0.0
    %1967 = vmatprep.subr.mxu0 0.0
    %1968 = vmatpush1.msra.mxu0 0.0
    %1969 = vmatprep.subr.mxu0 0.0
    %1970 = vmatpush1.msra.mxu0 0.0
    %1971 = vmatprep.subr.mxu0 0.0
    %1972 = vmatpush1.msra.mxu0 0.0
    %1973 = vmatprep.subr.mxu0 0.0
    %1974 = vmatpush1.msra.mxu0 0.0
    %1975 = vmatprep.subr.mxu0 0.0
    %1976 = vmatpush1.msra.mxu0 0.0
    %1977 = vmatprep.subr.mxu0 0.0
    %1978 = vmatpush1.msra.mxu0 0.0
    %1979 = vmatprep.subr.mxu0 0.0
    %1980 = vmatpush1.msra.mxu0 0.0
    %1981 = vmatprep.subr.mxu0 0.0
    %1982 = vmatpush1.msra.mxu0 0.0
    %1983 = vmatprep.subr.mxu0 0.0
    %1984 = vmatpush1.msra.mxu0 0.0
    %1985 = vmatprep.subr.mxu0 0.0
    %1986 = vmatpush1.msra.mxu0 0.0
    %1987 = vmatprep.subr.mxu0 0.0
    %1988 = vmatpush1.msra.mxu0 0.0
    %1989 = vmatprep.mubr.f32.mxu0 0.0
    %1990 = vmatmul.mubr.f32.gmra.mrb[0].mxu0 %v1923
    %v1991 = vpop.f32.mrb[0].mxu0
    %v1992 = vadd.f32 0.0, %v1991
    %v1993 = vpop.f32.mrb[0].mxu0
    %1994 = vdwg.mxu0
    %v1995 = vsub.f32 1.0, %v1992
    %1997 = vrot.lane.b32.xlu0 %v1992, 96
    %v1998 = vpop.permute.xlu0 %1997
    %v2000 = vsub.f32 %v1995, %v1998
    %v2001 = vmul.f32 %v1992, %v1831
    %v2002 = vmul.f32 %v1992, %v1835
    %2004 = vrot.lane.b32.xlu0 %v2002, 96
    %v2005 = vpop.permute.xlu0 %2004
    %v2007 = vadd.f32 %v2001, %v2005
    %v2008 = vmul.f32 %v2000, %v1826
    %v2009 = vadd.f32 %v2007, %v2008
    %2010 = vst.msk [vmem:[#allocation2] sm:$0xff] %vm70, %v2009
    %s2011 = scalar_lea.vmem [#allocation6], 48
    %2012 = vst.msk [vmem:[%s2011] sm:$0xff] %vm70, %v2009
    %s2013 = scalar_lea.vmem %s0, 56
    %v2014 = vld [vmem:[%s2013] sm:$0xff]
    %v2015 = vld [vmem:[#allocation2] sm:$0xff]
    %v2017 = vsel %vm70, %v2015, 0
    %2019 = vmatprep.subr.mxu0 0.0
    %2020 = vmatpush1.msra.mxu0 %v46
    %2021 = vmatprep.subr.mxu0 0.0
    %2022 = vmatpush1.msra.mxu0 %v47
    %2023 = vmatprep.subr.mxu0 0.0
    %2024 = vmatpush1.msra.mxu0 %v48
    %2025 = vmatprep.subr.mxu0 0.0
    %2026 = vmatpush1.msra.mxu0 %v49
    %2027 = vmatprep.subr.mxu0 0.0
    %2028 = vmatpush1.msra.mxu0 0.0
    %2029 = vmatprep.subr.mxu0 0.0
    %2030 = vmatpush1.msra.mxu0 0.0
    %2031 = vmatprep.subr.mxu0 0.0
    %2032 = vmatpush1.msra.mxu0 0.0
    %2033 = vmatprep.subr.mxu0 0.0
    %2034 = vmatpush1.msra.mxu0 0.0
    %2035 = vmatprep.subr.mxu0 0.0
    %2036 = vmatpush1.msra.mxu0 0.0
    %2037 = vmatprep.subr.mxu0 0.0
    %2038 = vmatpush1.msra.mxu0 0.0
    %2039 = vmatprep.subr.mxu0 0.0
    %2040 = vmatpush1.msra.mxu0 0.0
    %2041 = vmatprep.subr.mxu0 0.0
    %2042 = vmatpush1.msra.mxu0 0.0
    %2043 = vmatprep.subr.mxu0 0.0
    %2044 = vmatpush1.msra.mxu0 0.0
    %2045 = vmatprep.subr.mxu0 0.0
    %2046 = vmatpush1.msra.mxu0 0.0
    %2047 = vmatprep.subr.mxu0 0.0
    %2048 = vmatpush1.msra.mxu0 0.0
    %2049 = vmatprep.subr.mxu0 0.0
    %2050 = vmatpush1.msra.mxu0 0.0
    %2051 = vmatprep.subr.mxu0 0.0
    %2052 = vmatpush1.msra.mxu0 0.0
    %2053 = vmatprep.subr.mxu0 0.0
    %2054 = vmatpush1.msra.mxu0 0.0
    %2055 = vmatprep.subr.mxu0 0.0
    %2056 = vmatpush1.msra.mxu0 0.0
    %2057 = vmatprep.subr.mxu0 0.0
    %2058 = vmatpush1.msra.mxu0 0.0
    %2059 = vmatprep.subr.mxu0 0.0
    %2060 = vmatpush1.msra.mxu0 0.0
    %2061 = vmatprep.subr.mxu0 0.0
    %2062 = vmatpush1.msra.mxu0 0.0
    %2063 = vmatprep.subr.mxu0 0.0
    %2064 = vmatpush1.msra.mxu0 0.0
    %2065 = vmatprep.subr.mxu0 0.0
    %2066 = vmatpush1.msra.mxu0 0.0
    %2067 = vmatprep.subr.mxu0 0.0
    %2068 = vmatpush1.msra.mxu0 0.0
    %2069 = vmatprep.subr.mxu0 0.0
    %2070 = vmatpush1.msra.mxu0 0.0
    %2071 = vmatprep.subr.mxu0 0.0
    %2072 = vmatpush1.msra.mxu0 0.0
    %2073 = vmatprep.subr.mxu0 0.0
    %2074 = vmatpush1.msra.mxu0 0.0
    %2075 = vmatprep.subr.mxu0 0.0
    %2076 = vmatpush1.msra.mxu0 0.0
    %2077 = vmatprep.subr.mxu0 0.0
    %2078 = vmatpush1.msra.mxu0 0.0
    %2079 = vmatprep.subr.mxu0 0.0
    %2080 = vmatpush1.msra.mxu0 0.0
    %2081 = vmatprep.subr.mxu0 0.0
    %2082 = vmatpush1.msra.mxu0 0.0
    %2083 = vmatprep.mubr.f32.mxu0 0.0
    %2084 = vmatmul.mubr.f32.gmra.mrb[0].mxu0 %v2017
    %v2085 = vpop.f32.mrb[0].mxu0
    %v2086 = vadd.f32 0.0, %v2085
    %v2087 = vpop.f32.mrb[0].mxu0
    %2088 = vdwg.mxu0
    %v2089 = vadd.f32 %v2014, %v2086
    %v2090 = vadd.f32 %v2089, %v149
    %v2091 = vxor.u32 %v2090, 2147483648
    %v2092 = vmul.f32 %v2091, 1.442695
    %v2093 = vpow.pop %v2092
    %v2094 = vadd.f32 %v2093, 1.0
    %v2095 = vrcp.pop %v2094
    %v2096 = vmul.f32 1.0, %v2095
    %v2097 = vtanh.pop %v2090
    %2099 = vrot.lane.b32.xlu0 %v2097, 96
    %v2100 = vpop.permute.xlu0 %2099
    %v2102 = vmul.f32 %v2096, %v2100
    %v2103 = vtanh.pop %v2014
    %v2104 = vtanh.pop %v2086
    %2106 = vrot.lane.b32.xlu0 %v2103, 64
    %v2107 = vpop.permute.xlu0 %2106
    %2110 = vrot.lane.b32.xlu0 %v2104, 96
    %v2111 = vpop.permute.xlu0 %2110
    %2114 = vrot.lane.b32.xlu0 %v2102, 64
    %v2115 = vpop.permute.xlu0 %2114
    %v2117 = vsel %vm70, %v2107, %v2111
    %v2118 = vsel %vm179, %v2117, %v2115
    %v2120 = vsel %vm187, %v2118, 0
    %2122 = vmatprep.subr.mxu0 0.0
    %2123 = vmatpush1.msra.mxu0 %v50
    %2124 = vmatprep.subr.mxu0 0.0
    %2125 = vmatpush1.msra.mxu0 %v51
    %2126 = vmatprep.subr.mxu0 0.0
    %2127 = vmatpush1.msra.mxu0 %v52
    %2128 = vmatprep.subr.mxu0 0.0
    %2129 = vmatpush1.msra.mxu0 %v53
    %2130 = vmatprep.subr.mxu0 0.0
    %2131 = vmatpush1.msra.mxu0 %v54
    %2132 = vmatprep.subr.mxu0 0.0
    %2133 = vmatpush1.msra.mxu0 %v55
    %2134 = vmatprep.subr.mxu0 0.0
    %2135 = vmatpush1.msra.mxu0 %v56
    %2136 = vmatprep.subr.mxu0 0.0
    %2137 = vmatpush1.msra.mxu0 %v57
    %2138 = vmatprep.subr.mxu0 0.0
    %2139 = vmatpush1.msra.mxu0 %v58
    %2140 = vmatprep.subr.mxu0 0.0
    %2141 = vmatpush1.msra.mxu0 %v59
    %2142 = vmatprep.subr.mxu0 0.0
    %2143 = vmatpush1.msra.mxu0 %v60
    %2144 = vmatprep.subr.mxu0 0.0
    %2145 = vmatpush1.msra.mxu0 %v61
    %2146 = vmatprep.subr.mxu0 0.0
    %2147 = vmatpush1.msra.mxu0 0.0
    %2148 = vmatprep.subr.mxu0 0.0
    %2149 = vmatpush1.msra.mxu0 0.0
    %2150 = vmatprep.subr.mxu0 0.0
    %2151 = vmatpush1.msra.mxu0 0.0
    %2152 = vmatprep.subr.mxu0 0.0
    %2153 = vmatpush1.msra.mxu0 0.0
    %2154 = vmatprep.subr.mxu0 0.0
    %2155 = vmatpush1.msra.mxu0 0.0
    %2156 = vmatprep.subr.mxu0 0.0
    %2157 = vmatpush1.msra.mxu0 0.0
    %2158 = vmatprep.subr.mxu0 0.0
    %2159 = vmatpush1.msra.mxu0 0.0
    %2160 = vmatprep.subr.mxu0 0.0
    %2161 = vmatpush1.msra.mxu0 0.0
    %2162 = vmatprep.subr.mxu0 0.0
    %2163 = vmatpush1.msra.mxu0 0.0
    %2164 = vmatprep.subr.mxu0 0.0
    %2165 = vmatpush1.msra.mxu0 0.0
    %2166 = vmatprep.subr.mxu0 0.0
    %2167 = vmatpush1.msra.mxu0 0.0
    %2168 = vmatprep.subr.mxu0 0.0
    %2169 = vmatpush1.msra.mxu0 0.0
    %2170 = vmatprep.subr.mxu0 0.0
    %2171 = vmatpush1.msra.mxu0 0.0
    %2172 = vmatprep.subr.mxu0 0.0
    %2173 = vmatpush1.msra.mxu0 0.0
    %2174 = vmatprep.subr.mxu0 0.0
    %2175 = vmatpush1.msra.mxu0 0.0
    %2176 = vmatprep.subr.mxu0 0.0
    %2177 = vmatpush1.msra.mxu0 0.0
    %2178 = vmatprep.subr.mxu0 0.0
    %2179 = vmatpush1.msra.mxu0 0.0
    %2180 = vmatprep.subr.mxu0 0.0
    %2181 = vmatpush1.msra.mxu0 0.0
    %2182 = vmatprep.subr.mxu0 0.0
    %2183 = vmatpush1.msra.mxu0 0.0
    %2184 = vmatprep.subr.mxu0 0.0
    %2185 = vmatpush1.msra.mxu0 0.0
    %2186 = vmatprep.mubr.f32.mxu0 0.0
    %2187 = vmatmul.mubr.f32.gmra.mrb[0].mxu0 %v2120
    %v2188 = vpop.f32.mrb[0].mxu0
    %v2189 = vadd.f32 %v185, %v2188
    %v2190 = vpop.f32.mrb[0].mxu0
    %2191 = vdwg.mxu0
    %v2192 = vxor.u32 %v2189, 2147483648
    %v2193 = vmul.f32 %v2192, 1.442695
    %v2194 = vpow.pop %v2193
    %v2195 = vadd.f32 %v2194, 1.0
    %v2196 = vrcp.pop %v2195
    %v2197 = vmul.f32 1.0, %v2196
    %v2199 = vsel %vm70, %v2197, 0
    %2201 = vmatprep.subr.mxu0 0.0
    %2202 = vmatpush1.msra.mxu0 %v62
    %2203 = vmatprep.subr.mxu0 0.0
    %2204 = vmatpush1.msra.mxu0 %v63
    %2205 = vmatprep.subr.mxu0 0.0
    %2206 = vmatpush1.msra.mxu0 %v64
    %2207 = vmatprep.subr.mxu0 0.0
    %2208 = vmatpush1.msra.mxu0 %v65
    %2209 = vmatprep.subr.mxu0 0.0
    %2210 = vmatpush1.msra.mxu0 0.0
    %2211 = vmatprep.subr.mxu0 0.0
    %2212 = vmatpush1.msra.mxu0 0.0
    %2213 = vmatprep.subr.mxu0 0.0
    %2214 = vmatpush1.msra.mxu0 0.0
    %2215 = vmatprep.subr.mxu0 0.0
    %2216 = vmatpush1.msra.mxu0 0.0
    %2217 = vmatprep.subr.mxu0 0.0
    %2218 = vmatpush1.msra.mxu0 0.0
    %2219 = vmatprep.subr.mxu0 0.0
    %2220 = vmatpush1.msra.mxu0 0.0
    %2221 = vmatprep.subr.mxu0 0.0
    %2222 = vmatpush1.msra.mxu0 0.0
    %2223 = vmatprep.subr.mxu0 0.0
    %2224 = vmatpush1.msra.mxu0 0.0
    %2225 = vmatprep.subr.mxu0 0.0
    %2226 = vmatpush1.msra.mxu0 0.0
    %2227 = vmatprep.subr.mxu0 0.0
    %2228 = vmatpush1.msra.mxu0 0.0
    %2229 = vmatprep.subr.mxu0 0.0
    %2230 = vmatpush1.msra.mxu0 0.0
    %2231 = vmatprep.subr.mxu0 0.0
    %2232 = vmatpush1.msra.mxu0 0.0
    %2233 = vmatprep.subr.mxu0 0.0
    %2234 = vmatpush1.msra.mxu0 0.0
    %2235 = vmatprep.subr.mxu0 0.0
    %2236 = vmatpush1.msra.mxu0 0.0
    %2237 = vmatprep.subr.mxu0 0.0
    %2238 = vmatpush1.msra.mxu0 0.0
    %2239 = vmatprep.subr.mxu0 0.0
    %2240 = vmatpush1.msra.mxu0 0.0
    %2241 = vmatprep.subr.mxu0 0.0
    %2242 = vmatpush1.msra.mxu0 0.0
    %2243 = vmatprep.subr.mxu0 0.0
    %2244 = vmatpush1.msra.mxu0 0.0
    %2245 = vmatprep.subr.mxu0 0.0
    %2246 = vmatpush1.msra.mxu0 0.0
    %2247 = vmatprep.subr.mxu0 0.0
    %2248 = vmatpush1.msra.mxu0 0.0
    %2249 = vmatprep.subr.mxu0 0.0
    %2250 = vmatpush1.msra.mxu0 0.0
    %2251 = vmatprep.subr.mxu0 0.0
    %2252 = vmatpush1.msra.mxu0 0.0
    %2253 = vmatprep.subr.mxu0 0.0
    %2254 = vmatpush1.msra.mxu0 0.0
    %2255 = vmatprep.subr.mxu0 0.0
    %2256 = vmatpush1.msra.mxu0 0.0
    %2257 = vmatprep.subr.mxu0 0.0
    %2258 = vmatpush1.msra.mxu0 0.0
    %2259 = vmatprep.subr.mxu0 0.0
    %2260 = vmatpush1.msra.mxu0 0.0
    %2261 = vmatprep.subr.mxu0 0.0
    %2262 = vmatpush1.msra.mxu0 0.0
    %2263 = vmatprep.subr.mxu0 0.0
    %2264 = vmatpush1.msra.mxu0 0.0
    %2265 = vmatprep.mubr.f32.mxu0 0.0
    %2266 = vmatmul.mubr.f32.gmra.mrb[0].mxu0 %v2199
    %v2267 = vpop.f32.mrb[0].mxu0
    %v2268 = vadd.f32 0.0, %v2267
    %v2269 = vpop.f32.mrb[0].mxu0
    %2270 = vdwg.mxu0
    %v2271 = vsub.f32 1.0, %v2268
    %2273 = vrot.lane.b32.xlu0 %v2268, 96
    %v2274 = vpop.permute.xlu0 %2273
    %v2276 = vsub.f32 %v2271, %v2274
    %v2277 = vmul.f32 %v2268, %v2107
    %v2278 = vmul.f32 %v2268, %v2111
    %2280 = vrot.lane.b32.xlu0 %v2278, 96
    %v2281 = vpop.permute.xlu0 %2280
    %v2283 = vadd.f32 %v2277, %v2281
    %v2284 = vmul.f32 %v2276, %v2102
    %v2285 = vadd.f32 %v2283, %v2284
    %2286 = vst.msk [vmem:[#allocation2] sm:$0xff] %vm70, %v2285
    %s2287 = scalar_lea.vmem [#allocation6], 56
    %2288 = vst.msk [vmem:[%s2287] sm:$0xff] %vm70, %v2285
    // Predicated region
    $region38: #{tpu_custom_call.1} parent=1 // pred_check
      _
    $region39: #{tpu_custom_call.1} parent=1 // pred_check_branch
      %2290 = sbr.rel (0) target = $region41
    $region40: #{tpu_custom_call.1} parent=1 // pred_region
      %s2292 = ssub.s32 1024, 1024
      %2293 = vsyncadd [#allocation5], %s2292
      %s2294 = sshll.u32 [#allocation6], 4
      %s2295 = int_to_ptr.vmem [resolvable:$true] %s2294
      %2300 = dma.vmem_to_hbm [thread:$0]  %s2295, 1024, %s7, [#allocation5], 128, 128, 8
    $region41: #{tpu_custom_call.1} parent=1 // pred_fallthru
      _
    // Predicated region
    $region42: #{tpu_custom_call.1} parent=1 // pred_check
      _
    $region43: #{tpu_custom_call.1} parent=1 // pred_check_branch
      %2302 = sbr.rel (0) target = $region45
    $region44: #{tpu_custom_call.1} parent=1 // pred_region
      %2303 = dma.done [#allocation5], 1024
    $region45: #{tpu_custom_call.1} parent=1 // pred_fallthru
      _
    %2304 = vsyncpa [#allocation4], 1
    %2305 = vsyncpa [#allocation5], 1

// kernel: tpu_custom_call.1
$region0: #{tpu_custom_call.1}
  #allocation0 [shape = 'u32[]', space=smem, size = 0x4, offset = 0x4, fixed_abs, tag = 'smem constant byte address 0x4 - core index']
  #allocation1 [shape = 'u32[144,128]{1,0:T(1,128)}', space=vmem, size = 0x12000, scoped, tag = 'internal scratch']
  #allocation2 [shape = 'f32[8,32]{1,0:T(8,128)}', space=vmem, size = 0x1000, scoped, tag = 'scratch operand']
  %s0 = inlined_call_operand.vmem [shape: f32[8,8,96], index: 0, kind: input, shape index: {}]
  %s1 = inlined_call_operand.hbm [shape: f32[8,32], index: 1, kind: input, shape index: {}]
  %s2 = inlined_call_operand.vmem [shape: f32[32,96], index: 2, kind: input, shape index: {}]
  %s3 = inlined_call_operand.vmem [shape: f32[1,64], index: 3, kind: input, shape index: {}]
  %s4 = inlined_call_operand.vmem [shape: f32[96,32], index: 4, kind: input, shape index: {}]
  %s5 = inlined_call_operand.vmem [shape: f32[1,32], index: 5, kind: input, shape index: {}]
  %s6 = inlined_call_operand.vmem [shape: f32[32,64], index: 6, kind: input, shape index: {}]
  %s7 = inlined_call_operand.hbm [shape: f32[8,8,32], index: 7, kind: output, shape index: {}]
  %s8 = sld [smem:[#allocation0]]
  $region46: #{tpu_custom_call.1} parent=0
    _
  %s10 = ssub.s32 1, %s8
  %s11 = scalar_select 0, %s10, %s8
  $region1: #{tpu_custom_call.1} parent=0
    #allocation3 [shape = 'u8[4096]{0}', space=vmem, size = 0x1000, scoped, tag = 'input window, operand 1, single buffered']
    #allocation4 [shape = 's32[1]{0}', space=sflag, size = 0x4, scoped, tag = 'scoped memory for tpu_custom_call.1']
    #allocation5 [shape = 's32[1]{0}', space=sflag, size = 0x4, scoped, tag = 'scoped memory for tpu_custom_call.1']
    #allocation6 [shape = 'u8[32768]{0}', space=vmem, size = 0x8000, scoped, tag = 'output window, operand 0, single buffered']
    %12 = vsyncpa [#allocation4], 0
    %13 = vsyncpa [#allocation5], 0
    // Predicated region
    $region2: #{tpu_custom_call.1} parent=1 // pred_check
      _
    $region3: #{tpu_custom_call.1} parent=1 // pred_check_branch
      %15 = sbr.rel (0) target = $region5
    $region4: #{tpu_custom_call.1} parent=1 // pred_region
      _
    $region5: #{tpu_custom_call.1} parent=1 // pred_fallthru
      _
    // Predicated region
    $region6: #{tpu_custom_call.1} parent=1 // pred_check
      _
    $region7: #{tpu_custom_call.1} parent=1 // pred_check_branch
      %17 = sbr.rel (0) target = $region9
    $region8: #{tpu_custom_call.1} parent=1 // pred_region
      %s19 = ssub.s32 128, 128
      %20 = vsyncadd [#allocation4], %s19
      %s22 = sshll.u32 [#allocation3], 4
      %s23 = int_to_ptr.vmem [resolvable:$true] %s22
      %25 = dma.hbm_to_vmem [thread:$0]  %s1, 128, %s23, [#allocation4]
    $region9: #{tpu_custom_call.1} parent=1 // pred_fallthru
      _
    // Predicated region
    $region10: #{tpu_custom_call.1} parent=1 // pred_check
      _
    $region11: #{tpu_custom_call.1} parent=1 // pred_check_branch
      %27 = sbr.rel (0) target = $region13
    $region12: #{tpu_custom_call.1} parent=1 // pred_region
      _
    $region13: #{tpu_custom_call.1} parent=1 // pred_fallthru
      _
    // Predicated region
    $region14: #{tpu_custom_call.1} parent=1 // pred_check
      _
    $region15: #{tpu_custom_call.1} parent=1 // pred_check_branch
      %29 = sbr.rel (0) target = $region17
    $region16: #{tpu_custom_call.1} parent=1 // pred_region
      _
    $region17: #{tpu_custom_call.1} parent=1 // pred_fallthru
      _
    // Predicated region
    $region18: #{tpu_custom_call.1} parent=1 // pred_check
      _
    $region19: #{tpu_custom_call.1} parent=1 // pred_check_branch
      %31 = sbr.rel (0) target = $region21
    $region20: #{tpu_custom_call.1} parent=1 // pred_region
      _
    $region21: #{tpu_custom_call.1} parent=1 // pred_fallthru
      _
    // Predicated region
    $region22: #{tpu_custom_call.1} parent=1 // pred_check
      _
    $region23: #{tpu_custom_call.1} parent=1 // pred_check_branch
      %33 = sbr.rel (0) target = $region25
    $region24: #{tpu_custom_call.1} parent=1 // pred_region
      _
    $region25: #{tpu_custom_call.1} parent=1 // pred_fallthru
      _
    // Predicated region
    $region26: #{tpu_custom_call.1} parent=1 // pred_check
      _
    $region27: #{tpu_custom_call.1} parent=1 // pred_check_branch
      %35 = sbr.rel (0) target = $region29
    $region28: #{tpu_custom_call.1} parent=1 // pred_region
      _
    $region29: #{tpu_custom_call.1} parent=1 // pred_fallthru
      _
    // Predicated region
    $region30: #{tpu_custom_call.1} parent=1 // pred_check
      _
    $region31: #{tpu_custom_call.1} parent=1 // pred_check_branch
      %37 = sbr.rel (0) target = $region33
    $region32: #{tpu_custom_call.1} parent=1 // pred_region
      %38 = dma.done [#allocation4], 128
    $region33: #{tpu_custom_call.1} parent=1 // pred_fallthru
      _
    %p39 = scmp.eq.s32.totalorder 0, 0
    // Predicated region
    $region34: #{tpu_custom_call.1} parent=1 // pred_check
      %p40 = pneg %p39
    $region35: #{tpu_custom_call.1} parent=1 // pred_check_branch
      %42 = sbr.rel (%p40) target = $region37
    $region36: #{tpu_custom_call.1} parent=1 // pred_region
      %v43 = vld [vmem:[#allocation3] sm:$0xff]
      %vm44 = vcmask 261120
      %45 = vst.msk [vmem:[#allocation2] sm:$0xff] %vm44, %v43
    $region37: #{tpu_custom_call.1} parent=1 // pred_fallthru
      _
    %v46 = vld [vmem:[%s2] sm:$0xff]
    %v47 = vld [vmem:[%s2 + $0x8] sm:$0xff]
    %v48 = vld [vmem:[%s2 + $0x10] sm:$0xff]
    %v49 = vld [vmem:[%s2 + $0x18] sm:$0xff]
    %v50 = vld [vmem:[%s4] sm:$0xff]
    %v51 = vld [vmem:[%s4 + $0x8] sm:$0xff]
    %v52 = vld [vmem:[%s4 + $0x10] sm:$0xff]
    %v53 = vld [vmem:[%s4 + $0x18] sm:$0xff]
    %v54 = vld [vmem:[%s4 + $0x20] sm:$0xff]
    %v55 = vld [vmem:[%s4 + $0x28] sm:$0xff]
    %v56 = vld [vmem:[%s4 + $0x30] sm:$0xff]
    %v57 = vld [vmem:[%s4 + $0x38] sm:$0xff]
    %v58 = vld [vmem:[%s4 + $0x40] sm:$0xff]
    %v59 = vld [vmem:[%s4 + $0x48] sm:$0xff]
    %v60 = vld [vmem:[%s4 + $0x50] sm:$0xff]
    %v61 = vld [vmem:[%s4 + $0x58] sm:$0xff]
    %v62 = vld [vmem:[%s6] sm:$0xff]
    %v63 = vld [vmem:[%s6 + $0x8] sm:$0xff]
    %v64 = vld [vmem:[%s6 + $0x10] sm:$0xff]
    %v65 = vld [vmem:[%s6 + $0x18] sm:$0xff]
    %v66 = vld [vmem:[%s3] sm:$0x1]
    %v67 = vld [vmem:[%s5] sm:$0x1]
    %v68 = vld [vmem:[%s0] sm:$0xff]
    %v69 = vld [vmem:[#allocation2] sm:$0xff]
    %vm70 = vcmask 261120
    %v72 = vsel %vm70, %v69, 0
    %74 = vmatprep.subr.mxu0 0.0
    %75 = vmatpush1.msra.mxu0 %v46
    %76 = vmatprep.subr.mxu0 0.0
    %77 = vmatpush1.msra.mxu0 %v47
    %78 = vmatprep.subr.mxu0 0.0
    %79 = vmatpush1.msra.mxu0 %v48
    %80 = vmatprep.subr.mxu0 0.0
    %81 = vmatpush1.msra.mxu0 %v49
    %82 = vmatprep.subr.mxu0 0.0
    %83 = vmatpush1.msra.mxu0 0.0
    %84 = vmatprep.subr.mxu0 0.0
    %85 = vmatpush1.msra.mxu0 0.0
    %86 = vmatprep.subr.mxu0 0.0
    %87 = vmatpush1.msra.mxu0 0.0
    %88 = vmatprep.subr.mxu0 0.0
    %89 = vmatpush1.msra.mxu0 0.0
    %90 = vmatprep.subr.mxu0 0.0
    %91 = vmatpush1.msra.mxu0 0.0
    %92 = vmatprep.subr.mxu0 0.0
    %93 = vmatpush1.msra.mxu0 0.0
    %94 = vmatprep.subr.mxu0 0.0
    %95 = vmatpush1.msra.mxu0 0.0
    %96 = vmatprep.subr.mxu0 0.0
    %97 = vmatpush1.msra.mxu0 0.0
    %98 = vmatprep.subr.mxu0 0.0
    %99 = vmatpush1.msra.mxu0 0.0
    %100 = vmatprep.subr.mxu0 0.0
    %101 = vmatpush1.msra.mxu0 0.0
    %102 = vmatprep.subr.mxu0 0.0
    %103 = vmatpush1.msra.mxu0 0.0
    %104 = vmatprep.subr.mxu0 0.0
    %105 = vmatpush1.msra.mxu0 0.0
    %106 = vmatprep.subr.mxu0 0.0
    %107 = vmatpush1.msra.mxu0 0.0
    %108 = vmatprep.subr.mxu0 0.0
    %109 = vmatpush1.msra.mxu0 0.0
    %110 = vmatprep.subr.mxu0 0.0
    %111 = vmatpush1.msra.mxu0 0.0
    %112 = vmatprep.subr.mxu0 0.0
    %113 = vmatpush1.msra.mxu0 0.0
    %114 = vmatprep.subr.mxu0 0.0
    %115 = vmatpush1.msra.mxu0 0.0
    %116 = vmatprep.subr.mxu0 0.0
    %117 = vmatpush1.msra.mxu0 0.0
    %118 = vmatprep.subr.mxu0 0.0
    %119 = vmatpush1.msra.mxu0 0.0
    %120 = vmatprep.subr.mxu0 0.0
    %121 = vmatpush1.msra.mxu0 0.0
    %122 = vmatprep.subr.mxu0 0.0
    %123 = vmatpush1.msra.mxu0 0.0
    %124 = vmatprep.subr.mxu0 0.0
    %125 = vmatpush1.msra.mxu0 0.0
    %126 = vmatprep.subr.mxu0 0.0
    %127 = vmatpush1.msra.mxu0 0.0
    %128 = vmatprep.subr.mxu0 0.0
    %129 = vmatpush1.msra.mxu0 0.0
    %130 = vmatprep.subr.mxu0 0.0
    %131 = vmatpush1.msra.mxu0 0.0
    %132 = vmatprep.subr.mxu0 0.0
    %133 = vmatpush1.msra.mxu0 0.0
    %134 = vmatprep.subr.mxu0 0.0
    %135 = vmatpush1.msra.mxu0 0.0
    %136 = vmatprep.subr.mxu0 0.0
    %137 = vmatpush1.msra.mxu0 0.0
    %138 = vmatprep.mubr.f32.mxu0 0.0
    %139 = vmatmul.mubr.f32.gmra.mrb[0].mxu0 %v72
    %v140 = vpop.f32.mrb[0].mxu0
    %v141 = vadd.f32 0.0, %v140
    %v142 = vpop.f32.mrb[0].mxu0
    %143 = vdwg.mxu0
    %v144 = vadd.f32 %v68, %v141
    %v146 = vlaneseq
    %v147 = vshrl.u32 %v146, 7
    %v148 = vsub.s32 0, %v147
    %v149 = vrot.slane %v66, %v148
    %v151 = vadd.f32 %v144, %v149
    %v152 = vxor.u32 %v151, 2147483648
    %v153 = vmul.f32 %v152, 1.442695
    %v154 = vpow.pop %v153
    %v155 = vadd.f32 %v154, 1.0
    %v156 = vrcp.pop %v155
    %v157 = vmul.f32 1.0, %v156
    %v158 = vtanh.pop %v151
    %160 = vrot.lane.b32.xlu0 %v158, 96
    %v161 = vpop.permute.xlu0 %160
    %v163 = vmul.f32 %v157, %v161
    %v164 = vtanh.pop %v68
    %v165 = vtanh.pop %v141
    %167 = vrot.lane.b32.xlu0 %v164, 64
    %v168 = vpop.permute.xlu0 %167
    %171 = vrot.lane.b32.xlu0 %v165, 96
    %v172 = vpop.permute.xlu0 %171
    %175 = vrot.lane.b32.xlu0 %v163, 64
    %v176 = vpop.permute.xlu0 %175
    %v178 = vsel %vm70, %v168, %v172
    %vm179 = vcmask 523264
    %v180 = vsel %vm179, %v178, %v176
    %v182 = vlaneseq
    %v183 = vshrl.u32 %v182, 7
    %v184 = vsub.s32 0, %v183
    %v185 = vrot.slane %v67, %v184
    %vm187 = vcmask 785408
    %v189 = vsel %vm187, %v180, 0
    %191 = vmatprep.subr.mxu0 0.0
    %192 = vmatpush1.msra.mxu0 %v50
    %193 = vmatprep.subr.mxu0 0.0
    %194 = vmatpush1.msra.mxu0 %v51
    %195 = vmatprep.subr.mxu0 0.0
    %196 = vmatpush1.msra.mxu0 %v52
    %197 = vmatprep.subr.mxu0 0.0
    %198 = vmatpush1.msra.mxu0 %v53
    %199 = vmatprep.subr.mxu0 0.0
    %200 = vmatpush1.msra.mxu0 %v54
    %201 = vmatprep.subr.mxu0 0.0
    %202 = vmatpush1.msra.mxu0 %v55
    %203 = vmatprep.subr.mxu0 0.0
    %204 = vmatpush1.msra.mxu0 %v56
    %205 = vmatprep.subr.mxu0 0.0
    %206 = vmatpush1.msra.mxu0 %v57
    %207 = vmatprep.subr.mxu0 0.0
    %208 = vmatpush1.msra.mxu0 %v58
    %209 = vmatprep.subr.mxu0 0.0
    %210 = vmatpush1.msra.mxu0 %v59
    %211 = vmatprep.subr.mxu0 0.0
    %212 = vmatpush1.msra.mxu0 %v60
    %213 = vmatprep.subr.mxu0 0.0
    %214 = vmatpush1.msra.mxu0 %v61
    %215 = vmatprep.subr.mxu0 0.0
    %216 = vmatpush1.msra.mxu0 0.0
    %217 = vmatprep.subr.mxu0 0.0
    %218 = vmatpush1.msra.mxu0 0.0
    %219 = vmatprep.subr.mxu0 0.0
    %220 = vmatpush1.msra.mxu0 0.0
    %221 = vmatprep.subr.mxu0 0.0
    %222 = vmatpush1.msra.mxu0 0.0
    %223 = vmatprep.subr.mxu0 0.0
    %224 = vmatpush1.msra.mxu0 0.0
    %225 = vmatprep.subr.mxu0 0.0
    %226 = vmatpush1.msra.mxu0 0.0
    %227 = vmatprep.subr.mxu0 0.0
    %228 = vmatpush1.msra.mxu0 0.0
    %229 = vmatprep.subr.mxu0 0.0
    %230 = vmatpush1.msra.mxu0 0.0
    %231 = vmatprep.subr.mxu0 0.0
    %232 = vmatpush1.msra.mxu0 0.0
    %233 = vmatprep.subr.mxu0 0.0
    %234 = vmatpush1.msra.mxu0 0.0
    %235 = vmatprep.subr.mxu0 0.0
    %236 = vmatpush1.msra.mxu0 0.0
    %237 = vmatprep.subr.mxu0 0.0
    %238 = vmatpush1.msra.mxu0 0.0
    %239 = vmatprep.subr.mxu0 0.0
    %240 = vmatpush1.msra.mxu0 0.0
    %241 = vmatprep.subr.mxu0 0.0
    %242 = vmatpush1.msra.mxu0 0.0
    %243 = vmatprep.subr.mxu0 0.0
    %244 = vmatpush1.msra.mxu0 0.0
    %245 = vmatprep.subr.mxu0 0.0
    %246 = vmatpush1.msra.mxu0 0.0
    %247 = vmatprep.subr.mxu0 0.0
    %248 = vmatpush1.msra.mxu0 0.0
    %249 = vmatprep.subr.mxu0 0.0
    %250 = vmatpush1.msra.mxu0 0.0
    %251 = vmatprep.subr.mxu0 0.0
    %252 = vmatpush1.msra.mxu0 0.0
    %253 = vmatprep.subr.mxu0 0.0
    %254 = vmatpush1.msra.mxu0 0.0
    %255 = vmatprep.mubr.f32.mxu0 0.0
    %256 = vmatmul.mubr.f32.gmra.mrb[0].mxu0 %v189
    %v257 = vpop.f32.mrb[0].mxu0
    %v258 = vadd.f32 %v185, %v257
    %v259 = vpop.f32.mrb[0].mxu0
    %260 = vdwg.mxu0
    %v261 = vxor.u32 %v258, 2147483648
    %v262 = vmul.f32 %v261, 1.442695
    %v263 = vpow.pop %v262
    %v264 = vadd.f32 %v263, 1.0
    %v265 = vrcp.pop %v264
    %v266 = vmul.f32 1.0, %v265
    %v268 = vsel %vm70, %v266, 0
    %270 = vmatprep.subr.mxu0 0.0
    %271 = vmatpush1.msra.mxu0 %v62
    %272 = vmatprep.subr.mxu0 0.0
    %273 = vmatpush1.msra.mxu0 %v63
    %274 = vmatprep.subr.mxu0 0.0
    %275 = vmatpush1.msra.mxu0 %v64
    %276 = vmatprep.subr.mxu0 0.0
    %277 = vmatpush1.msra.mxu0 %v65
    %278 = vmatprep.subr.mxu0 0.0
    %279 = vmatpush1.msra.mxu0 0.0
    %280 = vmatprep.subr.mxu0 0.0
    %281 = vmatpush1.msra.mxu0 0.0
    %282 = vmatprep.subr.mxu0 0.0
    %283 = vmatpush1.msra.mxu0 0.0
    %284 = vmatprep.subr.mxu0 0.0
    %285 = vmatpush1.msra.mxu0 0.0
    %286 = vmatprep.subr.mxu0 0.0
    %287 = vmatpush1.msra.mxu0 0.0
    %288 = vmatprep.subr.mxu0 0.0
    %289 = vmatpush1.msra.mxu0 0.0
    %290 = vmatprep.subr.mxu0 0.0
    %291 = vmatpush1.msra.mxu0 0.0
    %292 = vmatprep.subr.mxu0 0.0
    %293 = vmatpush1.msra.mxu0 0.0
    %294 = vmatprep.subr.mxu0 0.0
    %295 = vmatpush1.msra.mxu0 0.0
    %296 = vmatprep.subr.mxu0 0.0
    %297 = vmatpush1.msra.mxu0 0.0
    %298 = vmatprep.subr.mxu0 0.0
    %299 = vmatpush1.msra.mxu0 0.0
    %300 = vmatprep.subr.mxu0 0.0
    %301 = vmatpush1.msra.mxu0 0.0
    %302 = vmatprep.subr.mxu0 0.0
    %303 = vmatpush1.msra.mxu0 0.0
    %304 = vmatprep.subr.mxu0 0.0
    %305 = vmatpush1.msra.mxu0 0.0
    %306 = vmatprep.subr.mxu0 0.0
    %307 = vmatpush1.msra.mxu0 0.0
    %308 = vmatprep.subr.mxu0 0.0
    %309 = vmatpush1.msra.mxu0 0.0
    %310 = vmatprep.subr.mxu0 0.0
    %311 = vmatpush1.msra.mxu0 0.0
    %312 = vmatprep.subr.mxu0 0.0
    %313 = vmatpush1.msra.mxu0 0.0
    %314 = vmatprep.subr.mxu0 0.0
    %315 = vmatpush1.msra.mxu0 0.0
    %316 = vmatprep.subr.mxu0 0.0
    %317 = vmatpush1.msra.mxu0 0.0
    %318 = vmatprep.subr.mxu0 0.0
    %319 = vmatpush1.msra.mxu0 0.0
    %320 = vmatprep.subr.mxu0 0.0
    %321 = vmatpush1.msra.mxu0 0.0
    %322 = vmatprep.subr.mxu0 0.0
    %323 = vmatpush1.msra.mxu0 0.0
    %324 = vmatprep.subr.mxu0 0.0
    %325 = vmatpush1.msra.mxu0 0.0
    %326 = vmatprep.subr.mxu0 0.0
    %327 = vmatpush1.msra.mxu0 0.0
    %328 = vmatprep.subr.mxu0 0.0
    %329 = vmatpush1.msra.mxu0 0.0
    %330 = vmatprep.subr.mxu0 0.0
    %331 = vmatpush1.msra.mxu0 0.0
    %332 = vmatprep.subr.mxu0 0.0
    %333 = vmatpush1.msra.mxu0 0.0
    %334 = vmatprep.mubr.f32.mxu0 0.0
    %335 = vmatmul.mubr.f32.gmra.mrb[0].mxu0 %v268
    %v336 = vpop.f32.mrb[0].mxu0
    %v337 = vadd.f32 0.0, %v336
    %v338 = vpop.f32.mrb[0].mxu0
    %339 = vdwg.mxu0
    %v340 = vsub.f32 1.0, %v337
    %342 = vrot.lane.b32.xlu0 %v337, 96
    %v343 = vpop.permute.xlu0 %342
    %v345 = vsub.f32 %v340, %v343
    %v346 = vmul.f32 %v337, %v168
    %v347 = vmul.f32 %v337, %v172
    %349 = vrot.lane.b32.xlu0 %v347, 96
    %v350 = vpop.permute.xlu0 %349
    %v352 = vadd.f32 %v346, %v350
    %v353 = vmul.f32 %v345, %v163
    %v354 = vadd.f32 %v352, %v353
    %355 = vst.msk [vmem:[#allocation2] sm:$0xff] %vm70, %v354
    %356 = vst.msk [vmem:[#allocation6] sm:$0xff] %vm70, %v354
    %s357 = scalar_lea.vmem %s0, 8
    %v358 = vld [vmem:[%s357] sm:$0xff]
    %v359 = vld [vmem:[#allocation2] sm:$0xff]
    %v361 = vsel %vm70, %v359, 0
    %363 = vmatprep.subr.mxu0 0.0
    %364 = vmatpush1.msra.mxu0 %v46
    %365 = vmatprep.subr.mxu0 0.0
    %366 = vmatpush1.msra.mxu0 %v47
    %367 = vmatprep.subr.mxu0 0.0
    %368 = vmatpush1.msra.mxu0 %v48
    %369 = vmatprep.subr.mxu0 0.0
    %370 = vmatpush1.msra.mxu0 %v49
    %371 = vmatprep.subr.mxu0 0.0
    %372 = vmatpush1.msra.mxu0 0.0
    %373 = vmatprep.subr.mxu0 0.0
    %374 = vmatpush1.msra.mxu0 0.0
    %375 = vmatprep.subr.mxu0 0.0
    %376 = vmatpush1.msra.mxu0 0.0
    %377 = vmatprep.subr.mxu0 0.0
    %378 = vmatpush1.msra.mxu0 0.0
    %379 = vmatprep.subr.mxu0 0.0
    %380 = vmatpush1.msra.mxu0 0.0
    %381 = vmatprep.subr.mxu0 0.0
    %382 = vmatpush1.msra.mxu0 0.0
    %383 = vmatprep.subr.mxu0 0.0
    %384 = vmatpush1.msra.mxu0 0.0
    %385 = vmatprep.subr.mxu0 0.0
    %386 = vmatpush1.msra.mxu0 0.0
    %387 = vmatprep.subr.mxu0 0.0
    %388 = vmatpush1.msra.mxu0 0.0
    %389 = vmatprep.subr.mxu0 0.0
    %390 = vmatpush1.msra.mxu0 0.0
    %391 = vmatprep.subr.mxu0 0.0
    %392 = vmatpush1.msra.mxu0 0.0
    %393 = vmatprep.subr.mxu0 0.0
    %394 = vmatpush1.msra.mxu0 0.0
    %395 = vmatprep.subr.mxu0 0.0
    %396 = vmatpush1.msra.mxu0 0.0
    %397 = vmatprep.subr.mxu0 0.0
    %398 = vmatpush1.msra.mxu0 0.0
    %399 = vmatprep.subr.mxu0 0.0
    %400 = vmatpush1.msra.mxu0 0.0
    %401 = vmatprep.subr.mxu0 0.0
    %402 = vmatpush1.msra.mxu0 0.0
    %403 = vmatprep.subr.mxu0 0.0
    %404 = vmatpush1.msra.mxu0 0.0
    %405 = vmatprep.subr.mxu0 0.0
    %406 = vmatpush1.msra.mxu0 0.0
    %407 = vmatprep.subr.mxu0 0.0
    %408 = vmatpush1.msra.mxu0 0.0
    %409 = vmatprep.subr.mxu0 0.0
    %410 = vmatpush1.msra.mxu0 0.0
    %411 = vmatprep.subr.mxu0 0.0
    %412 = vmatpush1.msra.mxu0 0.0
    %413 = vmatprep.subr.mxu0 0.0
    %414 = vmatpush1.msra.mxu0 0.0
    %415 = vmatprep.subr.mxu0 0.0
    %416 = vmatpush1.msra.mxu0 0.0
    %417 = vmatprep.subr.mxu0 0.0
    %418 = vmatpush1.msra.mxu0 0.0
    %419 = vmatprep.subr.mxu0 0.0
    %420 = vmatpush1.msra.mxu0 0.0
    %421 = vmatprep.subr.mxu0 0.0
    %422 = vmatpush1.msra.mxu0 0.0
    %423 = vmatprep.subr.mxu0 0.0
    %424 = vmatpush1.msra.mxu0 0.0
    %425 = vmatprep.subr.mxu0 0.0
    %426 = vmatpush1.msra.mxu0 0.0
    %427 = vmatprep.mubr.f32.mxu0 0.0
    %428 = vmatmul.mubr.f32.gmra.mrb[0].mxu0 %v361
    %v429 = vpop.f32.mrb[0].mxu0
    %v430 = vadd.f32 0.0, %v429
    %v431 = vpop.f32.mrb[0].mxu0
    %432 = vdwg.mxu0
    %v433 = vadd.f32 %v358, %v430
    %v434 = vadd.f32 %v433, %v149
    %v435 = vxor.u32 %v434, 2147483648
    %v436 = vmul.f32 %v435, 1.442695
    %v437 = vpow.pop %v436
    %v438 = vadd.f32 %v437, 1.0
    %v439 = vrcp.pop %v438
    %v440 = vmul.f32 1.0, %v439
    %v441 = vtanh.pop %v434
    %443 = vrot.lane.b32.xlu0 %v441, 96
    %v444 = vpop.permute.xlu0 %443
    %v446 = vmul.f32 %v440, %v444
    %v447 = vtanh.pop %v358
    %v448 = vtanh.pop %v430
    %450 = vrot.lane.b32.xlu0 %v447, 64
    %v451 = vpop.permute.xlu0 %450
    %454 = vrot.lane.b32.xlu0 %v448, 96
    %v455 = vpop.permute.xlu0 %454
    %458 = vrot.lane.b32.xlu0 %v446, 64
    %v459 = vpop.permute.xlu0 %458
    %v461 = vsel %vm70, %v451, %v455
    %v462 = vsel %vm179, %v461, %v459
    %v464 = vsel %vm187, %v462, 0
    %466 = vmatprep.subr.mxu0 0.0
    %467 = vmatpush1.msra.mxu0 %v50
    %468 = vmatprep.subr.mxu0 0.0
    %469 = vmatpush1.msra.mxu0 %v51
    %470 = vmatprep.subr.mxu0 0.0
    %471 = vmatpush1.msra.mxu0 %v52
    %472 = vmatprep.subr.mxu0 0.0
    %473 = vmatpush1.msra.mxu0 %v53
    %474 = vmatprep.subr.mxu0 0.0
    %475 = vmatpush1.msra.mxu0 %v54
    %476 = vmatprep.subr.mxu0 0.0
    %477 = vmatpush1.msra.mxu0 %v55
    %478 = vmatprep.subr.mxu0 0.0
    %479 = vmatpush1.msra.mxu0 %v56
    %480 = vmatprep.subr.mxu0 0.0
    %481 = vmatpush1.msra.mxu0 %v57
    %482 = vmatprep.subr.mxu0 0.0
    %483 = vmatpush1.msra.mxu0 %v58
    %484 = vmatprep.subr.mxu0 0.0
    %485 = vmatpush1.msra.mxu0 %v59
    %486 = vmatprep.subr.mxu0 0.0
    %487 = vmatpush1.msra.mxu0 %v60
    %488 = vmatprep.subr.mxu0 0.0
    %489 = vmatpush1.msra.mxu0 %v61
    %490 = vmatprep.subr.mxu0 0.0
    %491 = vmatpush1.msra.mxu0 0.0
    %492 = vmatprep.subr.mxu0 0.0
    %493 = vmatpush1.msra.mxu0 0.0
    %494 = vmatprep.subr.mxu0 0.0
    %495 = vmatpush1.msra.mxu0 0.0
    %496 = vmatprep.subr.mxu0 0.0
    %497 = vmatpush1.msra.mxu0 0.0
    %498 = vmatprep.subr.mxu0 0.0
    %499 = vmatpush1.msra.mxu0 0.0
    %500 = vmatprep.subr.mxu0 0.0
    %501 = vmatpush1.msra.mxu0 0.0
    %502 = vmatprep.subr.mxu0 0.0
    %503 = vmatpush1.msra.mxu0 0.0
    %504 = vmatprep.subr.mxu0 0.0
    %505 = vmatpush1.msra.mxu0 0.0
    %506 = vmatprep.subr.mxu0 0.0
    %507 = vmatpush1.msra.mxu0 0.0
    %508 = vmatprep.subr.mxu0 0.0
    %509 = vmatpush1.msra.mxu0 0.0
    %510 = vmatprep.subr.mxu0 0.0
    %511 = vmatpush1.msra.mxu0 0.0
    %512 = vmatprep.subr.mxu0 0.0
    %513 = vmatpush1.msra.mxu0 0.0
    %514 = vmatprep.subr.mxu0 0.0
    %515 = vmatpush1.msra.mxu0 0.0
    %516 = vmatprep.subr.mxu0 0.0
    %517 = vmatpush1.msra.mxu0 0.0
    %518 = vmatprep.subr.mxu0 0.0
    %519 = vmatpush1.msra.mxu0 0.0
    %520 = vmatprep.subr.mxu0 0.0
    %521 = vmatpush1.msra.mxu0 0.0
    %522 = vmatprep.subr.mxu0 0.0
    %523 = vmatpush1.msra.mxu0 0.0
    %524 = vmatprep.subr.mxu0 0.0
    %525 = vmatpush1.msra.mxu0 0.0
    %526 = vmatprep.subr.mxu0 0.0
    %527 = vmatpush1.msra.mxu0 0.0
    %528 = vmatprep.subr.mxu0 0.0
    %529 = vmatpush1.msra.mxu0 0.0
    %530 = vmatprep.mubr.f32.mxu0 0.0
    %531 = vmatmul.mubr.f32.gmra.mrb[0].mxu0 %v464
    %v532 = vpop.f32.mrb[0].mxu0
    %v533 = vadd.f32 %v185, %v532
    %v534 = vpop.f32.mrb[0].mxu0
    %535 = vdwg.mxu0
    %v536 = vxor.u32 %v533, 2147483648
    %v537 = vmul.f32 %v536, 1.442695
    %v538 = vpow.pop %v537
    %v539 = vadd.f32 %v538, 1.0
    %v540 = vrcp.pop %v539
    %v541 = vmul.f32 1.0, %v540
    %v543 = vsel %vm70, %v541, 0
    %545 = vmatprep.subr.mxu0 0.0
    %546 = vmatpush1.msra.mxu0 %v62
    %547 = vmatprep.subr.mxu0 0.0
    %548 = vmatpush1.msra.mxu0 %v63
    %549 = vmatprep.subr.mxu0 0.0
    %550 = vmatpush1.msra.mxu0 %v64
    %551 = vmatprep.subr.mxu0 0.0
    %552 = vmatpush1.msra.mxu0 %v65
    %553 = vmatprep.subr.mxu0 0.0
    %554 = vmatpush1.msra.mxu0 0.0
    %555 = vmatprep.subr.mxu0 0.0
    %556 = vmatpush1.msra.mxu0 0.0
    %557 = vmatprep.subr.mxu0 0.0
    %558 = vmatpush1.msra.mxu0 0.0
    %559 = vmatprep.subr.mxu0 0.0
    %560 = vmatpush1.msra.mxu0 0.0
    %561 = vmatprep.subr.mxu0 0.0
    %562 = vmatpush1.msra.mxu0 0.0
    %563 = vmatprep.subr.mxu0 0.0
    %564 = vmatpush1.msra.mxu0 0.0
    %565 = vmatprep.subr.mxu0 0.0
    %566 = vmatpush1.msra.mxu0 0.0
    %567 = vmatprep.subr.mxu0 0.0
    %568 = vmatpush1.msra.mxu0 0.0
    %569 = vmatprep.subr.mxu0 0.0
    %570 = vmatpush1.msra.mxu0 0.0
    %571 = vmatprep.subr.mxu0 0.0
    %572 = vmatpush1.msra.mxu0 0.0
    %573 = vmatprep.subr.mxu0 0.0
    %574 = vmatpush1.msra.mxu0 0.0
    %575 = vmatprep.subr.mxu0 0.0
    %576 = vmatpush1.msra.mxu0 0.0
    %577 = vmatprep.subr.mxu0 0.0
    %578 = vmatpush1.msra.mxu0 0.0
    %579 = vmatprep.subr.mxu0 0.0
    %580 = vmatpush1.msra.mxu0 0.0
    %581 = vmatprep.subr.mxu0 0.0
    %582 = vmatpush1.msra.mxu0 0.0
    %583 = vmatprep.subr.mxu0 0.0
    %584 = vmatpush1.msra.mxu0 0.0
    %585 = vmatprep.subr.mxu0 0.0
    %586 = vmatpush1.msra.mxu0 0.0
    %587 = vmatprep.subr.mxu0 0.0
    %588 = vmatpush1.msra.mxu0 0.0
    %589 = vmatprep.subr.mxu0 0.0
    %590 = vmatpush1.msra.mxu0 0.0
    %591 = vmatprep.subr.mxu0 0.0
    %592 = vmatpush1.msra.mxu0 0.0
    %593 = vmatprep.subr.mxu0 0.0
    %594 = vmatpush1.msra.mxu0 0.0
    %595 = vmatprep.subr.mxu0 0.0
    %596 = vmatpush1.msra.mxu0 0.0
    %597 = vmatprep.subr.mxu0 0.0
    %598 = vmatpush1.msra.mxu0 0.0
    %599 = vmatprep.subr.mxu0 0.0
    %600 = vmatpush1.msra.mxu0 0.0
    %601 = vmatprep.subr.mxu0 0.0
    %602 = vmatpush1.msra.mxu0 0.0
    %603 = vmatprep.subr.mxu0 0.0
    %604 = vmatpush1.msra.mxu0 0.0
    %605 = vmatprep.subr.mxu0 0.0
    %606 = vmatpush1.msra.mxu0 0.0
    %607 = vmatprep.subr.mxu0 0.0
    %608 = vmatpush1.msra.mxu0 0.0
    %609 = vmatprep.mubr.f32.mxu0 0.0
    %610 = vmatmul.mubr.f32.gmra.mrb[0].mxu0 %v543
    %v611 = vpop.f32.mrb[0].mxu0
    %v612 = vadd.f32 0.0, %v611
    %v613 = vpop.f32.mrb[0].mxu0
    %614 = vdwg.mxu0
    %v615 = vsub.f32 1.0, %v612
    %617 = vrot.lane.b32.xlu0 %v612, 96
    %v618 = vpop.permute.xlu0 %617
    %v620 = vsub.f32 %v615, %v618
    %v621 = vmul.f32 %v612, %v451
    %v622 = vmul.f32 %v612, %v455
    %624 = vrot.lane.b32.xlu0 %v622, 96
    %v625 = vpop.permute.xlu0 %624
    %v627 = vadd.f32 %v621, %v625
    %v628 = vmul.f32 %v620, %v446
    %v629 = vadd.f32 %v627, %v628
    %630 = vst.msk [vmem:[#allocation2] sm:$0xff] %vm70, %v629
    %s631 = scalar_lea.vmem [#allocation6], 8
    %632 = vst.msk [vmem:[%s631] sm:$0xff] %vm70, %v629
    %s633 = scalar_lea.vmem %s0, 16
    %v634 = vld [vmem:[%s633] sm:$0xff]
    %v635 = vld [vmem:[#allocation2] sm:$0xff]
    %v637 = vsel %vm70, %v635, 0
    %639 = vmatprep.subr.mxu0 0.0
    %640 = vmatpush1.msra.mxu0 %v46
    %641 = vmatprep.subr.mxu0 0.0
    %642 = vmatpush1.msra.mxu0 %v47
    %643 = vmatprep.subr.mxu0 0.0
    %644 = vmatpush1.msra.mxu0 %v48
    %645 = vmatprep.subr.mxu0 0.0
    %646 = vmatpush1.msra.mxu0 %v49
    %647 = vmatprep.subr.mxu0 0.0
    %648 = vmatpush1.msra.mxu0 0.0
    %649 = vmatprep.subr.mxu0 0.0
    %650 = vmatpush1.msra.mxu0 0.0
    %651 = vmatprep.subr.mxu0 0.0
    %652 = vmatpush1.msra.mxu0 0.0
    %653 = vmatprep.subr.mxu0 0.0
    %654 = vmatpush1.msra.mxu0 0.0
    %655 = vmatprep.subr.mxu0 0.0
    %656 = vmatpush1.msra.mxu0 0.0
    %657 = vmatprep.subr.mxu0 0.0
    %658 = vmatpush1.msra.mxu0 0.0
    %659 = vmatprep.subr.mxu0 0.0
    %660 = vmatpush1.msra.mxu0 0.0
    %661 = vmatprep.subr.mxu0 0.0
    %662 = vmatpush1.msra.mxu0 0.0
    %663 = vmatprep.subr.mxu0 0.0
    %664 = vmatpush1.msra.mxu0 0.0
    %665 = vmatprep.subr.mxu0 0.0
    %666 = vmatpush1.msra.mxu0 0.0
    %667 = vmatprep.subr.mxu0 0.0
    %668 = vmatpush1.msra.mxu0 0.0
    %669 = vmatprep.subr.mxu0 0.0
    %670 = vmatpush1.msra.mxu0 0.0
    %671 = vmatprep.subr.mxu0 0.0
    %672 = vmatpush1.msra.mxu0 0.0
    %673 = vmatprep.subr.mxu0 0.0
    %674 = vmatpush1.msra.mxu0 0.0
    %675 = vmatprep.subr.mxu0 0.0
    %676 = vmatpush1.msra.mxu0 0.0
    %677 = vmatprep.subr.mxu0 0.0
    %678 = vmatpush1.msra.mxu0 0.0
    %679 = vmatprep.subr.mxu0 0.0
    %680 = vmatpush1.msra.mxu0 0.0
    %681 = vmatprep.subr.mxu0 0.0
    %682 = vmatpush1.msra.mxu0 0.0
    %683 = vmatprep.subr.mxu0 0.0
    %684 = vmatpush1.msra.mxu0 0.0
    %685 = vmatprep.subr.mxu0 0.0
    %686 = vmatpush1.msra.mxu0 0.0
    %687 = vmatprep.subr.mxu0 0.0
    %688 = vmatpush1.msra.mxu0 0.0
    %689 = vmatprep.subr.mxu0 0.0
    %690 = vmatpush1.msra.mxu0 0.0
    %691 = vmatprep.subr.mxu0 0.0
    %692 = vmatpush1.msra.mxu0 0.0
    %693 = vmatprep.subr.mxu0 0.0
    %694 = vmatpush1.msra.mxu0 0.0
    %695 = vmatprep.subr.mxu0 0.0
    %696 = vmatpush1.msra.mxu0 0.0
    %697 = vmatprep.subr.mxu0 0.0
    %698 = vmatpush1.msra.mxu0 0.0
    %699 = vmatprep.subr.mxu0 0.0
    %700 = vmatpush1.msra.mxu0 0.0
    %701 = vmatprep.subr.mxu0 0.0
    %702 = vmatpush1.msra.mxu0 0.0
    %703 = vmatprep.mubr.f32.mxu0 0.0
    %704 = vmatmul.mubr.f32.gmra.mrb[0].mxu0 %v637
    %v705 = vpop.f32.mrb[0].mxu0
    %v706 = vadd.f32 0.0, %v705
    %v707 = vpop.f32.mrb[0].mxu0
    %708 = vdwg.mxu0
    %v709 = vadd.f32 %v634, %v706
    %v710 = vadd.f32 %v709, %v149
    %v711 = vxor.u32 %v710, 2147483648
    %v712 = vmul.f32 %v711, 1.442695
    %v713 = vpow.pop %v712
    %v714 = vadd.f32 %v713, 1.0
    %v715 = vrcp.pop %v714
    %v716 = vmul.f32 1.0, %v715
    %v717 = vtanh.pop %v710
    %719 = vrot.lane.b32.xlu0 %v717, 96
    %v720 = vpop.permute.xlu0 %719
    %v722 = vmul.f32 %v716, %v720
    %v723 = vtanh.pop %v634
    %v724 = vtanh.pop %v706
    %726 = vrot.lane.b32.xlu0 %v723, 64
    %v727 = vpop.permute.xlu0 %726
    %730 = vrot.lane.b32.xlu0 %v724, 96
    %v731 = vpop.permute.xlu0 %730
    %734 = vrot.lane.b32.xlu0 %v722, 64
    %v735 = vpop.permute.xlu0 %734
    %v737 = vsel %vm70, %v727, %v731
    %v738 = vsel %vm179, %v737, %v735
    %v740 = vsel %vm187, %v738, 0
    %742 = vmatprep.subr.mxu0 0.0
    %743 = vmatpush1.msra.mxu0 %v50
    %744 = vmatprep.subr.mxu0 0.0
    %745 = vmatpush1.msra.mxu0 %v51
    %746 = vmatprep.subr.mxu0 0.0
    %747 = vmatpush1.msra.mxu0 %v52
    %748 = vmatprep.subr.mxu0 0.0
    %749 = vmatpush1.msra.mxu0 %v53
    %750 = vmatprep.subr.mxu0 0.0
    %751 = vmatpush1.msra.mxu0 %v54
    %752 = vmatprep.subr.mxu0 0.0
    %753 = vmatpush1.msra.mxu0 %v55
    %754 = vmatprep.subr.mxu0 0.0
    %755 = vmatpush1.msra.mxu0 %v56
    %756 = vmatprep.subr.mxu0 0.0
    %757 = vmatpush1.msra.mxu0 %v57
    %758 = vmatprep.subr.mxu0 0.0
    %759 = vmatpush1.msra.mxu0 %v58
    %760 = vmatprep.subr.mxu0 0.0
    %761 = vmatpush1.msra.mxu0 %v59
    %762 = vmatprep.subr.mxu0 0.0
    %763 = vmatpush1.msra.mxu0 %v60
    %764 = vmatprep.subr.mxu0 0.0
    %765 = vmatpush1.msra.mxu0 %v61
    %766 = vmatprep.subr.mxu0 0.0
    %767 = vmatpush1.msra.mxu0 0.0
    %768 = vmatprep.subr.mxu0 0.0
    %769 = vmatpush1.msra.mxu0 0.0
    %770 = vmatprep.subr.mxu0 0.0
    %771 = vmatpush1.msra.mxu0 0.0
    %772 = vmatprep.subr.mxu0 0.0
    %773 = vmatpush1.msra.mxu0 0.0
    %774 = vmatprep.subr.mxu0 0.0
    %775 = vmatpush1.msra.mxu0 0.0
    %776 = vmatprep.subr.mxu0 0.0
    %777 = vmatpush1.msra.mxu0 0.0
    %778 = vmatprep.subr.mxu0 0.0
    %779 = vmatpush1.msra.mxu0 0.0
    %780 = vmatprep.subr.mxu0 0.0
    %781 = vmatpush1.msra.mxu0 0.0
    %782 = vmatprep.subr.mxu0 0.0
    %783 = vmatpush1.msra.mxu0 0.0
    %784 = vmatprep.subr.mxu0 0.0
    %785 = vmatpush1.msra.mxu0 0.0
    %786 = vmatprep.subr.mxu0 0.0
    %787 = vmatpush1.msra.mxu0 0.0
    %788 = vmatprep.subr.mxu0 0.0
    %789 = vmatpush1.msra.mxu0 0.0
    %790 = vmatprep.subr.mxu0 0.0
    %791 = vmatpush1.msra.mxu0 0.0
    %792 = vmatprep.subr.mxu0 0.0
    %793 = vmatpush1.msra.mxu0 0.0
    %794 = vmatprep.subr.mxu0 0.0
    %795 = vmatpush1.msra.mxu0 0.0
    %796 = vmatprep.subr.mxu0 0.0
    %797 = vmatpush1.msra.mxu0 0.0
    %798 = vmatprep.subr.mxu0 0.0
    %799 = vmatpush1.msra.mxu0 0.0
    %800 = vmatprep.subr.mxu0 0.0
    %801 = vmatpush1.msra.mxu0 0.0
    %802 = vmatprep.subr.mxu0 0.0
    %803 = vmatpush1.msra.mxu0 0.0
    %804 = vmatprep.subr.mxu0 0.0
    %805 = vmatpush1.msra.mxu0 0.0
    %806 = vmatprep.mubr.f32.mxu0 0.0
    %807 = vmatmul.mubr.f32.gmra.mrb[0].mxu0 %v740
    %v808 = vpop.f32.mrb[0].mxu0
    %v809 = vadd.f32 %v185, %v808
    %v810 = vpop.f32.mrb[0].mxu0
    %811 = vdwg.mxu0
    %v812 = vxor.u32 %v809, 2147483648
    %v813 = vmul.f32 %v812, 1.442695
    %v814 = vpow.pop %v813
    %v815 = vadd.f32 %v814, 1.0
    %v816 = vrcp.pop %v815
    %v817 = vmul.f32 1.0, %v816
    %v819 = vsel %vm70, %v817, 0
    %821 = vmatprep.subr.mxu0 0.0
    %822 = vmatpush1.msra.mxu0 %v62
    %823 = vmatprep.subr.mxu0 0.0
    %824 = vmatpush1.msra.mxu0 %v63
    %825 = vmatprep.subr.mxu0 0.0
    %826 = vmatpush1.msra.mxu0 %v64
    %827 = vmatprep.subr.mxu0 0.0
    %828 = vmatpush1.msra.mxu0 %v65
    %829 = vmatprep.subr.mxu0 0.0
    %830 = vmatpush1.msra.mxu0 0.0
    %831 = vmatprep.subr.mxu0 0.0
    %832 = vmatpush1.msra.mxu0 0.0
    %833 = vmatprep.subr.mxu0 0.0
    %834 = vmatpush1.msra.mxu0 0.0
    %835 = vmatprep.subr.mxu0 0.0
    %836 = vmatpush1.msra.mxu0 0.0
    %837 = vmatprep.subr.mxu0 0.0
    %838 = vmatpush1.msra.mxu0 0.0
    %839 = vmatprep.subr.mxu0 0.0
    %840 = vmatpush1.msra.mxu0 0.0
    %841 = vmatprep.subr.mxu0 0.0
    %842 = vmatpush1.msra.mxu0 0.0
    %843 = vmatprep.subr.mxu0 0.0
    %844 = vmatpush1.msra.mxu0 0.0
    %845 = vmatprep.subr.mxu0 0.0
    %846 = vmatpush1.msra.mxu0 0.0
    %847 = vmatprep.subr.mxu0 0.0
    %848 = vmatpush1.msra.mxu0 0.0
    %849 = vmatprep.subr.mxu0 0.0
    %850 = vmatpush1.msra.mxu0 0.0
    %851 = vmatprep.subr.mxu0 0.0
    %852 = vmatpush1.msra.mxu0 0.0
    %853 = vmatprep.subr.mxu0 0.0
    %854 = vmatpush1.msra.mxu0 0.0
    %855 = vmatprep.subr.mxu0 0.0
    %856 = vmatpush1.msra.mxu0 0.0
    %857 = vmatprep.subr.mxu0 0.0
    %858 = vmatpush1.msra.mxu0 0.0
    %859 = vmatprep.subr.mxu0 0.0
    %860 = vmatpush1.msra.mxu0 0.0
    %861 = vmatprep.subr.mxu0 0.0
    %862 = vmatpush1.msra.mxu0 0.0
    %863 = vmatprep.subr.mxu0 0.0
    %864 = vmatpush1.msra.mxu0 0.0
    %865 = vmatprep.subr.mxu0 0.0
    %866 = vmatpush1.msra.mxu0 0.0
    %867 = vmatprep.subr.mxu0 0.0
    %868 = vmatpush1.msra.mxu0 0.0
    %869 = vmatprep.subr.mxu0 0.0
    %870 = vmatpush1.msra.mxu0 0.0
    %871 = vmatprep.subr.mxu0 0.0
    %872 = vmatpush1.msra.mxu0 0.0
    %873 = vmatprep.subr.mxu0 0.0
    %874 = vmatpush1.msra.mxu0 0.0
    %875 = vmatprep.subr.mxu0 0.0
    %876 = vmatpush1.msra.mxu0 0.0
    %877 = vmatprep.subr.mxu0 0.0
    %878 = vmatpush1.msra.mxu0 0.0
    %879 = vmatprep.subr.mxu0 0.0
    %880 = vmatpush1.msra.mxu0 0.0
    %881 = vmatprep.subr.mxu0 0.0
    %882 = vmatpush1.msra.mxu0 0.0
    %883 = vmatprep.subr.mxu0 0.0
    %884 = vmatpush1.msra.mxu0 0.0
    %885 = vmatprep.mubr.f32.mxu0 0.0
    %886 = vmatmul.mubr.f32.gmra.mrb[0].mxu0 %v819
    %v887 = vpop.f32.mrb[0].mxu0
    %v888 = vadd.f32 0.0, %v887
    %v889 = vpop.f32.mrb[0].mxu0
    %890 = vdwg.mxu0
    %v891 = vsub.f32 1.0, %v888
    %893 = vrot.lane.b32.xlu0 %v888, 96
    %v894 = vpop.permute.xlu0 %893
    %v896 = vsub.f32 %v891, %v894
    %v897 = vmul.f32 %v888, %v727
    %v898 = vmul.f32 %v888, %v731
    %900 = vrot.lane.b32.xlu0 %v898, 96
    %v901 = vpop.permute.xlu0 %900
    %v903 = vadd.f32 %v897, %v901
    %v904 = vmul.f32 %v896, %v722
    %v905 = vadd.f32 %v903, %v904
    %906 = vst.msk [vmem:[#allocation2] sm:$0xff] %vm70, %v905
    %s907 = scalar_lea.vmem [#allocation6], 16
    %908 = vst.msk [vmem:[%s907] sm:$0xff] %vm70, %v905
    %s909 = scalar_lea.vmem %s0, 24
    %v910 = vld [vmem:[%s909] sm:$0xff]
    %v911 = vld [vmem:[#allocation2] sm:$0xff]
    %v913 = vsel %vm70, %v911, 0
    %915 = vmatprep.subr.mxu0 0.0
    %916 = vmatpush1.msra.mxu0 %v46
    %917 = vmatprep.subr.mxu0 0.0
    %918 = vmatpush1.msra.mxu0 %v47
    %919 = vmatprep.subr.mxu0 0.0
    %920 = vmatpush1.msra.mxu0 %v48
    %921 = vmatprep.subr.mxu0 0.0
    %922 = vmatpush1.msra.mxu0 %v49
    %923 = vmatprep.subr.mxu0 0.0
    %924 = vmatpush1.msra.mxu0 0.0
    %925 = vmatprep.subr.mxu0 0.0
    %926 = vmatpush1.msra.mxu0 0.0
    %927 = vmatprep.subr.mxu0 0.0
    %928 = vmatpush1.msra.mxu0 0.0
    %929 = vmatprep.subr.mxu0 0.0
    %930 = vmatpush1.msra.mxu0 0.0
    %931 = vmatprep.subr.mxu0 0.0
    %932 = vmatpush1.msra.mxu0 0.0
    %933 = vmatprep.subr.mxu0 0.0
    %934 = vmatpush1.msra.mxu0 0.0
    %935 = vmatprep.subr.mxu0 0.0
    %936 = vmatpush1.msra.mxu0 0.0
    %937 = vmatprep.subr.mxu0 0.0
    %938 = vmatpush1.msra.mxu0 0.0
    %939 = vmatprep.subr.mxu0 0.0
    %940 = vmatpush1.msra.mxu0 0.0
    %941 = vmatprep.subr.mxu0 0.0
    %942 = vmatpush1.msra.mxu0 0.0
    %943 = vmatprep.subr.mxu0 0.0
    %944 = vmatpush1.msra.mxu0 0.0
    %945 = vmatprep.subr.mxu0 0.0
    %946 = vmatpush1.msra.mxu0 0.0
    %947 = vmatprep.subr.mxu0 0.0
    %948 = vmatpush1.msra.mxu0 0.0
    %949 = vmatprep.subr.mxu0 0.0
    %950 = vmatpush1.msra.mxu0 0.0
    %951 = vmatprep.subr.mxu0 0.0
    %952 = vmatpush1.msra.mxu0 0.0
    %953 = vmatprep.subr.mxu0 0.0
    %954 = vmatpush1.msra.mxu0 0.0
    %955 = vmatprep.subr.mxu0 0.0
    %956 = vmatpush1.msra.mxu0 0.0
    %957 = vmatprep.subr.mxu0 0.0
    %958 = vmatpush1.msra.mxu0 0.0
    %959 = vmatprep.subr.mxu0 0.0
    %960 = vmatpush1.msra.mxu0 0.0
    %961 = vmatprep.subr.mxu0 0.0
    %962 = vmatpush1.msra.mxu0 0.0
    %963 = vmatprep.subr.mxu0 0.0
    %964 = vmatpush1.msra.mxu0 0.0
    %965 = vmatprep.subr.mxu0 0.0
    %966 = vmatpush1.msra.mxu0 0.0
    %967 = vmatprep.subr.mxu0 0.0
    %968 = vmatpush1.msra.mxu0 0.0
    %969 = vmatprep.subr.mxu0 0.0
    %970 = vmatpush1.msra.mxu0 0.0
    %971 = vmatprep.subr.mxu0 0.0
    %972 = vmatpush1.msra.mxu0 0.0
    %973 = vmatprep.subr.mxu0 0.0
    %974 = vmatpush1.msra.mxu0 0.0
    %975 = vmatprep.subr.mxu0 0.0
    %976 = vmatpush1.msra.mxu0 0.0
    %977 = vmatprep.subr.mxu0 0.0
    %978 = vmatpush1.msra.mxu0 0.0
    %979 = vmatprep.mubr.f32.mxu0 0.0
    %980 = vmatmul.mubr.f32.gmra.mrb[0].mxu0 %v913
    %v981 = vpop.f32.mrb[0].mxu0
    %v982 = vadd.f32 0.0, %v981
    %v983 = vpop.f32.mrb[0].mxu0
    %984 = vdwg.mxu0
    %v985 = vadd.f32 %v910, %v982
    %v986 = vadd.f32 %v985, %v149
    %v987 = vxor.u32 %v986, 2147483648
    %v988 = vmul.f32 %v987, 1.442695
    %v989 = vpow.pop %v988
    %v990 = vadd.f32 %v989, 1.0
    %v991 = vrcp.pop %v990
    %v992 = vmul.f32 1.0, %v991
    %v993 = vtanh.pop %v986
    %995 = vrot.lane.b32.xlu0 %v993, 96
    %v996 = vpop.permute.xlu0 %995
    %v998 = vmul.f32 %v992, %v996
    %v999 = vtanh.pop %v910
    %v1000 = vtanh.pop %v982
    %1002 = vrot.lane.b32.xlu0 %v999, 64
    %v1003 = vpop.permute.xlu0 %1002
    %1006 = vrot.lane.b32.xlu0 %v1000, 96
    %v1007 = vpop.permute.xlu0 %1006
    %1010 = vrot.lane.b32.xlu0 %v998, 64
    %v1011 = vpop.permute.xlu0 %1010
    %v1013 = vsel %vm70, %v1003, %v1007
    %v1014 = vsel %vm179, %v1013, %v1011
    %v1016 = vsel %vm187, %v1014, 0
    %1018 = vmatprep.subr.mxu0 0.0
    %1019 = vmatpush1.msra.mxu0 %v50
    %1020 = vmatprep.subr.mxu0 0.0
    %1021 = vmatpush1.msra.mxu0 %v51
    %1022 = vmatprep.subr.mxu0 0.0
    %1023 = vmatpush1.msra.mxu0 %v52
    %1024 = vmatprep.subr.mxu0 0.0
    %1025 = vmatpush1.msra.mxu0 %v53
    %1026 = vmatprep.subr.mxu0 0.0
    %1027 = vmatpush1.msra.mxu0 %v54
    %1028 = vmatprep.subr.mxu0 0.0
    %1029 = vmatpush1.msra.mxu0 %v55
    %1030 = vmatprep.subr.mxu0 0.0
    %1031 = vmatpush1.msra.mxu0 %v56
    %1032 = vmatprep.subr.mxu0 0.0
    %1033 = vmatpush1.msra.mxu0 %v57
    %1034 = vmatprep.subr.mxu0 0.0
    %1035 = vmatpush1.msra.mxu0 %v58
    %1036 = vmatprep.subr.mxu0 0.0
    %1037 = vmatpush1.msra.mxu0 %v59
    %1038 = vmatprep.subr.mxu0 0.0
    %1039 = vmatpush1.msra.mxu0 %v60
    %1040 = vmatprep.subr.mxu0 0.0
    %1041 = vmatpush1.msra.mxu0 %v61
    %1042 = vmatprep.subr.mxu0 0.0
    %1043 = vmatpush1.msra.mxu0 0.0
    %1044 = vmatprep.subr.mxu0 0.0
    %1045 = vmatpush1.msra.mxu0 0.0
    %1046 = vmatprep.subr.mxu0 0.0
    %1047 = vmatpush1.msra.mxu0 0.0
    %1048 = vmatprep.subr.mxu0 0.0
    %1049 = vmatpush1.msra.mxu0 0.0
    %1050 = vmatprep.subr.mxu0 0.0
    %1051 = vmatpush1.msra.mxu0 0.0
    %1052 = vmatprep.subr.mxu0 0.0
    %1053 = vmatpush1.msra.mxu0 0.0
    %1054 = vmatprep.subr.mxu0 0.0
    %1055 = vmatpush1.msra.mxu0 0.0
    %1056 = vmatprep.subr.mxu0 0.0
    %1057 = vmatpush1.msra.mxu0 0.0
    %1058 = vmatprep.subr.mxu0 0.0
    %1059 = vmatpush1.msra.mxu0 0.0
    %1060 = vmatprep.subr.mxu0 0.0
    %1061 = vmatpush1.msra.mxu0 0.0
    %1062 = vmatprep.subr.mxu0 0.0
    %1063 = vmatpush1.msra.mxu0 0.0
    %1064 = vmatprep.subr.mxu0 0.0
    %1065 = vmatpush1.msra.mxu0 0.0
    %1066 = vmatprep.subr.mxu0 0.0
    %1067 = vmatpush1.msra.mxu0 0.0
    %1068 = vmatprep.subr.mxu0 0.0
    %1069 = vmatpush1.msra.mxu0 0.0
    %1070 = vmatprep.subr.mxu0 0.0
    %1071 = vmatpush1.msra.mxu0 0.0
    %1072 = vmatprep.subr.mxu0 0.0
    %1073 = vmatpush1.msra.mxu0 0.0
    %1074 = vmatprep.subr.mxu0 0.0
    %1075 = vmatpush1.msra.mxu0 0.0
    %1076 = vmatprep.subr.mxu0 0.0
    %1077 = vmatpush1.msra.mxu0 0.0
    %1078 = vmatprep.subr.mxu0 0.0
    %1079 = vmatpush1.msra.mxu0 0.0
    %1080 = vmatprep.subr.mxu0 0.0
    %1081 = vmatpush1.msra.mxu0 0.0
    %1082 = vmatprep.mubr.f32.mxu0 0.0
    %1083 = vmatmul.mubr.f32.gmra.mrb[0].mxu0 %v1016
    %v1084 = vpop.f32.mrb[0].mxu0
    %v1085 = vadd.f32 %v185, %v1084
    %v1086 = vpop.f32.mrb[0].mxu0
    %1087 = vdwg.mxu0
    %v1088 = vxor.u32 %v1085, 2147483648
    %v1089 = vmul.f32 %v1088, 1.442695
    %v1090 = vpow.pop %v1089
    %v1091 = vadd.f32 %v1090, 1.0
    %v1092 = vrcp.pop %v1091
    %v1093 = vmul.f32 1.0, %v1092
    %v1095 = vsel %vm70, %v1093, 0
    %1097 = vmatprep.subr.mxu0 0.0
    %1098 = vmatpush1.msra.mxu0 %v62
    %1099 = vmatprep.subr.mxu0 0.0
    %1100 = vmatpush1.msra.mxu0 %v63
    %1101 = vmatprep.subr.mxu0 0.0
    %1102 = vmatpush1.msra.mxu0 %v64
    %1103 = vmatprep.subr.mxu0 0.0
    %1104 = vmatpush1.msra.mxu0 %v65
    %1105 = vmatprep.subr.mxu0 0.0
    %1106 = vmatpush1.msra.mxu0 0.0
    %1107 = vmatprep.subr.mxu0 0.0
    %1108 = vmatpush1.msra.mxu0 0.0
    %1109 = vmatprep.subr.mxu0 0.0
    %1110 = vmatpush1.msra.mxu0 0.0
    %1111 = vmatprep.subr.mxu0 0.0
    %1112 = vmatpush1.msra.mxu0 0.0
    %1113 = vmatprep.subr.mxu0 0.0
    %1114 = vmatpush1.msra.mxu0 0.0
    %1115 = vmatprep.subr.mxu0 0.0
    %1116 = vmatpush1.msra.mxu0 0.0
    %1117 = vmatprep.subr.mxu0 0.0
    %1118 = vmatpush1.msra.mxu0 0.0
    %1119 = vmatprep.subr.mxu0 0.0
    %1120 = vmatpush1.msra.mxu0 0.0
    %1121 = vmatprep.subr.mxu0 0.0
    %1122 = vmatpush1.msra.mxu0 0.0
    %1123 = vmatprep.subr.mxu0 0.0
    %1124 = vmatpush1.msra.mxu0 0.0
    %1125 = vmatprep.subr.mxu0 0.0
    %1126 = vmatpush1.msra.mxu0 0.0
    %1127 = vmatprep.subr.mxu0 0.0
    %1128 = vmatpush1.msra.mxu0 0.0
    %1129 = vmatprep.subr.mxu0 0.0
    %1130 = vmatpush1.msra.mxu0 0.0
    %1131 = vmatprep.subr.mxu0 0.0
    %1132 = vmatpush1.msra.mxu0 0.0
    %1133 = vmatprep.subr.mxu0 0.0
    %1134 = vmatpush1.msra.mxu0 0.0
    %1135 = vmatprep.subr.mxu0 0.0
    %1136 = vmatpush1.msra.mxu0 0.0
    %1137 = vmatprep.subr.mxu0 0.0
    %1138 = vmatpush1.msra.mxu0 0.0
    %1139 = vmatprep.subr.mxu0 0.0
    %1140 = vmatpush1.msra.mxu0 0.0
    %1141 = vmatprep.subr.mxu0 0.0
    %1142 = vmatpush1.msra.mxu0 0.0
    %1143 = vmatprep.subr.mxu0 0.0
    %1144 = vmatpush1.msra.mxu0 0.0
    %1145 = vmatprep.subr.mxu0 0.0
    %1146 = vmatpush1.msra.mxu0 0.0
    %1147 = vmatprep.subr.mxu0 0.0
    %1148 = vmatpush1.msra.mxu0 0.0
    %1149 = vmatprep.subr.mxu0 0.0
    %1150 = vmatpush1.msra.mxu0 0.0
    %1151 = vmatprep.subr.mxu0 0.0
    %1152 = vmatpush1.msra.mxu0 0.0
    %1153 = vmatprep.subr.mxu0 0.0
    %1154 = vmatpush1.msra.mxu0 0.0
    %1155 = vmatprep.subr.mxu0 0.0
    %1156 = vmatpush1.msra.mxu0 0.0
    %1157 = vmatprep.subr.mxu0 0.0
    %1158 = vmatpush1.msra.mxu0 0.0
    %1159 = vmatprep.subr.mxu0 0.0
    %1160 = vmatpush1.msra.mxu0 0.0
    %1161 = vmatprep.mubr.f32.mxu0 0.0
    %1162 = vmatmul.mubr.f32.gmra.mrb[0].mxu0 %v1095
    %v1163 = vpop.f32.mrb[0].mxu0
    %v1164 = vadd.f32 0.0, %v1163
    %v1165 = vpop.f32.mrb[0].mxu0
    %1166 = vdwg.mxu0
    %v1167 = vsub.f32 1.0, %v1164
    %1169 = vrot.lane.b32.xlu0 %v1164, 96
    %v1170 = vpop.permute.xlu0 %1169
    %v1172 = vsub.f32 %v1167, %v1170
    %v1173 = vmul.f32 %v1164, %v1003
    %v1174 = vmul.f32 %v1164, %v1007
    %1176 = vrot.lane.b32.xlu0 %v1174, 96
    %v1177 = vpop.permute.xlu0 %1176
    %v1179 = vadd.f32 %v1173, %v1177
    %v1180 = vmul.f32 %v1172, %v998
    %v1181 = vadd.f32 %v1179, %v1180
    %1182 = vst.msk [vmem:[#allocation2] sm:$0xff] %vm70, %v1181
    %s1183 = scalar_lea.vmem [#allocation6], 24
    %1184 = vst.msk [vmem:[%s1183] sm:$0xff] %vm70, %v1181
    %s1185 = scalar_lea.vmem %s0, 32
    %v1186 = vld [vmem:[%s1185] sm:$0xff]
    %v1187 = vld [vmem:[#allocation2] sm:$0xff]
    %v1189 = vsel %vm70, %v1187, 0
    %1191 = vmatprep.subr.mxu0 0.0
    %1192 = vmatpush1.msra.mxu0 %v46
    %1193 = vmatprep.subr.mxu0 0.0
    %1194 = vmatpush1.msra.mxu0 %v47
    %1195 = vmatprep.subr.mxu0 0.0
    %1196 = vmatpush1.msra.mxu0 %v48
    %1197 = vmatprep.subr.mxu0 0.0
    %1198 = vmatpush1.msra.mxu0 %v49
    %1199 = vmatprep.subr.mxu0 0.0
    %1200 = vmatpush1.msra.mxu0 0.0
    %1201 = vmatprep.subr.mxu0 0.0
    %1202 = vmatpush1.msra.mxu0 0.0
    %1203 = vmatprep.subr.mxu0 0.0
    %1204 = vmatpush1.msra.mxu0 0.0
    %1205 = vmatprep.subr.mxu0 0.0
    %1206 = vmatpush1.msra.mxu0 0.0
    %1207 = vmatprep.subr.mxu0 0.0
    %1208 = vmatpush1.msra.mxu0 0.0
    %1209 = vmatprep.subr.mxu0 0.0
    %1210 = vmatpush1.msra.mxu0 0.0
    %1211 = vmatprep.subr.mxu0 0.0
    %1212 = vmatpush1.msra.mxu0 0.0
    %1213 = vmatprep.subr.mxu0 0.0
    %1214 = vmatpush1.msra.mxu0 0.0
    %1215 = vmatprep.subr.mxu0 0.0
    %1216 = vmatpush1.msra.mxu0 0.0
    %1217 = vmatprep.subr.mxu0 0.0
    %1218 = vmatpush1.msra.mxu0 0.0
    %1219 = vmatprep.subr.mxu0 0.0
    %1220 = vmatpush1.msra.mxu0 0.0
    %1221 = vmatprep.subr.mxu0 0.0
    %1222 = vmatpush1.msra.mxu0 0.0
    %1223 = vmatprep.subr.mxu0 0.0
    %1224 = vmatpush1.msra.mxu0 0.0
    %1225 = vmatprep.subr.mxu0 0.0
    %1226 = vmatpush1.msra.mxu0 0.0
    %1227 = vmatprep.subr.mxu0 0.0
    %1228 = vmatpush1.msra.mxu0 0.0
    %1229 = vmatprep.subr.mxu0 0.0
    %1230 = vmatpush1.msra.mxu0 0.0
    %1231 = vmatprep.subr.mxu0 0.0
    %1232 = vmatpush1.msra.mxu0 0.0
    %1233 = vmatprep.subr.mxu0 0.0
    %1234 = vmatpush1.msra.mxu0 0.0
    %1235 = vmatprep.subr.mxu0 0.0
    %1236 = vmatpush1.msra.mxu0 0.0
    %1237 = vmatprep.subr.mxu0 0.0
    %1238 = vmatpush1.msra.mxu0 0.0
    %1239 = vmatprep.subr.mxu0 0.0
    %1240 = vmatpush1.msra.mxu0 0.0
    %1241 = vmatprep.subr.mxu0 0.0
    %1242 = vmatpush1.msra.mxu0 0.0
    %1243 = vmatprep.subr.mxu0 0.0
    %1244 = vmatpush1.msra.mxu0 0.0
    %1245 = vmatprep.subr.mxu0 0.0
    %1246 = vmatpush1.msra.mxu0 0.0
    %1247 = vmatprep.subr.mxu0 0.0
    %1248 = vmatpush1.msra.mxu0 0.0
    %1249 = vmatprep.subr.mxu0 0.0
    %1250 = vmatpush1.msra.mxu0 0.0
    %1251 = vmatprep.subr.mxu0 0.0
    %1252 = vmatpush1.msra.mxu0 0.0
    %1253 = vmatprep.subr.mxu0 0.0
    %1254 = vmatpush1.msra.mxu0 0.0
    %1255 = vmatprep.mubr.f32.mxu0 0.0
    %1256 = vmatmul.mubr.f32.gmra.mrb[0].mxu0 %v1189
    %v1257 = vpop.f32.mrb[0].mxu0
    %v1258 = vadd.f32 0.0, %v1257
    %v1259 = vpop.f32.mrb[0].mxu0
    %1260 = vdwg.mxu0
    %v1261 = vadd.f32 %v1186, %v1258
    %v1262 = vadd.f32 %v1261, %v149
    %v1263 = vxor.u32 %v1262, 2147483648
    %v1264 = vmul.f32 %v1263, 1.442695
    %v1265 = vpow.pop %v1264
    %v1266 = vadd.f32 %v1265, 1.0
    %v1267 = vrcp.pop %v1266
    %v1268 = vmul.f32 1.0, %v1267
    %v1269 = vtanh.pop %v1262
    %1271 = vrot.lane.b32.xlu0 %v1269, 96
    %v1272 = vpop.permute.xlu0 %1271
    %v1274 = vmul.f32 %v1268, %v1272
    %v1275 = vtanh.pop %v1186
    %v1276 = vtanh.pop %v1258
    %1278 = vrot.lane.b32.xlu0 %v1275, 64
    %v1279 = vpop.permute.xlu0 %1278
    %1282 = vrot.lane.b32.xlu0 %v1276, 96
    %v1283 = vpop.permute.xlu0 %1282
    %1286 = vrot.lane.b32.xlu0 %v1274, 64
    %v1287 = vpop.permute.xlu0 %1286
    %v1289 = vsel %vm70, %v1279, %v1283
    %v1290 = vsel %vm179, %v1289, %v1287
    %v1292 = vsel %vm187, %v1290, 0
    %1294 = vmatprep.subr.mxu0 0.0
    %1295 = vmatpush1.msra.mxu0 %v50
    %1296 = vmatprep.subr.mxu0 0.0
    %1297 = vmatpush1.msra.mxu0 %v51
    %1298 = vmatprep.subr.mxu0 0.0
    %1299 = vmatpush1.msra.mxu0 %v52
    %1300 = vmatprep.subr.mxu0 0.0
    %1301 = vmatpush1.msra.mxu0 %v53
    %1302 = vmatprep.subr.mxu0 0.0
    %1303 = vmatpush1.msra.mxu0 %v54
    %1304 = vmatprep.subr.mxu0 0.0
    %1305 = vmatpush1.msra.mxu0 %v55
    %1306 = vmatprep.subr.mxu0 0.0
    %1307 = vmatpush1.msra.mxu0 %v56
    %1308 = vmatprep.subr.mxu0 0.0
    %1309 = vmatpush1.msra.mxu0 %v57
    %1310 = vmatprep.subr.mxu0 0.0
    %1311 = vmatpush1.msra.mxu0 %v58
    %1312 = vmatprep.subr.mxu0 0.0
    %1313 = vmatpush1.msra.mxu0 %v59
    %1314 = vmatprep.subr.mxu0 0.0
    %1315 = vmatpush1.msra.mxu0 %v60
    %1316 = vmatprep.subr.mxu0 0.0
    %1317 = vmatpush1.msra.mxu0 %v61
    %1318 = vmatprep.subr.mxu0 0.0
    %1319 = vmatpush1.msra.mxu0 0.0
    %1320 = vmatprep.subr.mxu0 0.0
    %1321 = vmatpush1.msra.mxu0 0.0
    %1322 = vmatprep.subr.mxu0 0.0
    %1323 = vmatpush1.msra.mxu0 0.0
    %1324 = vmatprep.subr.mxu0 0.0
    %1325 = vmatpush1.msra.mxu0 0.0
    %1326 = vmatprep.subr.mxu0 0.0
    %1327 = vmatpush1.msra.mxu0 0.0
    %1328 = vmatprep.subr.mxu0 0.0
    %1329 = vmatpush1.msra.mxu0 0.0
    %1330 = vmatprep.subr.mxu0 0.0
    %1331 = vmatpush1.msra.mxu0 0.0
    %1332 = vmatprep.subr.mxu0 0.0
    %1333 = vmatpush1.msra.mxu0 0.0
    %1334 = vmatprep.subr.mxu0 0.0
    %1335 = vmatpush1.msra.mxu0 0.0
    %1336 = vmatprep.subr.mxu0 0.0
    %1337 = vmatpush1.msra.mxu0 0.0
    %1338 = vmatprep.subr.mxu0 0.0
    %1339 = vmatpush1.msra.mxu0 0.0
    %1340 = vmatprep.subr.mxu0 0.0
    %1341 = vmatpush1.msra.mxu0 0.0
    %1342 = vmatprep.subr.mxu0 0.0
    %1343 = vmatpush1.msra.mxu0 0.0
    %1344 = vmatprep.subr.mxu0 0.0
    %1345 = vmatpush1.msra.mxu0 0.0
    %1346 = vmatprep.subr.mxu0 0.0
    %1347 = vmatpush1.msra.mxu0 0.0
    %1348 = vmatprep.subr.mxu0 0.0
    %1349 = vmatpush1.msra.mxu0 0.0
    %1350 = vmatprep.subr.mxu0 0.0
    %1351 = vmatpush1.msra.mxu0 0.0
    %1352 = vmatprep.subr.mxu0 0.0
    %1353 = vmatpush1.msra.mxu0 0.0
    %1354 = vmatprep.subr.mxu0 0.0
    %1355 = vmatpush1.msra.mxu0 0.0
    %1356 = vmatprep.subr.mxu0 0.0
    %1357 = vmatpush1.msra.mxu0 0.0
    %1358 = vmatprep.mubr.f32.mxu0 0.0
    %1359 = vmatmul.mubr.f32.gmra.mrb[0].mxu0 %v1292
    %v1360 = vpop.f32.mrb[0].mxu0
    %v1361 = vadd.f32 %v185, %v1360
    %v1362 = vpop.f32.mrb[0].mxu0
    %1363 = vdwg.mxu0
    %v1364 = vxor.u32 %v1361, 2147483648
    %v1365 = vmul.f32 %v1364, 1.442695
    %v1366 = vpow.pop %v1365
    %v1367 = vadd.f32 %v1366, 1.0
    %v1368 = vrcp.pop %v1367
    %v1369 = vmul.f32 1.0, %v1368
    %v1371 = vsel %vm70, %v1369, 0
    %1373 = vmatprep.subr.mxu0 0.0
    %1374 = vmatpush1.msra.mxu0 %v62
    %1375 = vmatprep.subr.mxu0 0.0
    %1376 = vmatpush1.msra.mxu0 %v63
    %1377 = vmatprep.subr.mxu0 0.0
    %1378 = vmatpush1.msra.mxu0 %v64
    %1379 = vmatprep.subr.mxu0 0.0
    %1380 = vmatpush1.msra.mxu0 %v65
    %1381 = vmatprep.subr.mxu0 0.0
    %1382 = vmatpush1.msra.mxu0 0.0
    %1383 = vmatprep.subr.mxu0 0.0
    %1384 = vmatpush1.msra.mxu0 0.0
    %1385 = vmatprep.subr.mxu0 0.0
    %1386 = vmatpush1.msra.mxu0 0.0
    %1387 = vmatprep.subr.mxu0 0.0
    %1388 = vmatpush1.msra.mxu0 0.0
    %1389 = vmatprep.subr.mxu0 0.0
    %1390 = vmatpush1.msra.mxu0 0.0
    %1391 = vmatprep.subr.mxu0 0.0
    %1392 = vmatpush1.msra.mxu0 0.0
    %1393 = vmatprep.subr.mxu0 0.0
    %1394 = vmatpush1.msra.mxu0 0.0
    %1395 = vmatprep.subr.mxu0 0.0
    %1396 = vmatpush1.msra.mxu0 0.0
    %1397 = vmatprep.subr.mxu0 0.0
    %1398 = vmatpush1.msra.mxu0 0.0
    %1399 = vmatprep.subr.mxu0 0.0
    %1400 = vmatpush1.msra.mxu0 0.0
    %1401 = vmatprep.subr.mxu0 0.0
    %1402 = vmatpush1.msra.mxu0 0.0
    %1403 = vmatprep.subr.mxu0 0.0
    %1404 = vmatpush1.msra.mxu0 0.0
    %1405 = vmatprep.subr.mxu0 0.0
    %1406 = vmatpush1.msra.mxu0 0.0
    %1407 = vmatprep.subr.mxu0 0.0
    %1408 = vmatpush1.msra.mxu0 0.0
    %1409 = vmatprep.subr.mxu0 0.0
    %1410 = vmatpush1.msra.mxu0 0.0
    %1411 = vmatprep.subr.mxu0 0.0
    %1412 = vmatpush1.msra.mxu0 0.0
    %1413 = vmatprep.subr.mxu0 0.0
    %1414 = vmatpush1.msra.mxu0 0.0
    %1415 = vmatprep.subr.mxu0 0.0
    %1416 = vmatpush1.msra.mxu0 0.0
    %1417 = vmatprep.subr.mxu0 0.0
    %1418 = vmatpush1.msra.mxu0 0.0
    %1419 = vmatprep.subr.mxu0 0.0
    %1420 = vmatpush1.msra.mxu0 0.0
    %1421 = vmatprep.subr.mxu0 0.0
    %1422 = vmatpush1.msra.mxu0 0.0
    %1423 = vmatprep.subr.mxu0 0.0
    %1424 = vmatpush1.msra.mxu0 0.0
    %1425 = vmatprep.subr.mxu0 0.0
    %1426 = vmatpush1.msra.mxu0 0.0
    %1427 = vmatprep.subr.mxu0 0.0
    %1428 = vmatpush1.msra.mxu0 0.0
    %1429 = vmatprep.subr.mxu0 0.0
    %1430 = vmatpush1.msra.mxu0 0.0
    %1431 = vmatprep.subr.mxu0 0.0
    %1432 = vmatpush1.msra.mxu0 0.0
    %1433 = vmatprep.subr.mxu0 0.0
    %1434 = vmatpush1.msra.mxu0 0.0
    %1435 = vmatprep.subr.mxu0 0.0
    %1436 = vmatpush1.msra.mxu0 0.0
    %1437 = vmatprep.mubr.f32.mxu0 0.0
    %1438 = vmatmul.mubr.f32.gmra.mrb[0].mxu0 %v1371
    %v1439 = vpop.f32.mrb[0].mxu0
    %v1440 = vadd.f32 0.0, %v1439
    %v1441 = vpop.f32.mrb[0].mxu0
    %1442 = vdwg.mxu0
    %v1443 = vsub.f32 1.0, %v1440
    %1445 = vrot.lane.b32.xlu0 %v1440, 96
    %v1446 = vpop.permute.xlu0 %1445
    %v1448 = vsub.f32 %v1443, %v1446
    %v1449 = vmul.f32 %v1440, %v1279
    %v1450 = vmul.f32 %v1440, %v1283
    %1452 = vrot.lane.b32.xlu0 %v1450, 96
    %v1453 = vpop.permute.xlu0 %1452
    %v1455 = vadd.f32 %v1449, %v1453
    %v1456 = vmul.f32 %v1448, %v1274
    %v1457 = vadd.f32 %v1455, %v1456
    %1458 = vst.msk [vmem:[#allocation2] sm:$0xff] %vm70, %v1457
    %s1459 = scalar_lea.vmem [#allocation6], 32
    %1460 = vst.msk [vmem:[%s1459] sm:$0xff] %vm70, %v1457
    %s1461 = scalar_lea.vmem %s0, 40
    %v1462 = vld [vmem:[%s1461] sm:$0xff]
    %v1463 = vld [vmem:[#allocation2] sm:$0xff]
    %v1465 = vsel %vm70, %v1463, 0
    %1467 = vmatprep.subr.mxu0 0.0
    %1468 = vmatpush1.msra.mxu0 %v46
    %1469 = vmatprep.subr.mxu0 0.0
    %1470 = vmatpush1.msra.mxu0 %v47
    %1471 = vmatprep.subr.mxu0 0.0
    %1472 = vmatpush1.msra.mxu0 %v48
    %1473 = vmatprep.subr.mxu0 0.0
    %1474 = vmatpush1.msra.mxu0 %v49
    %1475 = vmatprep.subr.mxu0 0.0
    %1476 = vmatpush1.msra.mxu0 0.0
    %1477 = vmatprep.subr.mxu0 0.0
    %1478 = vmatpush1.msra.mxu0 0.0
    %1479 = vmatprep.subr.mxu0 0.0
    %1480 = vmatpush1.msra.mxu0 0.0
    %1481 = vmatprep.subr.mxu0 0.0
    %1482 = vmatpush1.msra.mxu0 0.0
    %1483 = vmatprep.subr.mxu0 0.0
    %1484 = vmatpush1.msra.mxu0 0.0
    %1485 = vmatprep.subr.mxu0 0.0
    %1486 = vmatpush1.msra.mxu0 0.0
    %1487 = vmatprep.subr.mxu0 0.0
    %1488 = vmatpush1.msra.mxu0 0.0
    %1489 = vmatprep.subr.mxu0 0.0
    %1490 = vmatpush1.msra.mxu0 0.0
    %1491 = vmatprep.subr.mxu0 0.0
    %1492 = vmatpush1.msra.mxu0 0.0
    %1493 = vmatprep.subr.mxu0 0.0
    %1494 = vmatpush1.msra.mxu0 0.0
    %1495 = vmatprep.subr.mxu0 0.0
    %1496 = vmatpush1.msra.mxu0 0.0
    %1497 = vmatprep.subr.mxu0 0.0
    %1498 = vmatpush1.msra.mxu0 0.0
    %1499 = vmatprep.subr.mxu0 0.0
    %1500 = vmatpush1.msra.mxu0 0.0
    %1501 = vmatprep.subr.mxu0 0.0
    %1502 = vmatpush1.msra.mxu0 0.0
    %1503 = vmatprep.subr.mxu0 0.0
    %1504 = vmatpush1.msra.mxu0 0.0
    %1505 = vmatprep.subr.mxu0 0.0
    %1506 = vmatpush1.msra.mxu0 0.0
    %1507 = vmatprep.subr.mxu0 0.0
    %1508 = vmatpush1.msra.mxu0 0.0
    %1509 = vmatprep.subr.mxu0 0.0
    %1510 = vmatpush1.msra.mxu0 0.0
    %1511 = vmatprep.subr.mxu0 0.0
    %1512 = vmatpush1.msra.mxu0 0.0
    %1513 = vmatprep.subr.mxu0 0.0
    %1514 = vmatpush1.msra.mxu0 0.0
    %1515 = vmatprep.subr.mxu0 0.0
    %1516 = vmatpush1.msra.mxu0 0.0
    %1517 = vmatprep.subr.mxu0 0.0
    %1518 = vmatpush1.msra.mxu0 0.0
    %1519 = vmatprep.subr.mxu0 0.0
    %1520 = vmatpush1.msra.mxu0 0.0
    %1521 = vmatprep.subr.mxu0 0.0
    %1522 = vmatpush1.msra.mxu0 0.0
    %1523 = vmatprep.subr.mxu0 0.0
    %1524 = vmatpush1.msra.mxu0 0.0
    %1525 = vmatprep.subr.mxu0 0.0
    %1526 = vmatpush1.msra.mxu0 0.0
    %1527 = vmatprep.subr.mxu0 0.0
    %1528 = vmatpush1.msra.mxu0 0.0
    %1529 = vmatprep.subr.mxu0 0.0
    %1530 = vmatpush1.msra.mxu0 0.0
    %1531 = vmatprep.mubr.f32.mxu0 0.0
    %1532 = vmatmul.mubr.f32.gmra.mrb[0].mxu0 %v1465
    %v1533 = vpop.f32.mrb[0].mxu0
    %v1534 = vadd.f32 0.0, %v1533
    %v1535 = vpop.f32.mrb[0].mxu0
    %1536 = vdwg.mxu0
    %v1537 = vadd.f32 %v1462, %v1534
    %v1538 = vadd.f32 %v1537, %v149
    %v1539 = vxor.u32 %v1538, 2147483648
    %v1540 = vmul.f32 %v1539, 1.442695
    %v1541 = vpow.pop %v1540
    %v1542 = vadd.f32 %v1541, 1.0
    %v1543 = vrcp.pop %v1542
    %v1544 = vmul.f32 1.0, %v1543
    %v1545 = vtanh.pop %v1538
    %1547 = vrot.lane.b32.xlu0 %v1545, 96
    %v1548 = vpop.permute.xlu0 %1547
    %v1550 = vmul.f32 %v1544, %v1548
    %v1551 = vtanh.pop %v1462
    %v1552 = vtanh.pop %v1534
    %1554 = vrot.lane.b32.xlu0 %v1551, 64
    %v1555 = vpop.permute.xlu0 %1554
    %1558 = vrot.lane.b32.xlu0 %v1552, 96
    %v1559 = vpop.permute.xlu0 %1558
    %1562 = vrot.lane.b32.xlu0 %v1550, 64
    %v1563 = vpop.permute.xlu0 %1562
    %v1565 = vsel %vm70, %v1555, %v1559
    %v1566 = vsel %vm179, %v1565, %v1563
    %v1568 = vsel %vm187, %v1566, 0
    %1570 = vmatprep.subr.mxu0 0.0
    %1571 = vmatpush1.msra.mxu0 %v50
    %1572 = vmatprep.subr.mxu0 0.0
    %1573 = vmatpush1.msra.mxu0 %v51
    %1574 = vmatprep.subr.mxu0 0.0
    %1575 = vmatpush1.msra.mxu0 %v52
    %1576 = vmatprep.subr.mxu0 0.0
    %1577 = vmatpush1.msra.mxu0 %v53
    %1578 = vmatprep.subr.mxu0 0.0
    %1579 = vmatpush1.msra.mxu0 %v54
    %1580 = vmatprep.subr.mxu0 0.0
    %1581 = vmatpush1.msra.mxu0 %v55
    %1582 = vmatprep.subr.mxu0 0.0
    %1583 = vmatpush1.msra.mxu0 %v56
    %1584 = vmatprep.subr.mxu0 0.0
    %1585 = vmatpush1.msra.mxu0 %v57
    %1586 = vmatprep.subr.mxu0 0.0
    %1587 = vmatpush1.msra.mxu0 %v58
    %1588 = vmatprep.subr.mxu0 0.0
    %1589 = vmatpush1.msra.mxu0 %v59
    %1590 = vmatprep.subr.mxu0 0.0
    %1591 = vmatpush1.msra.mxu0 %v60
    %1592 = vmatprep.subr.mxu0 0.0
    %1593 = vmatpush1.msra.mxu0 %v61
    %1594 = vmatprep.subr.mxu0 0.0
    %1595 = vmatpush1.msra.mxu0 0.0
    %1596 = vmatprep.subr.mxu0 0.0
    %1597 = vmatpush1.msra.mxu0 0.0
    %1598 = vmatprep.subr.mxu0 0.0
    %1599 = vmatpush1.msra.mxu0 0.0
    %1600 = vmatprep.subr.mxu0 0.0
    %1601 = vmatpush1.msra.mxu0 0.0
    %1602 = vmatprep.subr.mxu0 0.0
    %1603 = vmatpush1.msra.mxu0 0.0
    %1604 = vmatprep.subr.mxu0 0.0
    %1605 = vmatpush1.msra.mxu0 0.0
    %1606 = vmatprep.subr.mxu0 0.0
    %1607 = vmatpush1.msra.mxu0 0.0
    %1608 = vmatprep.subr.mxu0 0.0
    %1609 = vmatpush1.msra.mxu0 0.0
    %1610 = vmatprep.subr.mxu0 0.0
    %1611 = vmatpush1.msra.mxu0 0.0
    %1612 = vmatprep.subr.mxu0 0.0
    %1613 = vmatpush1.msra.mxu0 0.0
    %1614 = vmatprep.subr.mxu0 0.0
    %1615 = vmatpush1.msra.mxu0 0.0
    %1616 = vmatprep.subr.mxu0 0.0
    %1617 = vmatpush1.msra.mxu0 0.0
    %1618 = vmatprep.subr.mxu0 0.0
    %1619 = vmatpush1.msra.mxu0 0.0
    %1620 = vmatprep.subr.mxu0 0.0
    %1621 = vmatpush1.msra.mxu0 0.0
    %1622 = vmatprep.subr.mxu0 0.0
    %1623 = vmatpush1.msra.mxu0 0.0
    %1624 = vmatprep.subr.mxu0 0.0
    %1625 = vmatpush1.msra.mxu0 0.0
    %1626 = vmatprep.subr.mxu0 0.0
    %1627 = vmatpush1.msra.mxu0 0.0
    %1628 = vmatprep.subr.mxu0 0.0
    %1629 = vmatpush1.msra.mxu0 0.0
    %1630 = vmatprep.subr.mxu0 0.0
    %1631 = vmatpush1.msra.mxu0 0.0
    %1632 = vmatprep.subr.mxu0 0.0
    %1633 = vmatpush1.msra.mxu0 0.0
    %1634 = vmatprep.mubr.f32.mxu0 0.0
    %1635 = vmatmul.mubr.f32.gmra.mrb[0].mxu0 %v1568
    %v1636 = vpop.f32.mrb[0].mxu0
    %v1637 = vadd.f32 %v185, %v1636
    %v1638 = vpop.f32.mrb[0].mxu0
    %1639 = vdwg.mxu0
    %v1640 = vxor.u32 %v1637, 2147483648
    %v1641 = vmul.f32 %v1640, 1.442695
    %v1642 = vpow.pop %v1641
    %v1643 = vadd.f32 %v1642, 1.0
    %v1644 = vrcp.pop %v1643
    %v1645 = vmul.f32 1.0, %v1644
    %v1647 = vsel %vm70, %v1645, 0
    %1649 = vmatprep.subr.mxu0 0.0
    %1650 = vmatpush1.msra.mxu0 %v62
    %1651 = vmatprep.subr.mxu0 0.0
    %1652 = vmatpush1.msra.mxu0 %v63
    %1653 = vmatprep.subr.mxu0 0.0
    %1654 = vmatpush1.msra.mxu0 %v64
    %1655 = vmatprep.subr.mxu0 0.0
    %1656 = vmatpush1.msra.mxu0 %v65
    %1657 = vmatprep.subr.mxu0 0.0
    %1658 = vmatpush1.msra.mxu0 0.0
    %1659 = vmatprep.subr.mxu0 0.0
    %1660 = vmatpush1.msra.mxu0 0.0
    %1661 = vmatprep.subr.mxu0 0.0
    %1662 = vmatpush1.msra.mxu0 0.0
    %1663 = vmatprep.subr.mxu0 0.0
    %1664 = vmatpush1.msra.mxu0 0.0
    %1665 = vmatprep.subr.mxu0 0.0
    %1666 = vmatpush1.msra.mxu0 0.0
    %1667 = vmatprep.subr.mxu0 0.0
    %1668 = vmatpush1.msra.mxu0 0.0
    %1669 = vmatprep.subr.mxu0 0.0
    %1670 = vmatpush1.msra.mxu0 0.0
    %1671 = vmatprep.subr.mxu0 0.0
    %1672 = vmatpush1.msra.mxu0 0.0
    %1673 = vmatprep.subr.mxu0 0.0
    %1674 = vmatpush1.msra.mxu0 0.0
    %1675 = vmatprep.subr.mxu0 0.0
    %1676 = vmatpush1.msra.mxu0 0.0
    %1677 = vmatprep.subr.mxu0 0.0
    %1678 = vmatpush1.msra.mxu0 0.0
    %1679 = vmatprep.subr.mxu0 0.0
    %1680 = vmatpush1.msra.mxu0 0.0
    %1681 = vmatprep.subr.mxu0 0.0
    %1682 = vmatpush1.msra.mxu0 0.0
    %1683 = vmatprep.subr.mxu0 0.0
    %1684 = vmatpush1.msra.mxu0 0.0
    %1685 = vmatprep.subr.mxu0 0.0
    %1686 = vmatpush1.msra.mxu0 0.0
    %1687 = vmatprep.subr.mxu0 0.0
    %1688 = vmatpush1.msra.mxu0 0.0
    %1689 = vmatprep.subr.mxu0 0.0
    %1690 = vmatpush1.msra.mxu0 0.0
    %1691 = vmatprep.subr.mxu0 0.0
    %1692 = vmatpush1.msra.mxu0 0.0
    %1693 = vmatprep.subr.mxu0 0.0
    %1694 = vmatpush1.msra.mxu0 0.0
    %1695 = vmatprep.subr.mxu0 0.0
    %1696 = vmatpush1.msra.mxu0 0.0
    %1697 = vmatprep.subr.mxu0 0.0
    %1698 = vmatpush1.msra.mxu0 0.0
    %1699 = vmatprep.subr.mxu0 0.0
    %1700 = vmatpush1.msra.mxu0 0.0
    %1701 = vmatprep.subr.mxu0 0.0
    %1702 = vmatpush1.msra.mxu0 0.0
    %1703 = vmatprep.subr.mxu0 0.0
    %1704 = vmatpush1.msra.mxu0 0.0
    %1705 = vmatprep.subr.mxu0 0.0
    %1706 = vmatpush1.msra.mxu0 0.0
    %1707 = vmatprep.subr.mxu0 0.0
    %1708 = vmatpush1.msra.mxu0 0.0
    %1709 = vmatprep.subr.mxu0 0.0
    %1710 = vmatpush1.msra.mxu0 0.0
    %1711 = vmatprep.subr.mxu0 0.0
    %1712 = vmatpush1.msra.mxu0 0.0
    %1713 = vmatprep.mubr.f32.mxu0 0.0
    %1714 = vmatmul.mubr.f32.gmra.mrb[0].mxu0 %v1647
    %v1715 = vpop.f32.mrb[0].mxu0
    %v1716 = vadd.f32 0.0, %v1715
    %v1717 = vpop.f32.mrb[0].mxu0
    %1718 = vdwg.mxu0
    %v1719 = vsub.f32 1.0, %v1716
    %1721 = vrot.lane.b32.xlu0 %v1716, 96
    %v1722 = vpop.permute.xlu0 %1721
    %v1724 = vsub.f32 %v1719, %v1722
    %v1725 = vmul.f32 %v1716, %v1555
    %v1726 = vmul.f32 %v1716, %v1559
    %1728 = vrot.lane.b32.xlu0 %v1726, 96
    %v1729 = vpop.permute.xlu0 %1728
    %v1731 = vadd.f32 %v1725, %v1729
    %v1732 = vmul.f32 %v1724, %v1550
    %v1733 = vadd.f32 %v1731, %v1732
    %1734 = vst.msk [vmem:[#allocation2] sm:$0xff] %vm70, %v1733
    %s1735 = scalar_lea.vmem [#allocation6], 40
    %1736 = vst.msk [vmem:[%s1735] sm:$0xff] %vm70, %v1733
    %s1737 = scalar_lea.vmem %s0, 48
    %v1738 = vld [vmem:[%s1737] sm:$0xff]
    %v1739 = vld [vmem:[#allocation2] sm:$0xff]
    %v1741 = vsel %vm70, %v1739, 0
    %1743 = vmatprep.subr.mxu0 0.0
    %1744 = vmatpush1.msra.mxu0 %v46
    %1745 = vmatprep.subr.mxu0 0.0
    %1746 = vmatpush1.msra.mxu0 %v47
    %1747 = vmatprep.subr.mxu0 0.0
    %1748 = vmatpush1.msra.mxu0 %v48
    %1749 = vmatprep.subr.mxu0 0.0
    %1750 = vmatpush1.msra.mxu0 %v49
    %1751 = vmatprep.subr.mxu0 0.0
    %1752 = vmatpush1.msra.mxu0 0.0
    %1753 = vmatprep.subr.mxu0 0.0
    %1754 = vmatpush1.msra.mxu0 0.0
    %1755 = vmatprep.subr.mxu0 0.0
    %1756 = vmatpush1.msra.mxu0 0.0
    %1757 = vmatprep.subr.mxu0 0.0
    %1758 = vmatpush1.msra.mxu0 0.0
    %1759 = vmatprep.subr.mxu0 0.0
    %1760 = vmatpush1.msra.mxu0 0.0
    %1761 = vmatprep.subr.mxu0 0.0
    %1762 = vmatpush1.msra.mxu0 0.0
    %1763 = vmatprep.subr.mxu0 0.0
    %1764 = vmatpush1.msra.mxu0 0.0
    %1765 = vmatprep.subr.mxu0 0.0
    %1766 = vmatpush1.msra.mxu0 0.0
    %1767 = vmatprep.subr.mxu0 0.0
    %1768 = vmatpush1.msra.mxu0 0.0
    %1769 = vmatprep.subr.mxu0 0.0
    %1770 = vmatpush1.msra.mxu0 0.0
    %1771 = vmatprep.subr.mxu0 0.0
    %1772 = vmatpush1.msra.mxu0 0.0
    %1773 = vmatprep.subr.mxu0 0.0
    %1774 = vmatpush1.msra.mxu0 0.0
    %1775 = vmatprep.subr.mxu0 0.0
    %1776 = vmatpush1.msra.mxu0 0.0
    %1777 = vmatprep.subr.mxu0 0.0
    %1778 = vmatpush1.msra.mxu0 0.0
    %1779 = vmatprep.subr.mxu0 0.0
    %1780 = vmatpush1.msra.mxu0 0.0
    %1781 = vmatprep.subr.mxu0 0.0
    %1782 = vmatpush1.msra.mxu0 0.0
    %1783 = vmatprep.subr.mxu0 0.0
    %1784 = vmatpush1.msra.mxu0 0.0
    %1785 = vmatprep.subr.mxu0 0.0
    %1786 = vmatpush1.msra.mxu0 0.0
    %1787 = vmatprep.subr.mxu0 0.0
    %1788 = vmatpush1.msra.mxu0 0.0
    %1789 = vmatprep.subr.mxu0 0.0
    %1790 = vmatpush1.msra.mxu0 0.0
    %1791 = vmatprep.subr.mxu0 0.0
    %1792 = vmatpush1.msra.mxu0 0.0
    %1793 = vmatprep.subr.mxu0 0.0
    %1794 = vmatpush1.msra.mxu0 0.0
    %1795 = vmatprep.subr.mxu0 0.0
    %1796 = vmatpush1.msra.mxu0 0.0
    %1797 = vmatprep.subr.mxu0 0.0
    %1798 = vmatpush1.msra.mxu0 0.0
    %1799 = vmatprep.subr.mxu0 0.0
    %1800 = vmatpush1.msra.mxu0 0.0
    %1801 = vmatprep.subr.mxu0 0.0
    %1802 = vmatpush1.msra.mxu0 0.0
    %1803 = vmatprep.subr.mxu0 0.0
    %1804 = vmatpush1.msra.mxu0 0.0
    %1805 = vmatprep.subr.mxu0 0.0
    %1806 = vmatpush1.msra.mxu0 0.0
    %1807 = vmatprep.mubr.f32.mxu0 0.0
    %1808 = vmatmul.mubr.f32.gmra.mrb[0].mxu0 %v1741
    %v1809 = vpop.f32.mrb[0].mxu0
    %v1810 = vadd.f32 0.0, %v1809
    %v1811 = vpop.f32.mrb[0].mxu0
    %1812 = vdwg.mxu0
    %v1813 = vadd.f32 %v1738, %v1810
    %v1814 = vadd.f32 %v1813, %v149
    %v1815 = vxor.u32 %v1814, 2147483648
    %v1816 = vmul.f32 %v1815, 1.442695
    %v1817 = vpow.pop %v1816
    %v1818 = vadd.f32 %v1817, 1.0
    %v1819 = vrcp.pop %v1818
    %v1820 = vmul.f32 1.0, %v1819
    %v1821 = vtanh.pop %v1814
    %1823 = vrot.lane.b32.xlu0 %v1821, 96
    %v1824 = vpop.permute.xlu0 %1823
    %v1826 = vmul.f32 %v1820, %v1824
    %v1827 = vtanh.pop %v1738
    %v1828 = vtanh.pop %v1810
    %1830 = vrot.lane.b32.xlu0 %v1827, 64
    %v1831 = vpop.permute.xlu0 %1830
    %1834 = vrot.lane.b32.xlu0 %v1828, 96
    %v1835 = vpop.permute.xlu0 %1834
    %1838 = vrot.lane.b32.xlu0 %v1826, 64
    %v1839 = vpop.permute.xlu0 %1838
    %v1841 = vsel %vm70, %v1831, %v1835
    %v1842 = vsel %vm179, %v1841, %v1839
    %v1844 = vsel %vm187, %v1842, 0
    %1846 = vmatprep.subr.mxu0 0.0
    %1847 = vmatpush1.msra.mxu0 %v50
    %1848 = vmatprep.subr.mxu0 0.0
    %1849 = vmatpush1.msra.mxu0 %v51
    %1850 = vmatprep.subr.mxu0 0.0
    %1851 = vmatpush1.msra.mxu0 %v52
    %1852 = vmatprep.subr.mxu0 0.0
    %1853 = vmatpush1.msra.mxu0 %v53
    %1854 = vmatprep.subr.mxu0 0.0
    %1855 = vmatpush1.msra.mxu0 %v54
    %1856 = vmatprep.subr.mxu0 0.0
    %1857 = vmatpush1.msra.mxu0 %v55
    %1858 = vmatprep.subr.mxu0 0.0
    %1859 = vmatpush1.msra.mxu0 %v56
    %1860 = vmatprep.subr.mxu0 0.0
    %1861 = vmatpush1.msra.mxu0 %v57
    %1862 = vmatprep.subr.mxu0 0.0
    %1863 = vmatpush1.msra.mxu0 %v58
    %1864 = vmatprep.subr.mxu0 0.0
    %1865 = vmatpush1.msra.mxu0 %v59
    %1866 = vmatprep.subr.mxu0 0.0
    %1867 = vmatpush1.msra.mxu0 %v60
    %1868 = vmatprep.subr.mxu0 0.0
    %1869 = vmatpush1.msra.mxu0 %v61
    %1870 = vmatprep.subr.mxu0 0.0
    %1871 = vmatpush1.msra.mxu0 0.0
    %1872 = vmatprep.subr.mxu0 0.0
    %1873 = vmatpush1.msra.mxu0 0.0
    %1874 = vmatprep.subr.mxu0 0.0
    %1875 = vmatpush1.msra.mxu0 0.0
    %1876 = vmatprep.subr.mxu0 0.0
    %1877 = vmatpush1.msra.mxu0 0.0
    %1878 = vmatprep.subr.mxu0 0.0
    %1879 = vmatpush1.msra.mxu0 0.0
    %1880 = vmatprep.subr.mxu0 0.0
    %1881 = vmatpush1.msra.mxu0 0.0
    %1882 = vmatprep.subr.mxu0 0.0
    %1883 = vmatpush1.msra.mxu0 0.0
    %1884 = vmatprep.subr.mxu0 0.0
    %1885 = vmatpush1.msra.mxu0 0.0
    %1886 = vmatprep.subr.mxu0 0.0
    %1887 = vmatpush1.msra.mxu0 0.0
    %1888 = vmatprep.subr.mxu0 0.0
    %1889 = vmatpush1.msra.mxu0 0.0
    %1890 = vmatprep.subr.mxu0 0.0
    %1891 = vmatpush1.msra.mxu0 0.0
    %1892 = vmatprep.subr.mxu0 0.0
    %1893 = vmatpush1.msra.mxu0 0.0
    %1894 = vmatprep.subr.mxu0 0.0
    %1895 = vmatpush1.msra.mxu0 0.0
    %1896 = vmatprep.subr.mxu0 0.0
    %1897 = vmatpush1.msra.mxu0 0.0
    %1898 = vmatprep.subr.mxu0 0.0
    %1899 = vmatpush1.msra.mxu0 0.0
    %1900 = vmatprep.subr.mxu0 0.0
    %1901 = vmatpush1.msra.mxu0 0.0
    %1902 = vmatprep.subr.mxu0 0.0
    %1903 = vmatpush1.msra.mxu0 0.0
    %1904 = vmatprep.subr.mxu0 0.0
    %1905 = vmatpush1.msra.mxu0 0.0
    %1906 = vmatprep.subr.mxu0 0.0
    %1907 = vmatpush1.msra.mxu0 0.0
    %1908 = vmatprep.subr.mxu0 0.0
    %1909 = vmatpush1.msra.mxu0 0.0
    %1910 = vmatprep.mubr.f32.mxu0 0.0
    %1911 = vmatmul.mubr.f32.gmra.mrb[0].mxu0 %v1844
    %v1912 = vpop.f32.mrb[0].mxu0
    %v1913 = vadd.f32 %v185, %v1912
    %v1914 = vpop.f32.mrb[0].mxu0
    %1915 = vdwg.mxu0
    %v1916 = vxor.u32 %v1913, 2147483648
    %v1917 = vmul.f32 %v1916, 1.442695
    %v1918 = vpow.pop %v1917
    %v1919 = vadd.f32 %v1918, 1.0
    %v1920 = vrcp.pop %v1919
    %v1921 = vmul.f32 1.0, %v1920
    %v1923 = vsel %vm70, %v1921, 0
    %1925 = vmatprep.subr.mxu0 0.0
    %1926 = vmatpush1.msra.mxu0 %v62
    %1927 = vmatprep.subr.mxu0 0.0
    %1928 = vmatpush1.msra.mxu0 %v63
    %1929 = vmatprep.subr.mxu0 0.0
    %1930 = vmatpush1.msra.mxu0 %v64
    %1931 = vmatprep.subr.mxu0 0.0
    %1932 = vmatpush1.msra.mxu0 %v65
    %1933 = vmatprep.subr.mxu0 0.0
    %1934 = vmatpush1.msra.mxu0 0.0
    %1935 = vmatprep.subr.mxu0 0.0
    %1936 = vmatpush1.msra.mxu0 0.0
    %1937 = vmatprep.subr.mxu0 0.0
    %1938 = vmatpush1.msra.mxu0 0.0
    %1939 = vmatprep.subr.mxu0 0.0
    %1940 = vmatpush1.msra.mxu0 0.0
    %1941 = vmatprep.subr.mxu0 0.0
    %1942 = vmatpush1.msra.mxu0 0.0
    %1943 = vmatprep.subr.mxu0 0.0
    %1944 = vmatpush1.msra.mxu0 0.0
    %1945 = vmatprep.subr.mxu0 0.0
    %1946 = vmatpush1.msra.mxu0 0.0
    %1947 = vmatprep.subr.mxu0 0.0
    %1948 = vmatpush1.msra.mxu0 0.0
    %1949 = vmatprep.subr.mxu0 0.0
    %1950 = vmatpush1.msra.mxu0 0.0
    %1951 = vmatprep.subr.mxu0 0.0
    %1952 = vmatpush1.msra.mxu0 0.0
    %1953 = vmatprep.subr.mxu0 0.0
    %1954 = vmatpush1.msra.mxu0 0.0
    %1955 = vmatprep.subr.mxu0 0.0
    %1956 = vmatpush1.msra.mxu0 0.0
    %1957 = vmatprep.subr.mxu0 0.0
    %1958 = vmatpush1.msra.mxu0 0.0
    %1959 = vmatprep.subr.mxu0 0.0
    %1960 = vmatpush1.msra.mxu0 0.0
    %1961 = vmatprep.subr.mxu0 0.0
    %1962 = vmatpush1.msra.mxu0 0.0
    %1963 = vmatprep.subr.mxu0 0.0
    %1964 = vmatpush1.msra.mxu0 0.0
    %1965 = vmatprep.subr.mxu0 0.0
    %1966 = vmatpush1.msra.mxu0 0.0
    %1967 = vmatprep.subr.mxu0 0.0
    %1968 = vmatpush1.msra.mxu0 0.0
    %1969 = vmatprep.subr.mxu0 0.0
    %1970 = vmatpush1.msra.mxu0 0.0
    %1971 = vmatprep.subr.mxu0 0.0
    %1972 = vmatpush1.msra.mxu0 0.0
    %1973 = vmatprep.subr.mxu0 0.0
    %1974 = vmatpush1.msra.mxu0 0.0
    %1975 = vmatprep.subr.mxu0 0.0
    %1976 = vmatpush1.msra.mxu0 0.0
    %1977 = vmatprep.subr.mxu0 0.0
    %1978 = vmatpush1.msra.mxu0 0.0
    %1979 = vmatprep.subr.mxu0 0.0
    %1980 = vmatpush1.msra.mxu0 0.0
    %1981 = vmatprep.subr.mxu0 0.0
    %1982 = vmatpush1.msra.mxu0 0.0
    %1983 = vmatprep.subr.mxu0 0.0
    %1984 = vmatpush1.msra.mxu0 0.0
    %1985 = vmatprep.subr.mxu0 0.0
    %1986 = vmatpush1.msra.mxu0 0.0
    %1987 = vmatprep.subr.mxu0 0.0
    %1988 = vmatpush1.msra.mxu0 0.0
    %1989 = vmatprep.mubr.f32.mxu0 0.0
    %1990 = vmatmul.mubr.f32.gmra.mrb[0].mxu0 %v1923
    %v1991 = vpop.f32.mrb[0].mxu0
    %v1992 = vadd.f32 0.0, %v1991
    %v1993 = vpop.f32.mrb[0].mxu0
    %1994 = vdwg.mxu0
    %v1995 = vsub.f32 1.0, %v1992
    %1997 = vrot.lane.b32.xlu0 %v1992, 96
    %v1998 = vpop.permute.xlu0 %1997
    %v2000 = vsub.f32 %v1995, %v1998
    %v2001 = vmul.f32 %v1992, %v1831
    %v2002 = vmul.f32 %v1992, %v1835
    %2004 = vrot.lane.b32.xlu0 %v2002, 96
    %v2005 = vpop.permute.xlu0 %2004
    %v2007 = vadd.f32 %v2001, %v2005
    %v2008 = vmul.f32 %v2000, %v1826
    %v2009 = vadd.f32 %v2007, %v2008
    %2010 = vst.msk [vmem:[#allocation2] sm:$0xff] %vm70, %v2009
    %s2011 = scalar_lea.vmem [#allocation6], 48
    %2012 = vst.msk [vmem:[%s2011] sm:$0xff] %vm70, %v2009
    %s2013 = scalar_lea.vmem %s0, 56
    %v2014 = vld [vmem:[%s2013] sm:$0xff]
    %v2015 = vld [vmem:[#allocation2] sm:$0xff]
    %v2017 = vsel %vm70, %v2015, 0
    %2019 = vmatprep.subr.mxu0 0.0
    %2020 = vmatpush1.msra.mxu0 %v46
    %2021 = vmatprep.subr.mxu0 0.0
    %2022 = vmatpush1.msra.mxu0 %v47
    %2023 = vmatprep.subr.mxu0 0.0
    %2024 = vmatpush1.msra.mxu0 %v48
    %2025 = vmatprep.subr.mxu0 0.0
    %2026 = vmatpush1.msra.mxu0 %v49
    %2027 = vmatprep.subr.mxu0 0.0
    %2028 = vmatpush1.msra.mxu0 0.0
    %2029 = vmatprep.subr.mxu0 0.0
    %2030 = vmatpush1.msra.mxu0 0.0
    %2031 = vmatprep.subr.mxu0 0.0
    %2032 = vmatpush1.msra.mxu0 0.0
    %2033 = vmatprep.subr.mxu0 0.0
    %2034 = vmatpush1.msra.mxu0 0.0
    %2035 = vmatprep.subr.mxu0 0.0
    %2036 = vmatpush1.msra.mxu0 0.0
    %2037 = vmatprep.subr.mxu0 0.0
    %2038 = vmatpush1.msra.mxu0 0.0
    %2039 = vmatprep.subr.mxu0 0.0
    %2040 = vmatpush1.msra.mxu0 0.0
    %2041 = vmatprep.subr.mxu0 0.0
    %2042 = vmatpush1.msra.mxu0 0.0
    %2043 = vmatprep.subr.mxu0 0.0
    %2044 = vmatpush1.msra.mxu0 0.0
    %2045 = vmatprep.subr.mxu0 0.0
    %2046 = vmatpush1.msra.mxu0 0.0
    %2047 = vmatprep.subr.mxu0 0.0
    %2048 = vmatpush1.msra.mxu0 0.0
    %2049 = vmatprep.subr.mxu0 0.0
    %2050 = vmatpush1.msra.mxu0 0.0
    %2051 = vmatprep.subr.mxu0 0.0
    %2052 = vmatpush1.msra.mxu0 0.0
    %2053 = vmatprep.subr.mxu0 0.0
    %2054 = vmatpush1.msra.mxu0 0.0
    %2055 = vmatprep.subr.mxu0 0.0
    %2056 = vmatpush1.msra.mxu0 0.0
    %2057 = vmatprep.subr.mxu0 0.0
    %2058 = vmatpush1.msra.mxu0 0.0
    %2059 = vmatprep.subr.mxu0 0.0
    %2060 = vmatpush1.msra.mxu0 0.0
    %2061 = vmatprep.subr.mxu0 0.0
    %2062 = vmatpush1.msra.mxu0 0.0
    %2063 = vmatprep.subr.mxu0 0.0
    %2064 = vmatpush1.msra.mxu0 0.0
    %2065 = vmatprep.subr.mxu0 0.0
    %2066 = vmatpush1.msra.mxu0 0.0
    %2067 = vmatprep.subr.mxu0 0.0
    %2068 = vmatpush1.msra.mxu0 0.0
    %2069 = vmatprep.subr.mxu0 0.0
    %2070 = vmatpush1.msra.mxu0 0.0
    %2071 = vmatprep.subr.mxu0 0.0
    %2072 = vmatpush1.msra.mxu0 0.0
    %2073 = vmatprep.subr.mxu0 0.0
    %2074 = vmatpush1.msra.mxu0 0.0
    %2075 = vmatprep.subr.mxu0 0.0
    %2076 = vmatpush1.msra.mxu0 0.0
    %2077 = vmatprep.subr.mxu0 0.0
    %2078 = vmatpush1.msra.mxu0 0.0
    %2079 = vmatprep.subr.mxu0 0.0
    %2080 = vmatpush1.msra.mxu0 0.0
    %2081 = vmatprep.subr.mxu0 0.0
    %2082 = vmatpush1.msra.mxu0 0.0
    %2083 = vmatprep.mubr.f32.mxu0 0.0
    %2084 = vmatmul.mubr.f32.gmra.mrb[0].mxu0 %v2017
    %v2085 = vpop.f32.mrb[0].mxu0
    %v2086 = vadd.f32 0.0, %v2085
    %v2087 = vpop.f32.mrb[0].mxu0
    %2088 = vdwg.mxu0
    %v2089 = vadd.f32 %v2014, %v2086
    %v2090 = vadd.f32 %v2089, %v149
    %v2091 = vxor.u32 %v2090, 2147483648
    %v2092 = vmul.f32 %v2091, 1.442695
    %v2093 = vpow.pop %v2092
    %v2094 = vadd.f32 %v2093, 1.0
    %v2095 = vrcp.pop %v2094
    %v2096 = vmul.f32 1.0, %v2095
    %v2097 = vtanh.pop %v2090
    %2099 = vrot.lane.b32.xlu0 %v2097, 96
    %v2100 = vpop.permute.xlu0 %2099
    %v2102 = vmul.f32 %v2096, %v2100
    %v2103 = vtanh.pop %v2014
    %v2104 = vtanh.pop %v2086
    %2106 = vrot.lane.b32.xlu0 %v2103, 64
    %v2107 = vpop.permute.xlu0 %2106
    %2110 = vrot.lane.b32.xlu0 %v2104, 96
    %v2111 = vpop.permute.xlu0 %2110
    %2114 = vrot.lane.b32.xlu0 %v2102, 64
    %v2115 = vpop.permute.xlu0 %2114
    %v2117 = vsel %vm70, %v2107, %v2111
    %v2118 = vsel %vm179, %v2117, %v2115
    %v2120 = vsel %vm187, %v2118, 0
    %2122 = vmatprep.subr.mxu0 0.0
    %2123 = vmatpush1.msra.mxu0 %v50
    %2124 = vmatprep.subr.mxu0 0.0
    %2125 = vmatpush1.msra.mxu0 %v51
    %2126 = vmatprep.subr.mxu0 0.0
    %2127 = vmatpush1.msra.mxu0 %v52
    %2128 = vmatprep.subr.mxu0 0.0
    %2129 = vmatpush1.msra.mxu0 %v53
    %2130 = vmatprep.subr.mxu0 0.0
    %2131 = vmatpush1.msra.mxu0 %v54
    %2132 = vmatprep.subr.mxu0 0.0
    %2133 = vmatpush1.msra.mxu0 %v55
    %2134 = vmatprep.subr.mxu0 0.0
    %2135 = vmatpush1.msra.mxu0 %v56
    %2136 = vmatprep.subr.mxu0 0.0
    %2137 = vmatpush1.msra.mxu0 %v57
    %2138 = vmatprep.subr.mxu0 0.0
    %2139 = vmatpush1.msra.mxu0 %v58
    %2140 = vmatprep.subr.mxu0 0.0
    %2141 = vmatpush1.msra.mxu0 %v59
    %2142 = vmatprep.subr.mxu0 0.0
    %2143 = vmatpush1.msra.mxu0 %v60
    %2144 = vmatprep.subr.mxu0 0.0
    %2145 = vmatpush1.msra.mxu0 %v61
    %2146 = vmatprep.subr.mxu0 0.0
    %2147 = vmatpush1.msra.mxu0 0.0
    %2148 = vmatprep.subr.mxu0 0.0
    %2149 = vmatpush1.msra.mxu0 0.0
    %2150 = vmatprep.subr.mxu0 0.0
    %2151 = vmatpush1.msra.mxu0 0.0
    %2152 = vmatprep.subr.mxu0 0.0
    %2153 = vmatpush1.msra.mxu0 0.0
    %2154 = vmatprep.subr.mxu0 0.0
    %2155 = vmatpush1.msra.mxu0 0.0
    %2156 = vmatprep.subr.mxu0 0.0
    %2157 = vmatpush1.msra.mxu0 0.0
    %2158 = vmatprep.subr.mxu0 0.0
    %2159 = vmatpush1.msra.mxu0 0.0
    %2160 = vmatprep.subr.mxu0 0.0
    %2161 = vmatpush1.msra.mxu0 0.0
    %2162 = vmatprep.subr.mxu0 0.0
    %2163 = vmatpush1.msra.mxu0 0.0
    %2164 = vmatprep.subr.mxu0 0.0
    %2165 = vmatpush1.msra.mxu0 0.0
    %2166 = vmatprep.subr.mxu0 0.0
    %2167 = vmatpush1.msra.mxu0 0.0
    %2168 = vmatprep.subr.mxu0 0.0
    %2169 = vmatpush1.msra.mxu0 0.0
    %2170 = vmatprep.subr.mxu0 0.0
    %2171 = vmatpush1.msra.mxu0 0.0
    %2172 = vmatprep.subr.mxu0 0.0
    %2173 = vmatpush1.msra.mxu0 0.0
    %2174 = vmatprep.subr.mxu0 0.0
    %2175 = vmatpush1.msra.mxu0 0.0
    %2176 = vmatprep.subr.mxu0 0.0
    %2177 = vmatpush1.msra.mxu0 0.0
    %2178 = vmatprep.subr.mxu0 0.0
    %2179 = vmatpush1.msra.mxu0 0.0
    %2180 = vmatprep.subr.mxu0 0.0
    %2181 = vmatpush1.msra.mxu0 0.0
    %2182 = vmatprep.subr.mxu0 0.0
    %2183 = vmatpush1.msra.mxu0 0.0
    %2184 = vmatprep.subr.mxu0 0.0
    %2185 = vmatpush1.msra.mxu0 0.0
    %2186 = vmatprep.mubr.f32.mxu0 0.0
    %2187 = vmatmul.mubr.f32.gmra.mrb[0].mxu0 %v2120
    %v2188 = vpop.f32.mrb[0].mxu0
    %v2189 = vadd.f32 %v185, %v2188
    %v2190 = vpop.f32.mrb[0].mxu0
    %2191 = vdwg.mxu0
    %v2192 = vxor.u32 %v2189, 2147483648
    %v2193 = vmul.f32 %v2192, 1.442695
    %v2194 = vpow.pop %v2193
    %v2195 = vadd.f32 %v2194, 1.0
    %v2196 = vrcp.pop %v2195
    %v2197 = vmul.f32 1.0, %v2196
    %v2199 = vsel %vm70, %v2197, 0
    %2201 = vmatprep.subr.mxu0 0.0
    %2202 = vmatpush1.msra.mxu0 %v62
    %2203 = vmatprep.subr.mxu0 0.0
    %2204 = vmatpush1.msra.mxu0 %v63
    %2205 = vmatprep.subr.mxu0 0.0
    %2206 = vmatpush1.msra.mxu0 %v64
    %2207 = vmatprep.subr.mxu0 0.0
    %2208 = vmatpush1.msra.mxu0 %v65
    %2209 = vmatprep.subr.mxu0 0.0
    %2210 = vmatpush1.msra.mxu0 0.0
    %2211 = vmatprep.subr.mxu0 0.0
    %2212 = vmatpush1.msra.mxu0 0.0
    %2213 = vmatprep.subr.mxu0 0.0
    %2214 = vmatpush1.msra.mxu0 0.0
    %2215 = vmatprep.subr.mxu0 0.0
    %2216 = vmatpush1.msra.mxu0 0.0
    %2217 = vmatprep.subr.mxu0 0.0
    %2218 = vmatpush1.msra.mxu0 0.0
    %2219 = vmatprep.subr.mxu0 0.0
    %2220 = vmatpush1.msra.mxu0 0.0
    %2221 = vmatprep.subr.mxu0 0.0
    %2222 = vmatpush1.msra.mxu0 0.0
    %2223 = vmatprep.subr.mxu0 0.0
    %2224 = vmatpush1.msra.mxu0 0.0
    %2225 = vmatprep.subr.mxu0 0.0
    %2226 = vmatpush1.msra.mxu0 0.0
    %2227 = vmatprep.subr.mxu0 0.0
    %2228 = vmatpush1.msra.mxu0 0.0
    %2229 = vmatprep.subr.mxu0 0.0
    %2230 = vmatpush1.msra.mxu0 0.0
    %2231 = vmatprep.subr.mxu0 0.0
    %2232 = vmatpush1.msra.mxu0 0.0
    %2233 = vmatprep.subr.mxu0 0.0
    %2234 = vmatpush1.msra.mxu0 0.0
    %2235 = vmatprep.subr.mxu0 0.0
    %2236 = vmatpush1.msra.mxu0 0.0
    %2237 = vmatprep.subr.mxu0 0.0
    %2238 = vmatpush1.msra.mxu0 0.0
    %2239 = vmatprep.subr.mxu0 0.0
    %2240 = vmatpush1.msra.mxu0 0.0
    %2241 = vmatprep.subr.mxu0 0.0
    %2242 = vmatpush1.msra.mxu0 0.0
    %2243 = vmatprep.subr.mxu0 0.0
    %2244 = vmatpush1.msra.mxu0 0.0
    %2245 = vmatprep.subr.mxu0 0.0
    %2246 = vmatpush1.msra.mxu0 0.0
    %2247 = vmatprep.subr.mxu0 0.0
    %2248 = vmatpush1.msra.mxu0 0.0
    %2249 = vmatprep.subr.mxu0 0.0
    %2250 = vmatpush1.msra.mxu0 0.0
    %2251 = vmatprep.subr.mxu0 0.0
    %2252 = vmatpush1.msra.mxu0 0.0
    %2253 = vmatprep.subr.mxu0 0.0
    %2254 = vmatpush1.msra.mxu0 0.0
    %2255 = vmatprep.subr.mxu0 0.0
    %2256 = vmatpush1.msra.mxu0 0.0
    %2257 = vmatprep.subr.mxu0 0.0
    %2258 = vmatpush1.msra.mxu0 0.0
    %2259 = vmatprep.subr.mxu0 0.0
    %2260 = vmatpush1.msra.mxu0 0.0
    %2261 = vmatprep.subr.mxu0 0.0
    %2262 = vmatpush1.msra.mxu0 0.0
    %2263 = vmatprep.subr.mxu0 0.0
    %2264 = vmatpush1.msra.mxu0 0.0
    %2265 = vmatprep.mubr.f32.mxu0 0.0
    %2266 = vmatmul.mubr.f32.gmra.mrb[0].mxu0 %v2199
    %v2267 = vpop.f32.mrb[0].mxu0
    %v2268 = vadd.f32 0.0, %v2267
    %v2269 = vpop.f32.mrb[0].mxu0
    %2270 = vdwg.mxu0
    %v2271 = vsub.f32 1.0, %v2268
    %2273 = vrot.lane.b32.xlu0 %v2268, 96
    %v2274 = vpop.permute.xlu0 %2273
    %v2276 = vsub.f32 %v2271, %v2274
    %v2277 = vmul.f32 %v2268, %v2107
    %v2278 = vmul.f32 %v2268, %v2111
    %2280 = vrot.lane.b32.xlu0 %v2278, 96
    %v2281 = vpop.permute.xlu0 %2280
    %v2283 = vadd.f32 %v2277, %v2281
    %v2284 = vmul.f32 %v2276, %v2102
    %v2285 = vadd.f32 %v2283, %v2284
    %2286 = vst.msk [vmem:[#allocation2] sm:$0xff] %vm70, %v2285
    %s2287 = scalar_lea.vmem [#allocation6], 56
    %2288 = vst.msk [vmem:[%s2287] sm:$0xff] %vm70, %v2285
    // Predicated region
    $region38: #{tpu_custom_call.1} parent=1 // pred_check
      _
    $region39: #{tpu_custom_call.1} parent=1 // pred_check_branch
      %2290 = sbr.rel (0) target = $region41
    $region40: #{tpu_custom_call.1} parent=1 // pred_region
      %s2292 = ssub.s32 1024, 1024
      %2293 = vsyncadd [#allocation5], %s2292
      %s2294 = sshll.u32 [#allocation6], 4
      %s2295 = int_to_ptr.vmem [resolvable:$true] %s2294
      %2300 = dma.vmem_to_hbm [thread:$0]  %s2295, 1024, %s7, [#allocation5], 128, 128, 8
    $region41: #{tpu_custom_call.1} parent=1 // pred_fallthru
      _
    // Predicated region
    $region42: #{tpu_custom_call.1} parent=1 // pred_check
      _
    $region43: #{tpu_custom_call.1} parent=1 // pred_check_branch
      %2302 = sbr.rel (0) target = $region45
    $region44: #{tpu_custom_call.1} parent=1 // pred_region
      %2303 = dma.done [#allocation5], 1024
    $region45: #{tpu_custom_call.1} parent=1 // pred_fallthru
      _
    %2304 = vsyncpa [#allocation4], 1
    %2305 = vsyncpa [#allocation5], 1

</llo_original>
